<compile_context>
chip_gen: v7x
topology: tpu7x:2x2x1
jax: 0.10.0
libtpu: 0.0.40
codegen_flags: <defaults>
</compile_context>

<pallas_src>
import math

import jax
import jax.numpy as jnp
import numpy as np
from jax import lax
from jax.experimental import pallas as pl
from jax.experimental.pallas import tpu as pltpu
from jax.scipy.special import gammaln, xlogy

# ----------------------------- configuration -------------------------------
B = 2                 # batch
C = 24                # in_channels (embedding dim); C // H must be divisible by 6
L = 8                 # sequence length
H = 2                 # n_heads
DK = 16               # key_len
DV = C // H           # value dim per head (12)
F = C // H            # num_rel_pos_features (12)
N_BLOCKS = 2
LN_EPS = 1e-5
SCALE = DK ** -0.5

PARAM_KEYS = ("ln1_g", "ln1_b", "wqkv", "wo", "bo",
              "rcb", "rpb", "rel_kT", "ln2_g", "ln2_b",
              "w1", "b1", "w2", "b2")


# ------------------- positional features (constant, JAX glue) --------------
def positional_features(seq_len: int, feature_size: int) -> jnp.ndarray:
    """Enformer relative positional embeddings, shape (2*seq_len-1, feature_size)."""
    n_basis = feature_size // 6
    distances = jnp.arange(-seq_len + 1, seq_len, dtype=jnp.float32)       # (2L-1,)
    pos_abs = jnp.abs(distances)[:, None]

    # exponential
    max_range = math.log(seq_len) / math.log(2.0)
    half_life = 2.0 ** jnp.linspace(3.0, max_range, n_basis)[None, :]
    feat_exp = jnp.exp(-math.log(2.0) / half_life * pos_abs)

    # central mask
    center_widths = (2.0 ** jnp.arange(1, n_basis + 1, dtype=jnp.float32) - 1.0)[None, :]
    feat_cm = (center_widths > pos_abs).astype(jnp.float32)

    # gamma pdf
    stddev = seq_len / (2.0 * n_basis)
    start_mean = seq_len / n_basis
    mean = jnp.linspace(start_mean, float(seq_len), n_basis)[None, :]
    conc = (mean / stddev) ** 2
    rate = mean / (stddev ** 2)
    log_unnorm = xlogy(conc - 1.0, pos_abs) - rate * pos_abs
    log_norm = gammaln(conc) - conc * jnp.log(rate)
    prob = jnp.exp(log_unnorm - log_norm) + 1e-8
    feat_g = prob / jnp.max(prob, axis=-1, keepdims=True)

    emb = jnp.concatenate([feat_exp, feat_cm, feat_g], axis=-1)            # (2L-1, F/2)
    emb = jnp.concatenate([emb, jnp.sign(distances)[:, None] * emb], axis=-1)
    return emb                                                             # (2L-1, F)


def precompute_rel_kT(w_rel_k: jnp.ndarray, seq_len: int) -> jnp.ndarray:
    """rel_k per head, pre-transposed for an MXU matmul: (H, DK, 2L-1)."""
    pos = positional_features(seq_len, F)                                  # (2L-1, F)
    rel_k = jnp.dot(pos, w_rel_k, precision=jax.lax.Precision.HIGHEST)     # (2L-1, H*DK)
    rel_k = rel_k.reshape(2 * seq_len - 1, H, DK)
    return jnp.transpose(rel_k, (1, 2, 0))                                 # (H, DK, 2L-1)


def _stack_block_params(block_params):
    """Stack per-block params along a leading N_BLOCKS axis; weights in bf16."""
    bf = jnp.bfloat16

    def st(key, dtype=jnp.float32):
        return jnp.stack([p[key] for p in block_params]).astype(dtype)

    # Fused QKV projection weight: (NB, C, H*DK + H*DK + H*DV).
    wqkv = jnp.stack([jnp.concatenate([p["wq"], p["wk"], p["wv"]], axis=-1)
                      for p in block_params]).astype(bf)

    return dict(
        ln1_g=st("ln1_g"), ln1_b=st("ln1_b"),
        wqkv=wqkv,
        wo=st("wo", bf), bo=st("bo"),
        rcb=st("rcb"), rpb=st("rpb"),
        rel_kT=jnp.stack([precompute_rel_kT(p["w_rel_k"], L)
                          for p in block_params]).astype(bf),              # (NB,H,DK,2L-1)
        ln2_g=st("ln2_g"), ln2_b=st("ln2_b"),
        w1=st("w1", bf), b1=st("b1"),
        w2=st("w2", bf), b2=st("b2"),
    )


# ------------------------------ Pallas kernel -------------------------------
def _layernorm(x, g, b):
    mu = jnp.mean(x, axis=-1, keepdims=True)
    var = jnp.mean((x - mu) ** 2, axis=-1, keepdims=True)
    return (x - mu) * lax.rsqrt(var + LN_EPS) * g + b


def tower_kernel(x_ref, ln1g_ref, ln1b_ref, wqkv_ref, wo_ref, bo_ref,
                 rcb_ref, rpb_ref, rkt_ref, ln2g_ref, ln2b_ref,
                 w1_ref, b1_ref, w2_ref, b2_ref, o_ref):
    """Whole Enformer transformer tower on a flattened (B*L, C) activation."""
    bf16 = jnp.bfloat16
    NQ = H * DK                                               # lane offset of K inside fused QKV
    x = x_ref[...]                                            # (B*L, C) f32

    for blk in range(N_BLOCKS):                               # static unroll over blocks
        # ---- this block's parameters (tiny; live in vregs) ----
        ln1g, ln1b = ln1g_ref[blk], ln1b_ref[blk]             # (1, C)
        wqkv = wqkv_ref[blk]                                  # (C, 2*H*DK + H*DV) bf16
        wo, bo = wo_ref[blk], bo_ref[blk]
        rcb, rpb = rcb_ref[blk], rpb_ref[blk]                 # (H, DK) f32
        rkt = rkt_ref[blk]                                    # (H, DK, 2L-1) bf16
        ln2g, ln2b = ln2g_ref[blk], ln2b_ref[blk]
        w1, b1 = w1_ref[blk], b1_ref[blk]
        w2, b2 = w2_ref[blk], b2_ref[blk]

        # ---- attention branch: LayerNorm + fused QKV (one MXU matmul) ----
        xn = _layernorm(x, ln1g, ln1b)                        # (B*L, C) f32
        qkv = jnp.dot(xn.astype(bf16), wqkv,
                      preferred_element_type=jnp.float32)     # (B*L, 2*H*DK + H*DV)
        q = qkv[:, :NQ] * SCALE                               # (B*L, H*DK)
        k = qkv[:, NQ:2 * NQ]                                 # (B*L, H*DK)
        v = qkv[:, 2 * NQ:]                                   # (B*L, H*DV)

        head_out = [[None] * H for _ in range(B)]             # [batch][head] -> (L, DV)
        for h in range(H):                                    # static (H small)
            q_h = q[:, h * DK:(h + 1) * DK]                   # (B*L, DK) f32
            k_hb = k[:, h * DK:(h + 1) * DK].astype(bf16)     # (B*L, DK)
            v_hb = v[:, h * DV:(h + 1) * DV].astype(bf16)     # (B*L, DV)
            qc_hb = (q_h + rcb[h:h + 1, :]).astype(bf16)      # content query (all rows)
            qp_hb = (q_h + rpb[h:h + 1, :]).astype(bf16)      # positional query (all rows)

            # relative-position logits for the WHOLE batch of this head: one MXU matmul
            raw = jnp.dot(qp_hb, rkt[h],
                          preferred_element_type=jnp.float32)  # (B*L, 2L-1)

            for b in range(B):                                 # static (B small)
                r0 = b * L
                # content logits: (q*scale + content_bias) @ k^T   (MXU)
                content = lax.dot_general(
                    qc_hb[r0:r0 + L], k_hb[r0:r0 + L],
                    dimension_numbers=(((1,), (1,)), ((), ())),
                    preferred_element_type=jnp.float32)        # (L, L)

                # relative shift in-kernel: rel[i, j] = raw[r0+i, j - i + L - 1]
                rel = jnp.concatenate(
                    [raw[r0 + i:r0 + i + 1, L - 1 - i:2 * L - 1 - i] for i in range(L)],
                    axis=0)                                    # (L, L)

                logits = content + rel
                logits = logits - jnp.max(logits, axis=-1, keepdims=True)
                e = jnp.exp(logits)
                attn = e * pl.reciprocal(jnp.sum(e, axis=-1, keepdims=True),
                                         approx=True)          # softmax (f32)

                head_out[b][h] = jnp.dot(attn.astype(bf16), v_hb[r0:r0 + L],
                                         preferred_element_type=jnp.float32)  # (L, DV)

        attn_cat = jnp.concatenate(
            [jnp.concatenate(head_out[b], axis=1) for b in range(B)],
            axis=0)                                            # (B*L, H*DV)

        # single output projection (one MXU matmul instead of H tiny dots)
        attn_out = jnp.dot(attn_cat.astype(bf16), wo,
                           preferred_element_type=jnp.float32) + bo
        x1 = x + attn_out                                      # residual 1 (f32)

        # ---- feed-forward branch ----
        xn2 = _layernorm(x1, ln2g, ln2b)
        h1 = jnp.dot(xn2.astype(bf16), w1,
                     preferred_element_type=jnp.float32) + b1
        h1 = jnp.maximum(h1, 0.0)                              # relu (f32)
        y = jnp.dot(h1.astype(bf16), w2,
                    preferred_element_type=jnp.float32) + b2
        x = x1 + y                                             # residual 2

    o_ref[...] = x.astype(o_ref.dtype)


@jax.jit
def enformer_transformer_tower(x_ncl: jnp.ndarray, block_params: list) -> jnp.ndarray:
    stacked = _stack_block_params(block_params)
    # (N, C, L) -> (N, L, C) -> flat (N*L, C); whole tower fused in one pallas_call.
    x_flat = jnp.transpose(x_ncl, (0, 2, 1)).reshape(B * L, C)
    out_flat = pl.pallas_call(
        tower_kernel,
        out_shape=jax.ShapeDtypeStruct((B * L, C), jnp.float32),
        compiler_params=pltpu.CompilerParams(vmem_limit_bytes=32 * 1024 * 1024),
    )(x_flat, *(stacked[k] for k in PARAM_KEYS))
    return jnp.transpose(out_flat.reshape(B, L, C), (0, 2, 1))   # back to (N, C, L)


# ------------------------- deterministic parameters -------------------------
def init_block_params(key):
    ks = jax.random.split(key, 12)

    def rn(k, shape, scale=0.1):
        return (scale * jax.random.normal(k, shape)).astype(jnp.float32)

    # NOTE: enformer-pytorch zero-inits to_out; random init here to keep the kernel nontrivial.
    return dict(
        ln1_g=jnp.ones((1, C), jnp.float32), ln1_b=jnp.zeros((1, C), jnp.float32),
        wq=rn(ks[0], (C, H * DK)), wk=rn(ks[1], (C, H * DK)), wv=rn(ks[2], (C, H * DV)),
        wo=rn(ks[3], (H * DV, C)), bo=rn(ks[4], (1, C)),
        w_rel_k=rn(ks[5], (F, H * DK)),
        rcb=rn(ks[6], (H, DK), 1.0), rpb=rn(ks[7], (H, DK), 1.0),
        ln2_g=jnp.ones((1, C), jnp.float32), ln2_b=jnp.zeros((1, C), jnp.float32),
        w1=rn(ks[8], (C, 2 * C)), b1=rn(ks[9], (1, 2 * C)),
        w2=rn(ks[10], (2 * C, C)), b2=rn(ks[11], (1, C)),
    )


# --------------------------- pure-JAX reference -----------------------------
def _relative_shift_ref(x):          # x: (B, H, L, 2L-1) — exact PyTorch pad/reshape trick
    b, h, t1, t2 = x.shape
    x = jnp.concatenate([jnp.zeros_like(x[..., :1]), x], axis=-1)
    t2 = t2 + 1
    x = x.reshape(b, h, t2, t1)
    x = x[:, :, 1:, :]
    x = x.reshape(b, h, t1, t2 - 1)
    return x[..., : (t2 + 1) // 2]


def _block_ref(x, p):                # x: (B, L, C)
    def ln(z, g, b):
        mu = z.mean(-1, keepdims=True)
        var = ((z - mu) ** 2).mean(-1, keepdims=True)
        return (z - mu) / jnp.sqrt(var + LN_EPS) * g + b

    xn = ln(x, p["ln1_g"][0], p["ln1_b"][0])
    q, k, v = xn @ p["wq"], xn @ p["wk"], xn @ p["wv"]
    split = lambda t, d: t.reshape(B, L, H, d).transpose(0, 2, 1, 3)
    q = split(q, DK) * SCALE
    k = split(k, DK)
    v = split(v, DV)

    pos = positional_features(L, F)
    rel_k = (pos @ p["w_rel_k"]).reshape(2 * L - 1, H, DK).transpose(1, 0, 2)

    content = jnp.einsum("bhid,bhjd->bhij", q + p["rcb"][None, :, None, :], k)
    rel_logits = jnp.einsum("bhid,hjd->bhij", q + p["rpb"][None, :, None, :], rel_k)
    rel_logits = _relative_shift_ref(rel_logits)
    attn = jax.nn.softmax(content + rel_logits, axis=-1)
    out = jnp.einsum("bhij,bhjd->bhid", attn, v)
    out = out.transpose(0, 2, 1, 3).reshape(B, L, H * DV)
    x1 = x + out @ p["wo"] + p["bo"][0]

    xn2 = ln(x1, p["ln2_g"][0], p["ln2_b"][0])
    h1 = jnp.maximum(xn2 @ p["w1"] + p["b1"][0], 0.0)
    return x1 + h1 @ p["w2"] + p["b2"][0]


def tower_ref(x_ncl, block_params):
    x = jnp.transpose(x_ncl, (0, 2, 1))
    for p in block_params:
        x = _block_ref(x, p)
    return jnp.transpose(x, (0, 2, 1))


# ---------------------------------- main -------------------------------------
if __name__ == "__main__":
    key = jax.random.PRNGKey(0)
    kx, *kblocks = jax.random.split(key, 1 + N_BLOCKS)

    x = jax.random.normal(kx, (B, C, L), dtype=jnp.float32)          # (N, C, L) as in PyTorch
    params = [init_block_params(k) for k in kblocks]

    out = jax.block_until_ready(enformer_transformer_tower(x, params))

    # f32 ground-truth reference; 'highest' matmul precision scoped to the reference only.
    with jax.default_matmul_precision("highest"):
        ref = jax.block_until_ready(tower_ref(x, params))

    assert out.shape == (B, C, L) and out.dtype == jnp.float32
    # bf16 matmul operands (f32 accumulate) in the kernel vs full-f32 reference.
    np.testing.assert_allclose(np.asarray(out), np.asarray(ref), rtol=2e-2, atol=2e-2)

    print("KERNEL_OK")
</pallas_src>

<mosaic_0001>
module attributes {stable_mosaic.version = 11 : i64} {
  func.func @tower_kernel(%arg0: memref<16x24xf32, #tpu.memory_space<vmem>>, %arg1: memref<2x1x24xf32, #tpu.memory_space<vmem>>, %arg2: memref<2x1x24xf32, #tpu.memory_space<vmem>>, %arg3: memref<2x24x88xbf16, #tpu.memory_space<vmem>>, %arg4: memref<2x24x24xbf16, #tpu.memory_space<vmem>>, %arg5: memref<2x1x24xf32, #tpu.memory_space<vmem>>, %arg6: memref<2x2x16xf32, #tpu.memory_space<vmem>>, %arg7: memref<2x2x16xf32, #tpu.memory_space<vmem>>, %arg8: memref<2x2x16x15xbf16, #tpu.memory_space<vmem>>, %arg9: memref<2x1x24xf32, #tpu.memory_space<vmem>>, %arg10: memref<2x1x24xf32, #tpu.memory_space<vmem>>, %arg11: memref<2x24x48xbf16, #tpu.memory_space<vmem>>, %arg12: memref<2x1x48xf32, #tpu.memory_space<vmem>>, %arg13: memref<2x48x24xbf16, #tpu.memory_space<vmem>>, %arg14: memref<2x1x24xf32, #tpu.memory_space<vmem>>, %arg15: memref<16x24xf32, #tpu.memory_space<vmem>>) attributes {dimension_semantics = [], scalar_prefetch = 0 : i64, scratch_operands = 0 : i64, tpu.core_type = #tpu.core_type<tc>} {
    %c0 = arith.constant 0 : index
    %c0_0 = arith.constant 0 : index
    %0 = vector.load %arg0[%c0, %c0_0] : memref<16x24xf32, #tpu.memory_space<vmem>>, vector<16x24xf32>
    %c0_1 = arith.constant 0 : index
    %c0_2 = arith.constant 0 : index
    %c0_3 = arith.constant 0 : index
    %1 = vector.load %arg1[%c0_1, %c0_2, %c0_3] : memref<2x1x24xf32, #tpu.memory_space<vmem>>, vector<1x1x24xf32>
    %2 = vector.shape_cast %1 : vector<1x1x24xf32> to vector<1x24xf32>
    %c0_4 = arith.constant 0 : index
    %c0_5 = arith.constant 0 : index
    %c0_6 = arith.constant 0 : index
    %3 = vector.load %arg2[%c0_4, %c0_5, %c0_6] : memref<2x1x24xf32, #tpu.memory_space<vmem>>, vector<1x1x24xf32>
    %4 = vector.shape_cast %3 : vector<1x1x24xf32> to vector<1x24xf32>
    %c0_7 = arith.constant 0 : index
    %c0_8 = arith.constant 0 : index
    %c0_9 = arith.constant 0 : index
    %5 = vector.load %arg3[%c0_7, %c0_8, %c0_9] : memref<2x24x88xbf16, #tpu.memory_space<vmem>>, vector<1x24x88xbf16>
    %6 = vector.shape_cast %5 : vector<1x24x88xbf16> to vector<24x88xbf16>
    %c0_10 = arith.constant 0 : index
    %c0_11 = arith.constant 0 : index
    %c0_12 = arith.constant 0 : index
    %7 = vector.load %arg4[%c0_10, %c0_11, %c0_12] : memref<2x24x24xbf16, #tpu.memory_space<vmem>>, vector<1x24x24xbf16>
    %8 = vector.shape_cast %7 : vector<1x24x24xbf16> to vector<24x24xbf16>
    %c0_13 = arith.constant 0 : index
    %c0_14 = arith.constant 0 : index
    %c0_15 = arith.constant 0 : index
    %9 = vector.load %arg5[%c0_13, %c0_14, %c0_15] : memref<2x1x24xf32, #tpu.memory_space<vmem>>, vector<1x1x24xf32>
    %10 = vector.shape_cast %9 : vector<1x1x24xf32> to vector<1x24xf32>
    %c0_16 = arith.constant 0 : index
    %c0_17 = arith.constant 0 : index
    %c0_18 = arith.constant 0 : index
    %11 = vector.load %arg6[%c0_16, %c0_17, %c0_18] : memref<2x2x16xf32, #tpu.memory_space<vmem>>, vector<1x2x16xf32>
    %12 = vector.shape_cast %11 : vector<1x2x16xf32> to vector<2x16xf32>
    %c0_19 = arith.constant 0 : index
    %c0_20 = arith.constant 0 : index
    %c0_21 = arith.constant 0 : index
    %13 = vector.load %arg7[%c0_19, %c0_20, %c0_21] : memref<2x2x16xf32, #tpu.memory_space<vmem>>, vector<1x2x16xf32>
    %14 = vector.shape_cast %13 : vector<1x2x16xf32> to vector<2x16xf32>
    %c0_22 = arith.constant 0 : index
    %c0_23 = arith.constant 0 : index
    %c0_24 = arith.constant 0 : index
    %c0_25 = arith.constant 0 : index
    %15 = vector.load %arg8[%c0_22, %c0_23, %c0_24, %c0_25] : memref<2x2x16x15xbf16, #tpu.memory_space<vmem>>, vector<1x2x16x15xbf16>
    %16 = vector.shape_cast %15 : vector<1x2x16x15xbf16> to vector<2x16x15xbf16>
    %c0_26 = arith.constant 0 : index
    %c0_27 = arith.constant 0 : index
    %c0_28 = arith.constant 0 : index
    %17 = vector.load %arg9[%c0_26, %c0_27, %c0_28] : memref<2x1x24xf32, #tpu.memory_space<vmem>>, vector<1x1x24xf32>
    %18 = vector.shape_cast %17 : vector<1x1x24xf32> to vector<1x24xf32>
    %c0_29 = arith.constant 0 : index
    %c0_30 = arith.constant 0 : index
    %c0_31 = arith.constant 0 : index
    %19 = vector.load %arg10[%c0_29, %c0_30, %c0_31] : memref<2x1x24xf32, #tpu.memory_space<vmem>>, vector<1x1x24xf32>
    %20 = vector.shape_cast %19 : vector<1x1x24xf32> to vector<1x24xf32>
    %c0_32 = arith.constant 0 : index
    %c0_33 = arith.constant 0 : index
    %c0_34 = arith.constant 0 : index
    %21 = vector.load %arg11[%c0_32, %c0_33, %c0_34] : memref<2x24x48xbf16, #tpu.memory_space<vmem>>, vector<1x24x48xbf16>
    %22 = vector.shape_cast %21 : vector<1x24x48xbf16> to vector<24x48xbf16>
    %c0_35 = arith.constant 0 : index
    %c0_36 = arith.constant 0 : index
    %c0_37 = arith.constant 0 : index
    %23 = vector.load %arg12[%c0_35, %c0_36, %c0_37] : memref<2x1x48xf32, #tpu.memory_space<vmem>>, vector<1x1x48xf32>
    %24 = vector.shape_cast %23 : vector<1x1x48xf32> to vector<1x48xf32>
    %c0_38 = arith.constant 0 : index
    %c0_39 = arith.constant 0 : index
    %c0_40 = arith.constant 0 : index
    %25 = vector.load %arg13[%c0_38, %c0_39, %c0_40] : memref<2x48x24xbf16, #tpu.memory_space<vmem>>, vector<1x48x24xbf16>
    %26 = vector.shape_cast %25 : vector<1x48x24xbf16> to vector<48x24xbf16>
    %c0_41 = arith.constant 0 : index
    %c0_42 = arith.constant 0 : index
    %c0_43 = arith.constant 0 : index
    %27 = vector.load %arg14[%c0_41, %c0_42, %c0_43] : memref<2x1x24xf32, #tpu.memory_space<vmem>>, vector<1x1x24xf32>
    %28 = vector.shape_cast %27 : vector<1x1x24xf32> to vector<1x24xf32>
    %cst = arith.constant dense<0.000000e+00> : vector<16xf32>
    %29 = vector.multi_reduction <add>, %0, %cst [1] : vector<16x24xf32> to vector<16xf32>
    %30 = vector.shape_cast %29 : vector<16xf32> to vector<16x1xf32>
    %cst_44 = arith.constant 2.400000e+01 : f32
    %31 = vector.broadcast %cst_44 : f32 to vector<16x1xf32>
    %32 = arith.divf %30, %31 : vector<16x1xf32>
    %33 = vector.broadcast %32 : vector<16x1xf32> to vector<16x24xf32>
    %34 = arith.subf %0, %33 : vector<16x24xf32>
    %35 = arith.mulf %34, %34 : vector<16x24xf32>
    %cst_45 = arith.constant dense<0.000000e+00> : vector<16xf32>
    %36 = vector.multi_reduction <add>, %35, %cst_45 [1] : vector<16x24xf32> to vector<16xf32>
    %37 = vector.shape_cast %36 : vector<16xf32> to vector<16x1xf32>
    %cst_46 = arith.constant 2.400000e+01 : f32
    %38 = vector.broadcast %cst_46 : f32 to vector<16x1xf32>
    %39 = arith.divf %37, %38 : vector<16x1xf32>
    %40 = vector.broadcast %32 : vector<16x1xf32> to vector<16x24xf32>
    %41 = arith.subf %0, %40 : vector<16x24xf32>
    %cst_47 = arith.constant 9.99999974E-6 : f32
    %42 = vector.broadcast %cst_47 : f32 to vector<16x1xf32>
    %43 = arith.addf %39, %42 : vector<16x1xf32>
    %44 = math.rsqrt %43 : vector<16x1xf32>
    %45 = vector.broadcast %44 : vector<16x1xf32> to vector<16x24xf32>
    %46 = arith.mulf %41, %45 : vector<16x24xf32>
    %47 = vector.broadcast %2 : vector<1x24xf32> to vector<16x24xf32>
    %48 = arith.mulf %46, %47 : vector<16x24xf32>
    %49 = vector.broadcast %4 : vector<1x24xf32> to vector<16x24xf32>
    %50 = arith.addf %48, %49 : vector<16x24xf32>
    %51 = arith.truncf %50 : vector<16x24xf32> to vector<16x24xbf16>
    %cst_48 = arith.constant dense<0.000000e+00> : vector<16x88xf32>
    %52 = tpu.matmul %51, %6, %cst_48 {dimension_numbers = #tpu.dot_dimension_numbers<[1], [0], [0], [1], [0, 0, 1, 1], [], []>} : vector<16x24xbf16>, vector<24x88xbf16>, vector<16x88xf32> -> vector<16x88xf32>
    %53 = vector.extract_strided_slice %52 {offsets = [0, 0], sizes = [16, 32], strides = [1, 1]} : vector<16x88xf32> to vector<16x32xf32>
    %cst_49 = arith.constant 2.500000e-01 : f32
    %54 = vector.broadcast %cst_49 : f32 to vector<16x32xf32>
    %55 = arith.mulf %53, %54 : vector<16x32xf32>
    %56 = vector.extract_strided_slice %52 {offsets = [0, 32], sizes = [16, 32], strides = [1, 1]} : vector<16x88xf32> to vector<16x32xf32>
    %57 = vector.extract_strided_slice %52 {offsets = [0, 64], sizes = [16, 24], strides = [1, 1]} : vector<16x88xf32> to vector<16x24xf32>
    %58 = vector.extract_strided_slice %55 {offsets = [0, 0], sizes = [16, 16], strides = [1, 1]} : vector<16x32xf32> to vector<16x16xf32>
    %59 = vector.extract_strided_slice %56 {offsets = [0, 0], sizes = [16, 16], strides = [1, 1]} : vector<16x32xf32> to vector<16x16xf32>
    %60 = arith.truncf %59 : vector<16x16xf32> to vector<16x16xbf16>
    %61 = vector.extract_strided_slice %57 {offsets = [0, 0], sizes = [16, 12], strides = [1, 1]} : vector<16x24xf32> to vector<16x12xf32>
    %62 = arith.truncf %61 : vector<16x12xf32> to vector<16x12xbf16>
    %63 = vector.extract_strided_slice %12 {offsets = [0, 0], sizes = [1, 16], strides = [1, 1]} : vector<2x16xf32> to vector<1x16xf32>
    %64 = vector.broadcast %63 : vector<1x16xf32> to vector<16x16xf32>
    %65 = arith.addf %58, %64 : vector<16x16xf32>
    %66 = arith.truncf %65 : vector<16x16xf32> to vector<16x16xbf16>
    %67 = vector.extract_strided_slice %14 {offsets = [0, 0], sizes = [1, 16], strides = [1, 1]} : vector<2x16xf32> to vector<1x16xf32>
    %68 = vector.broadcast %67 : vector<1x16xf32> to vector<16x16xf32>
    %69 = arith.addf %58, %68 : vector<16x16xf32>
    %70 = arith.truncf %69 : vector<16x16xf32> to vector<16x16xbf16>
    %71 = vector.extract_strided_slice %16 {offsets = [0, 0, 0], sizes = [1, 16, 15], strides = [1, 1, 1]} : vector<2x16x15xbf16> to vector<1x16x15xbf16>
    %72 = vector.shape_cast %71 : vector<1x16x15xbf16> to vector<16x15xbf16>
    %cst_50 = arith.constant dense<0.000000e+00> : vector<16x15xf32>
    %73 = tpu.matmul %70, %72, %cst_50 {dimension_numbers = #tpu.dot_dimension_numbers<[1], [0], [0], [1], [0, 0, 1, 1], [], []>} : vector<16x16xbf16>, vector<16x15xbf16>, vector<16x15xf32> -> vector<16x15xf32>
    %74 = vector.extract_strided_slice %66 {offsets = [0, 0], sizes = [8, 16], strides = [1, 1]} : vector<16x16xbf16> to vector<8x16xbf16>
    %75 = vector.extract_strided_slice %60 {offsets = [0, 0], sizes = [8, 16], strides = [1, 1]} : vector<16x16xbf16> to vector<8x16xbf16>
    %cst_51 = arith.constant dense<0.000000e+00> : vector<8x8xf32>
    %76 = tpu.matmul %74, %75, %cst_51 {dimension_numbers = #tpu.dot_dimension_numbers<[1], [1], [0], [0], [0, 0, 1, 0], [], []>} : vector<8x16xbf16>, vector<8x16xbf16>, vector<8x8xf32> -> vector<8x8xf32>
    %77 = vector.extract_strided_slice %73 {offsets = [0, 7], sizes = [1, 8], strides = [1, 1]} : vector<16x15xf32> to vector<1x8xf32>
    %78 = vector.extract_strided_slice %73 {offsets = [1, 6], sizes = [1, 8], strides = [1, 1]} : vector<16x15xf32> to vector<1x8xf32>
    %79 = vector.extract_strided_slice %73 {offsets = [2, 5], sizes = [1, 8], strides = [1, 1]} : vector<16x15xf32> to vector<1x8xf32>
    %80 = vector.extract_strided_slice %73 {offsets = [3, 4], sizes = [1, 8], strides = [1, 1]} : vector<16x15xf32> to vector<1x8xf32>
    %81 = vector.extract_strided_slice %73 {offsets = [4, 3], sizes = [1, 8], strides = [1, 1]} : vector<16x15xf32> to vector<1x8xf32>
    %82 = vector.extract_strided_slice %73 {offsets = [5, 2], sizes = [1, 8], strides = [1, 1]} : vector<16x15xf32> to vector<1x8xf32>
    %83 = vector.extract_strided_slice %73 {offsets = [6, 1], sizes = [1, 8], strides = [1, 1]} : vector<16x15xf32> to vector<1x8xf32>
    %84 = vector.extract_strided_slice %73 {offsets = [7, 0], sizes = [1, 8], strides = [1, 1]} : vector<16x15xf32> to vector<1x8xf32>
    %85 = tpu.concatenate %77, %78, %79, %80, %81, %82, %83, %84 in 0 : vector<1x8xf32>, vector<1x8xf32>, vector<1x8xf32>, vector<1x8xf32>, vector<1x8xf32>, vector<1x8xf32>, vector<1x8xf32>, vector<1x8xf32> -> vector<8x8xf32>
    %86 = arith.addf %76, %85 : vector<8x8xf32>
    %cst_52 = arith.constant dense<0xFF800000> : vector<8xf32>
    %87 = vector.multi_reduction <maximumf>, %86, %cst_52 [1] : vector<8x8xf32> to vector<8xf32>
    %88 = vector.shape_cast %87 : vector<8xf32> to vector<8x1xf32>
    %89 = vector.broadcast %88 : vector<8x1xf32> to vector<8x8xf32>
    %90 = arith.subf %86, %89 : vector<8x8xf32>
    %91 = math.exp %90 : vector<8x8xf32>
    %cst_53 = arith.constant dense<0.000000e+00> : vector<8xf32>
    %92 = vector.multi_reduction <add>, %91, %cst_53 [1] : vector<8x8xf32> to vector<8xf32>
    %93 = vector.shape_cast %92 : vector<8xf32> to vector<8x1xf32>
    %94 = tpu.reciprocal %93 {approx = true} : vector<8x1xf32> -> vector<8x1xf32>
    %95 = vector.broadcast %94 : vector<8x1xf32> to vector<8x8xf32>
    %96 = arith.mulf %91, %95 : vector<8x8xf32>
    %97 = arith.truncf %96 : vector<8x8xf32> to vector<8x8xbf16>
    %98 = vector.extract_strided_slice %62 {offsets = [0, 0], sizes = [8, 12], strides = [1, 1]} : vector<16x12xbf16> to vector<8x12xbf16>
    %cst_54 = arith.constant dense<0.000000e+00> : vector<8x12xf32>
    %99 = tpu.matmul %97, %98, %cst_54 {dimension_numbers = #tpu.dot_dimension_numbers<[1], [0], [0], [1], [0, 0, 1, 1], [], []>} : vector<8x8xbf16>, vector<8x12xbf16>, vector<8x12xf32> -> vector<8x12xf32>
    %100 = vector.extract_strided_slice %66 {offsets = [8, 0], sizes = [8, 16], strides = [1, 1]} : vector<16x16xbf16> to vector<8x16xbf16>
    %101 = vector.extract_strided_slice %60 {offsets = [8, 0], sizes = [8, 16], strides = [1, 1]} : vector<16x16xbf16> to vector<8x16xbf16>
    %cst_55 = arith.constant dense<0.000000e+00> : vector<8x8xf32>
    %102 = tpu.matmul %100, %101, %cst_55 {dimension_numbers = #tpu.dot_dimension_numbers<[1], [1], [0], [0], [0, 0, 1, 0], [], []>} : vector<8x16xbf16>, vector<8x16xbf16>, vector<8x8xf32> -> vector<8x8xf32>
    %103 = vector.extract_strided_slice %73 {offsets = [8, 7], sizes = [1, 8], strides = [1, 1]} : vector<16x15xf32> to vector<1x8xf32>
    %104 = vector.extract_strided_slice %73 {offsets = [9, 6], sizes = [1, 8], strides = [1, 1]} : vector<16x15xf32> to vector<1x8xf32>
    %105 = vector.extract_strided_slice %73 {offsets = [10, 5], sizes = [1, 8], strides = [1, 1]} : vector<16x15xf32> to vector<1x8xf32>
    %106 = vector.extract_strided_slice %73 {offsets = [11, 4], sizes = [1, 8], strides = [1, 1]} : vector<16x15xf32> to vector<1x8xf32>
    %107 = vector.extract_strided_slice %73 {offsets = [12, 3], sizes = [1, 8], strides = [1, 1]} : vector<16x15xf32> to vector<1x8xf32>
    %108 = vector.extract_strided_slice %73 {offsets = [13, 2], sizes = [1, 8], strides = [1, 1]} : vector<16x15xf32> to vector<1x8xf32>
    %109 = vector.extract_strided_slice %73 {offsets = [14, 1], sizes = [1, 8], strides = [1, 1]} : vector<16x15xf32> to vector<1x8xf32>
    %110 = vector.extract_strided_slice %73 {offsets = [15, 0], sizes = [1, 8], strides = [1, 1]} : vector<16x15xf32> to vector<1x8xf32>
    %111 = tpu.concatenate %103, %104, %105, %106, %107, %108, %109, %110 in 0 : vector<1x8xf32>, vector<1x8xf32>, vector<1x8xf32>, vector<1x8xf32>, vector<1x8xf32>, vector<1x8xf32>, vector<1x8xf32>, vector<1x8xf32> -> vector<8x8xf32>
    %112 = arith.addf %102, %111 : vector<8x8xf32>
    %cst_56 = arith.constant dense<0xFF800000> : vector<8xf32>
    %113 = vector.multi_reduction <maximumf>, %112, %cst_56 [1] : vector<8x8xf32> to vector<8xf32>
    %114 = vector.shape_cast %113 : vector<8xf32> to vector<8x1xf32>
    %115 = vector.broadcast %114 : vector<8x1xf32> to vector<8x8xf32>
    %116 = arith.subf %112, %115 : vector<8x8xf32>
    %117 = math.exp %116 : vector<8x8xf32>
    %cst_57 = arith.constant dense<0.000000e+00> : vector<8xf32>
    %118 = vector.multi_reduction <add>, %117, %cst_57 [1] : vector<8x8xf32> to vector<8xf32>
    %119 = vector.shape_cast %118 : vector<8xf32> to vector<8x1xf32>
    %120 = tpu.reciprocal %119 {approx = true} : vector<8x1xf32> -> vector<8x1xf32>
    %121 = vector.broadcast %120 : vector<8x1xf32> to vector<8x8xf32>
    %122 = arith.mulf %117, %121 : vector<8x8xf32>
    %123 = arith.truncf %122 : vector<8x8xf32> to vector<8x8xbf16>
    %124 = vector.extract_strided_slice %62 {offsets = [8, 0], sizes = [8, 12], strides = [1, 1]} : vector<16x12xbf16> to vector<8x12xbf16>
    %cst_58 = arith.constant dense<0.000000e+00> : vector<8x12xf32>
    %125 = tpu.matmul %123, %124, %cst_58 {dimension_numbers = #tpu.dot_dimension_numbers<[1], [0], [0], [1], [0, 0, 1, 1], [], []>} : vector<8x8xbf16>, vector<8x12xbf16>, vector<8x12xf32> -> vector<8x12xf32>
    %126 = vector.extract_strided_slice %55 {offsets = [0, 16], sizes = [16, 16], strides = [1, 1]} : vector<16x32xf32> to vector<16x16xf32>
    %127 = vector.extract_strided_slice %56 {offsets = [0, 16], sizes = [16, 16], strides = [1, 1]} : vector<16x32xf32> to vector<16x16xf32>
    %128 = arith.truncf %127 : vector<16x16xf32> to vector<16x16xbf16>
    %129 = vector.extract_strided_slice %57 {offsets = [0, 12], sizes = [16, 12], strides = [1, 1]} : vector<16x24xf32> to vector<16x12xf32>
    %130 = arith.truncf %129 : vector<16x12xf32> to vector<16x12xbf16>
    %131 = vector.extract_strided_slice %12 {offsets = [1, 0], sizes = [1, 16], strides = [1, 1]} : vector<2x16xf32> to vector<1x16xf32>
    %132 = vector.broadcast %131 : vector<1x16xf32> to vector<16x16xf32>
    %133 = arith.addf %126, %132 : vector<16x16xf32>
    %134 = arith.truncf %133 : vector<16x16xf32> to vector<16x16xbf16>
    %135 = vector.extract_strided_slice %14 {offsets = [1, 0], sizes = [1, 16], strides = [1, 1]} : vector<2x16xf32> to vector<1x16xf32>
    %136 = vector.broadcast %135 : vector<1x16xf32> to vector<16x16xf32>
    %137 = arith.addf %126, %136 : vector<16x16xf32>
    %138 = arith.truncf %137 : vector<16x16xf32> to vector<16x16xbf16>
    %139 = vector.extract_strided_slice %16 {offsets = [1, 0, 0], sizes = [1, 16, 15], strides = [1, 1, 1]} : vector<2x16x15xbf16> to vector<1x16x15xbf16>
    %140 = vector.shape_cast %139 : vector<1x16x15xbf16> to vector<16x15xbf16>
    %cst_59 = arith.constant dense<0.000000e+00> : vector<16x15xf32>
    %141 = tpu.matmul %138, %140, %cst_59 {dimension_numbers = #tpu.dot_dimension_numbers<[1], [0], [0], [1], [0, 0, 1, 1], [], []>} : vector<16x16xbf16>, vector<16x15xbf16>, vector<16x15xf32> -> vector<16x15xf32>
    %142 = vector.extract_strided_slice %134 {offsets = [0, 0], sizes = [8, 16], strides = [1, 1]} : vector<16x16xbf16> to vector<8x16xbf16>
    %143 = vector.extract_strided_slice %128 {offsets = [0, 0], sizes = [8, 16], strides = [1, 1]} : vector<16x16xbf16> to vector<8x16xbf16>
    %cst_60 = arith.constant dense<0.000000e+00> : vector<8x8xf32>
    %144 = tpu.matmul %142, %143, %cst_60 {dimension_numbers = #tpu.dot_dimension_numbers<[1], [1], [0], [0], [0, 0, 1, 0], [], []>} : vector<8x16xbf16>, vector<8x16xbf16>, vector<8x8xf32> -> vector<8x8xf32>
    %145 = vector.extract_strided_slice %141 {offsets = [0, 7], sizes = [1, 8], strides = [1, 1]} : vector<16x15xf32> to vector<1x8xf32>
    %146 = vector.extract_strided_slice %141 {offsets = [1, 6], sizes = [1, 8], strides = [1, 1]} : vector<16x15xf32> to vector<1x8xf32>
    %147 = vector.extract_strided_slice %141 {offsets = [2, 5], sizes = [1, 8], strides = [1, 1]} : vector<16x15xf32> to vector<1x8xf32>
    %148 = vector.extract_strided_slice %141 {offsets = [3, 4], sizes = [1, 8], strides = [1, 1]} : vector<16x15xf32> to vector<1x8xf32>
    %149 = vector.extract_strided_slice %141 {offsets = [4, 3], sizes = [1, 8], strides = [1, 1]} : vector<16x15xf32> to vector<1x8xf32>
    %150 = vector.extract_strided_slice %141 {offsets = [5, 2], sizes = [1, 8], strides = [1, 1]} : vector<16x15xf32> to vector<1x8xf32>
    %151 = vector.extract_strided_slice %141 {offsets = [6, 1], sizes = [1, 8], strides = [1, 1]} : vector<16x15xf32> to vector<1x8xf32>
    %152 = vector.extract_strided_slice %141 {offsets = [7, 0], sizes = [1, 8], strides = [1, 1]} : vector<16x15xf32> to vector<1x8xf32>
    %153 = tpu.concatenate %145, %146, %147, %148, %149, %150, %151, %152 in 0 : vector<1x8xf32>, vector<1x8xf32>, vector<1x8xf32>, vector<1x8xf32>, vector<1x8xf32>, vector<1x8xf32>, vector<1x8xf32>, vector<1x8xf32> -> vector<8x8xf32>
    %154 = arith.addf %144, %153 : vector<8x8xf32>
    %cst_61 = arith.constant dense<0xFF800000> : vector<8xf32>
    %155 = vector.multi_reduction <maximumf>, %154, %cst_61 [1] : vector<8x8xf32> to vector<8xf32>
    %156 = vector.shape_cast %155 : vector<8xf32> to vector<8x1xf32>
    %157 = vector.broadcast %156 : vector<8x1xf32> to vector<8x8xf32>
    %158 = arith.subf %154, %157 : vector<8x8xf32>
    %159 = math.exp %158 : vector<8x8xf32>
    %cst_62 = arith.constant dense<0.000000e+00> : vector<8xf32>
    %160 = vector.multi_reduction <add>, %159, %cst_62 [1] : vector<8x8xf32> to vector<8xf32>
    %161 = vector.shape_cast %160 : vector<8xf32> to vector<8x1xf32>
    %162 = tpu.reciprocal %161 {approx = true} : vector<8x1xf32> -> vector<8x1xf32>
    %163 = vector.broadcast %162 : vector<8x1xf32> to vector<8x8xf32>
    %164 = arith.mulf %159, %163 : vector<8x8xf32>
    %165 = arith.truncf %164 : vector<8x8xf32> to vector<8x8xbf16>
    %166 = vector.extract_strided_slice %130 {offsets = [0, 0], sizes = [8, 12], strides = [1, 1]} : vector<16x12xbf16> to vector<8x12xbf16>
    %cst_63 = arith.constant dense<0.000000e+00> : vector<8x12xf32>
    %167 = tpu.matmul %165, %166, %cst_63 {dimension_numbers = #tpu.dot_dimension_numbers<[1], [0], [0], [1], [0, 0, 1, 1], [], []>} : vector<8x8xbf16>, vector<8x12xbf16>, vector<8x12xf32> -> vector<8x12xf32>
    %168 = vector.extract_strided_slice %134 {offsets = [8, 0], sizes = [8, 16], strides = [1, 1]} : vector<16x16xbf16> to vector<8x16xbf16>
    %169 = vector.extract_strided_slice %128 {offsets = [8, 0], sizes = [8, 16], strides = [1, 1]} : vector<16x16xbf16> to vector<8x16xbf16>
    %cst_64 = arith.constant dense<0.000000e+00> : vector<8x8xf32>
    %170 = tpu.matmul %168, %169, %cst_64 {dimension_numbers = #tpu.dot_dimension_numbers<[1], [1], [0], [0], [0, 0, 1, 0], [], []>} : vector<8x16xbf16>, vector<8x16xbf16>, vector<8x8xf32> -> vector<8x8xf32>
    %171 = vector.extract_strided_slice %141 {offsets = [8, 7], sizes = [1, 8], strides = [1, 1]} : vector<16x15xf32> to vector<1x8xf32>
    %172 = vector.extract_strided_slice %141 {offsets = [9, 6], sizes = [1, 8], strides = [1, 1]} : vector<16x15xf32> to vector<1x8xf32>
    %173 = vector.extract_strided_slice %141 {offsets = [10, 5], sizes = [1, 8], strides = [1, 1]} : vector<16x15xf32> to vector<1x8xf32>
    %174 = vector.extract_strided_slice %141 {offsets = [11, 4], sizes = [1, 8], strides = [1, 1]} : vector<16x15xf32> to vector<1x8xf32>
    %175 = vector.extract_strided_slice %141 {offsets = [12, 3], sizes = [1, 8], strides = [1, 1]} : vector<16x15xf32> to vector<1x8xf32>
    %176 = vector.extract_strided_slice %141 {offsets = [13, 2], sizes = [1, 8], strides = [1, 1]} : vector<16x15xf32> to vector<1x8xf32>
    %177 = vector.extract_strided_slice %141 {offsets = [14, 1], sizes = [1, 8], strides = [1, 1]} : vector<16x15xf32> to vector<1x8xf32>
    %178 = vector.extract_strided_slice %141 {offsets = [15, 0], sizes = [1, 8], strides = [1, 1]} : vector<16x15xf32> to vector<1x8xf32>
    %179 = tpu.concatenate %171, %172, %173, %174, %175, %176, %177, %178 in 0 : vector<1x8xf32>, vector<1x8xf32>, vector<1x8xf32>, vector<1x8xf32>, vector<1x8xf32>, vector<1x8xf32>, vector<1x8xf32>, vector<1x8xf32> -> vector<8x8xf32>
    %180 = arith.addf %170, %179 : vector<8x8xf32>
    %cst_65 = arith.constant dense<0xFF800000> : vector<8xf32>
    %181 = vector.multi_reduction <maximumf>, %180, %cst_65 [1] : vector<8x8xf32> to vector<8xf32>
    %182 = vector.shape_cast %181 : vector<8xf32> to vector<8x1xf32>
    %183 = vector.broadcast %182 : vector<8x1xf32> to vector<8x8xf32>
    %184 = arith.subf %180, %183 : vector<8x8xf32>
    %185 = math.exp %184 : vector<8x8xf32>
    %cst_66 = arith.constant dense<0.000000e+00> : vector<8xf32>
    %186 = vector.multi_reduction <add>, %185, %cst_66 [1] : vector<8x8xf32> to vector<8xf32>
    %187 = vector.shape_cast %186 : vector<8xf32> to vector<8x1xf32>
    %188 = tpu.reciprocal %187 {approx = true} : vector<8x1xf32> -> vector<8x1xf32>
    %189 = vector.broadcast %188 : vector<8x1xf32> to vector<8x8xf32>
    %190 = arith.mulf %185, %189 : vector<8x8xf32>
    %191 = arith.truncf %190 : vector<8x8xf32> to vector<8x8xbf16>
    %192 = vector.extract_strided_slice %130 {offsets = [8, 0], sizes = [8, 12], strides = [1, 1]} : vector<16x12xbf16> to vector<8x12xbf16>
    %cst_67 = arith.constant dense<0.000000e+00> : vector<8x12xf32>
    %193 = tpu.matmul %191, %192, %cst_67 {dimension_numbers = #tpu.dot_dimension_numbers<[1], [0], [0], [1], [0, 0, 1, 1], [], []>} : vector<8x8xbf16>, vector<8x12xbf16>, vector<8x12xf32> -> vector<8x12xf32>
    %194 = tpu.concatenate %99, %167 in 1 : vector<8x12xf32>, vector<8x12xf32> -> vector<8x24xf32>
    %195 = tpu.concatenate %125, %193 in 1 : vector<8x12xf32>, vector<8x12xf32> -> vector<8x24xf32>
    %196 = tpu.concatenate %194, %195 in 0 : vector<8x24xf32>, vector<8x24xf32> -> vector<16x24xf32>
    %197 = arith.truncf %196 : vector<16x24xf32> to vector<16x24xbf16>
    %cst_68 = arith.constant dense<0.000000e+00> : vector<16x24xf32>
    %198 = tpu.matmul %197, %8, %cst_68 {dimension_numbers = #tpu.dot_dimension_numbers<[1], [0], [0], [1], [0, 0, 1, 1], [], []>} : vector<16x24xbf16>, vector<24x24xbf16>, vector<16x24xf32> -> vector<16x24xf32>
    %199 = vector.broadcast %10 : vector<1x24xf32> to vector<16x24xf32>
    %200 = arith.addf %198, %199 : vector<16x24xf32>
    %201 = arith.addf %0, %200 : vector<16x24xf32>
    %cst_69 = arith.constant dense<0.000000e+00> : vector<16xf32>
    %202 = vector.multi_reduction <add>, %201, %cst_69 [1] : vector<16x24xf32> to vector<16xf32>
    %203 = vector.shape_cast %202 : vector<16xf32> to vector<16x1xf32>
    %cst_70 = arith.constant 2.400000e+01 : f32
    %204 = vector.broadcast %cst_70 : f32 to vector<16x1xf32>
    %205 = arith.divf %203, %204 : vector<16x1xf32>
    %206 = vector.broadcast %205 : vector<16x1xf32> to vector<16x24xf32>
    %207 = arith.subf %201, %206 : vector<16x24xf32>
    %208 = arith.mulf %207, %207 : vector<16x24xf32>
    %cst_71 = arith.constant dense<0.000000e+00> : vector<16xf32>
    %209 = vector.multi_reduction <add>, %208, %cst_71 [1] : vector<16x24xf32> to vector<16xf32>
    %210 = vector.shape_cast %209 : vector<16xf32> to vector<16x1xf32>
    %cst_72 = arith.constant 2.400000e+01 : f32
    %211 = vector.broadcast %cst_72 : f32 to vector<16x1xf32>
    %212 = arith.divf %210, %211 : vector<16x1xf32>
    %213 = vector.broadcast %205 : vector<16x1xf32> to vector<16x24xf32>
    %214 = arith.subf %201, %213 : vector<16x24xf32>
    %cst_73 = arith.constant 9.99999974E-6 : f32
    %215 = vector.broadcast %cst_73 : f32 to vector<16x1xf32>
    %216 = arith.addf %212, %215 : vector<16x1xf32>
    %217 = math.rsqrt %216 : vector<16x1xf32>
    %218 = vector.broadcast %217 : vector<16x1xf32> to vector<16x24xf32>
    %219 = arith.mulf %214, %218 : vector<16x24xf32>
    %220 = vector.broadcast %18 : vector<1x24xf32> to vector<16x24xf32>
    %221 = arith.mulf %219, %220 : vector<16x24xf32>
    %222 = vector.broadcast %20 : vector<1x24xf32> to vector<16x24xf32>
    %223 = arith.addf %221, %222 : vector<16x24xf32>
    %224 = arith.truncf %223 : vector<16x24xf32> to vector<16x24xbf16>
    %cst_74 = arith.constant dense<0.000000e+00> : vector<16x48xf32>
    %225 = tpu.matmul %224, %22, %cst_74 {dimension_numbers = #tpu.dot_dimension_numbers<[1], [0], [0], [1], [0, 0, 1, 1], [], []>} : vector<16x24xbf16>, vector<24x48xbf16>, vector<16x48xf32> -> vector<16x48xf32>
    %226 = vector.broadcast %24 : vector<1x48xf32> to vector<16x48xf32>
    %227 = arith.addf %225, %226 : vector<16x48xf32>
    %cst_75 = arith.constant 0.000000e+00 : f32
    %228 = vector.broadcast %cst_75 : f32 to vector<16x48xf32>
    %229 = arith.maximumf %227, %228 : vector<16x48xf32>
    %230 = arith.truncf %229 : vector<16x48xf32> to vector<16x48xbf16>
    %cst_76 = arith.constant dense<0.000000e+00> : vector<16x24xf32>
    %231 = tpu.matmul %230, %26, %cst_76 {dimension_numbers = #tpu.dot_dimension_numbers<[1], [0], [0], [1], [0, 0, 1, 1], [], []>} : vector<16x48xbf16>, vector<48x24xbf16>, vector<16x24xf32> -> vector<16x24xf32>
    %232 = vector.broadcast %28 : vector<1x24xf32> to vector<16x24xf32>
    %233 = arith.addf %231, %232 : vector<16x24xf32>
    %234 = arith.addf %201, %233 : vector<16x24xf32>
    %c1 = arith.constant 1 : index
    %c0_77 = arith.constant 0 : index
    %c0_78 = arith.constant 0 : index
    %235 = vector.load %arg1[%c1, %c0_77, %c0_78] : memref<2x1x24xf32, #tpu.memory_space<vmem>>, vector<1x1x24xf32>
    %236 = vector.shape_cast %235 : vector<1x1x24xf32> to vector<1x24xf32>
    %c1_79 = arith.constant 1 : index
    %c0_80 = arith.constant 0 : index
    %c0_81 = arith.constant 0 : index
    %237 = vector.load %arg2[%c1_79, %c0_80, %c0_81] : memref<2x1x24xf32, #tpu.memory_space<vmem>>, vector<1x1x24xf32>
    %238 = vector.shape_cast %237 : vector<1x1x24xf32> to vector<1x24xf32>
    %c1_82 = arith.constant 1 : index
    %c0_83 = arith.constant 0 : index
    %c0_84 = arith.constant 0 : index
    %239 = vector.load %arg3[%c1_82, %c0_83, %c0_84] : memref<2x24x88xbf16, #tpu.memory_space<vmem>>, vector<1x24x88xbf16>
    %240 = vector.shape_cast %239 : vector<1x24x88xbf16> to vector<24x88xbf16>
    %c1_85 = arith.constant 1 : index
    %c0_86 = arith.constant 0 : index
    %c0_87 = arith.constant 0 : index
    %241 = vector.load %arg4[%c1_85, %c0_86, %c0_87] : memref<2x24x24xbf16, #tpu.memory_space<vmem>>, vector<1x24x24xbf16>
    %242 = vector.shape_cast %241 : vector<1x24x24xbf16> to vector<24x24xbf16>
    %c1_88 = arith.constant 1 : index
    %c0_89 = arith.constant 0 : index
    %c0_90 = arith.constant 0 : index
    %243 = vector.load %arg5[%c1_88, %c0_89, %c0_90] : memref<2x1x24xf32, #tpu.memory_space<vmem>>, vector<1x1x24xf32>
    %244 = vector.shape_cast %243 : vector<1x1x24xf32> to vector<1x24xf32>
    %c1_91 = arith.constant 1 : index
    %c0_92 = arith.constant 0 : index
    %c0_93 = arith.constant 0 : index
    %245 = vector.load %arg6[%c1_91, %c0_92, %c0_93] : memref<2x2x16xf32, #tpu.memory_space<vmem>>, vector<1x2x16xf32>
    %246 = vector.shape_cast %245 : vector<1x2x16xf32> to vector<2x16xf32>
    %c1_94 = arith.constant 1 : index
    %c0_95 = arith.constant 0 : index
    %c0_96 = arith.constant 0 : index
    %247 = vector.load %arg7[%c1_94, %c0_95, %c0_96] : memref<2x2x16xf32, #tpu.memory_space<vmem>>, vector<1x2x16xf32>
    %248 = vector.shape_cast %247 : vector<1x2x16xf32> to vector<2x16xf32>
    %c1_97 = arith.constant 1 : index
    %c0_98 = arith.constant 0 : index
    %c0_99 = arith.constant 0 : index
    %c0_100 = arith.constant 0 : index
    %249 = vector.load %arg8[%c1_97, %c0_98, %c0_99, %c0_100] : memref<2x2x16x15xbf16, #tpu.memory_space<vmem>>, vector<1x2x16x15xbf16>
    %250 = vector.shape_cast %249 : vector<1x2x16x15xbf16> to vector<2x16x15xbf16>
    %c1_101 = arith.constant 1 : index
    %c0_102 = arith.constant 0 : index
    %c0_103 = arith.constant 0 : index
    %251 = vector.load %arg9[%c1_101, %c0_102, %c0_103] : memref<2x1x24xf32, #tpu.memory_space<vmem>>, vector<1x1x24xf32>
    %252 = vector.shape_cast %251 : vector<1x1x24xf32> to vector<1x24xf32>
    %c1_104 = arith.constant 1 : index
    %c0_105 = arith.constant 0 : index
    %c0_106 = arith.constant 0 : index
    %253 = vector.load %arg10[%c1_104, %c0_105, %c0_106] : memref<2x1x24xf32, #tpu.memory_space<vmem>>, vector<1x1x24xf32>
    %254 = vector.shape_cast %253 : vector<1x1x24xf32> to vector<1x24xf32>
    %c1_107 = arith.constant 1 : index
    %c0_108 = arith.constant 0 : index
    %c0_109 = arith.constant 0 : index
    %255 = vector.load %arg11[%c1_107, %c0_108, %c0_109] : memref<2x24x48xbf16, #tpu.memory_space<vmem>>, vector<1x24x48xbf16>
    %256 = vector.shape_cast %255 : vector<1x24x48xbf16> to vector<24x48xbf16>
    %c1_110 = arith.constant 1 : index
    %c0_111 = arith.constant 0 : index
    %c0_112 = arith.constant 0 : index
    %257 = vector.load %arg12[%c1_110, %c0_111, %c0_112] : memref<2x1x48xf32, #tpu.memory_space<vmem>>, vector<1x1x48xf32>
    %258 = vector.shape_cast %257 : vector<1x1x48xf32> to vector<1x48xf32>
    %c1_113 = arith.constant 1 : index
    %c0_114 = arith.constant 0 : index
    %c0_115 = arith.constant 0 : index
    %259 = vector.load %arg13[%c1_113, %c0_114, %c0_115] : memref<2x48x24xbf16, #tpu.memory_space<vmem>>, vector<1x48x24xbf16>
    %260 = vector.shape_cast %259 : vector<1x48x24xbf16> to vector<48x24xbf16>
    %c1_116 = arith.constant 1 : index
    %c0_117 = arith.constant 0 : index
    %c0_118 = arith.constant 0 : index
    %261 = vector.load %arg14[%c1_116, %c0_117, %c0_118] : memref<2x1x24xf32, #tpu.memory_space<vmem>>, vector<1x1x24xf32>
    %262 = vector.shape_cast %261 : vector<1x1x24xf32> to vector<1x24xf32>
    %cst_119 = arith.constant dense<0.000000e+00> : vector<16xf32>
    %263 = vector.multi_reduction <add>, %234, %cst_119 [1] : vector<16x24xf32> to vector<16xf32>
    %264 = vector.shape_cast %263 : vector<16xf32> to vector<16x1xf32>
    %cst_120 = arith.constant 2.400000e+01 : f32
    %265 = vector.broadcast %cst_120 : f32 to vector<16x1xf32>
    %266 = arith.divf %264, %265 : vector<16x1xf32>
    %267 = vector.broadcast %266 : vector<16x1xf32> to vector<16x24xf32>
    %268 = arith.subf %234, %267 : vector<16x24xf32>
    %269 = arith.mulf %268, %268 : vector<16x24xf32>
    %cst_121 = arith.constant dense<0.000000e+00> : vector<16xf32>
    %270 = vector.multi_reduction <add>, %269, %cst_121 [1] : vector<16x24xf32> to vector<16xf32>
    %271 = vector.shape_cast %270 : vector<16xf32> to vector<16x1xf32>
    %cst_122 = arith.constant 2.400000e+01 : f32
    %272 = vector.broadcast %cst_122 : f32 to vector<16x1xf32>
    %273 = arith.divf %271, %272 : vector<16x1xf32>
    %274 = vector.broadcast %266 : vector<16x1xf32> to vector<16x24xf32>
    %275 = arith.subf %234, %274 : vector<16x24xf32>
    %cst_123 = arith.constant 9.99999974E-6 : f32
    %276 = vector.broadcast %cst_123 : f32 to vector<16x1xf32>
    %277 = arith.addf %273, %276 : vector<16x1xf32>
    %278 = math.rsqrt %277 : vector<16x1xf32>
    %279 = vector.broadcast %278 : vector<16x1xf32> to vector<16x24xf32>
    %280 = arith.mulf %275, %279 : vector<16x24xf32>
    %281 = vector.broadcast %236 : vector<1x24xf32> to vector<16x24xf32>
    %282 = arith.mulf %280, %281 : vector<16x24xf32>
    %283 = vector.broadcast %238 : vector<1x24xf32> to vector<16x24xf32>
    %284 = arith.addf %282, %283 : vector<16x24xf32>
    %285 = arith.truncf %284 : vector<16x24xf32> to vector<16x24xbf16>
    %cst_124 = arith.constant dense<0.000000e+00> : vector<16x88xf32>
    %286 = tpu.matmul %285, %240, %cst_124 {dimension_numbers = #tpu.dot_dimension_numbers<[1], [0], [0], [1], [0, 0, 1, 1], [], []>} : vector<16x24xbf16>, vector<24x88xbf16>, vector<16x88xf32> -> vector<16x88xf32>
    %287 = vector.extract_strided_slice %286 {offsets = [0, 0], sizes = [16, 32], strides = [1, 1]} : vector<16x88xf32> to vector<16x32xf32>
    %cst_125 = arith.constant 2.500000e-01 : f32
    %288 = vector.broadcast %cst_125 : f32 to vector<16x32xf32>
    %289 = arith.mulf %287, %288 : vector<16x32xf32>
    %290 = vector.extract_strided_slice %286 {offsets = [0, 32], sizes = [16, 32], strides = [1, 1]} : vector<16x88xf32> to vector<16x32xf32>
    %291 = vector.extract_strided_slice %286 {offsets = [0, 64], sizes = [16, 24], strides = [1, 1]} : vector<16x88xf32> to vector<16x24xf32>
    %292 = vector.extract_strided_slice %289 {offsets = [0, 0], sizes = [16, 16], strides = [1, 1]} : vector<16x32xf32> to vector<16x16xf32>
    %293 = vector.extract_strided_slice %290 {offsets = [0, 0], sizes = [16, 16], strides = [1, 1]} : vector<16x32xf32> to vector<16x16xf32>
    %294 = arith.truncf %293 : vector<16x16xf32> to vector<16x16xbf16>
    %295 = vector.extract_strided_slice %291 {offsets = [0, 0], sizes = [16, 12], strides = [1, 1]} : vector<16x24xf32> to vector<16x12xf32>
    %296 = arith.truncf %295 : vector<16x12xf32> to vector<16x12xbf16>
    %297 = vector.extract_strided_slice %246 {offsets = [0, 0], sizes = [1, 16], strides = [1, 1]} : vector<2x16xf32> to vector<1x16xf32>
    %298 = vector.broadcast %297 : vector<1x16xf32> to vector<16x16xf32>
    %299 = arith.addf %292, %298 : vector<16x16xf32>
    %300 = arith.truncf %299 : vector<16x16xf32> to vector<16x16xbf16>
    %301 = vector.extract_strided_slice %248 {offsets = [0, 0], sizes = [1, 16], strides = [1, 1]} : vector<2x16xf32> to vector<1x16xf32>
    %302 = vector.broadcast %301 : vector<1x16xf32> to vector<16x16xf32>
    %303 = arith.addf %292, %302 : vector<16x16xf32>
    %304 = arith.truncf %303 : vector<16x16xf32> to vector<16x16xbf16>
    %305 = vector.extract_strided_slice %250 {offsets = [0, 0, 0], sizes = [1, 16, 15], strides = [1, 1, 1]} : vector<2x16x15xbf16> to vector<1x16x15xbf16>
    %306 = vector.shape_cast %305 : vector<1x16x15xbf16> to vector<16x15xbf16>
    %cst_126 = arith.constant dense<0.000000e+00> : vector<16x15xf32>
    %307 = tpu.matmul %304, %306, %cst_126 {dimension_numbers = #tpu.dot_dimension_numbers<[1], [0], [0], [1], [0, 0, 1, 1], [], []>} : vector<16x16xbf16>, vector<16x15xbf16>, vector<16x15xf32> -> vector<16x15xf32>
    %308 = vector.extract_strided_slice %300 {offsets = [0, 0], sizes = [8, 16], strides = [1, 1]} : vector<16x16xbf16> to vector<8x16xbf16>
    %309 = vector.extract_strided_slice %294 {offsets = [0, 0], sizes = [8, 16], strides = [1, 1]} : vector<16x16xbf16> to vector<8x16xbf16>
    %cst_127 = arith.constant dense<0.000000e+00> : vector<8x8xf32>
    %310 = tpu.matmul %308, %309, %cst_127 {dimension_numbers = #tpu.dot_dimension_numbers<[1], [1], [0], [0], [0, 0, 1, 0], [], []>} : vector<8x16xbf16>, vector<8x16xbf16>, vector<8x8xf32> -> vector<8x8xf32>
    %311 = vector.extract_strided_slice %307 {offsets = [0, 7], sizes = [1, 8], strides = [1, 1]} : vector<16x15xf32> to vector<1x8xf32>
    %312 = vector.extract_strided_slice %307 {offsets = [1, 6], sizes = [1, 8], strides = [1, 1]} : vector<16x15xf32> to vector<1x8xf32>
    %313 = vector.extract_strided_slice %307 {offsets = [2, 5], sizes = [1, 8], strides = [1, 1]} : vector<16x15xf32> to vector<1x8xf32>
    %314 = vector.extract_strided_slice %307 {offsets = [3, 4], sizes = [1, 8], strides = [1, 1]} : vector<16x15xf32> to vector<1x8xf32>
    %315 = vector.extract_strided_slice %307 {offsets = [4, 3], sizes = [1, 8], strides = [1, 1]} : vector<16x15xf32> to vector<1x8xf32>
    %316 = vector.extract_strided_slice %307 {offsets = [5, 2], sizes = [1, 8], strides = [1, 1]} : vector<16x15xf32> to vector<1x8xf32>
    %317 = vector.extract_strided_slice %307 {offsets = [6, 1], sizes = [1, 8], strides = [1, 1]} : vector<16x15xf32> to vector<1x8xf32>
    %318 = vector.extract_strided_slice %307 {offsets = [7, 0], sizes = [1, 8], strides = [1, 1]} : vector<16x15xf32> to vector<1x8xf32>
    %319 = tpu.concatenate %311, %312, %313, %314, %315, %316, %317, %318 in 0 : vector<1x8xf32>, vector<1x8xf32>, vector<1x8xf32>, vector<1x8xf32>, vector<1x8xf32>, vector<1x8xf32>, vector<1x8xf32>, vector<1x8xf32> -> vector<8x8xf32>
    %320 = arith.addf %310, %319 : vector<8x8xf32>
    %cst_128 = arith.constant dense<0xFF800000> : vector<8xf32>
    %321 = vector.multi_reduction <maximumf>, %320, %cst_128 [1] : vector<8x8xf32> to vector<8xf32>
    %322 = vector.shape_cast %321 : vector<8xf32> to vector<8x1xf32>
    %323 = vector.broadcast %322 : vector<8x1xf32> to vector<8x8xf32>
    %324 = arith.subf %320, %323 : vector<8x8xf32>
    %325 = math.exp %324 : vector<8x8xf32>
    %cst_129 = arith.constant dense<0.000000e+00> : vector<8xf32>
    %326 = vector.multi_reduction <add>, %325, %cst_129 [1] : vector<8x8xf32> to vector<8xf32>
    %327 = vector.shape_cast %326 : vector<8xf32> to vector<8x1xf32>
    %328 = tpu.reciprocal %327 {approx = true} : vector<8x1xf32> -> vector<8x1xf32>
    %329 = vector.broadcast %328 : vector<8x1xf32> to vector<8x8xf32>
    %330 = arith.mulf %325, %329 : vector<8x8xf32>
    %331 = arith.truncf %330 : vector<8x8xf32> to vector<8x8xbf16>
    %332 = vector.extract_strided_slice %296 {offsets = [0, 0], sizes = [8, 12], strides = [1, 1]} : vector<16x12xbf16> to vector<8x12xbf16>
    %cst_130 = arith.constant dense<0.000000e+00> : vector<8x12xf32>
    %333 = tpu.matmul %331, %332, %cst_130 {dimension_numbers = #tpu.dot_dimension_numbers<[1], [0], [0], [1], [0, 0, 1, 1], [], []>} : vector<8x8xbf16>, vector<8x12xbf16>, vector<8x12xf32> -> vector<8x12xf32>
    %334 = vector.extract_strided_slice %300 {offsets = [8, 0], sizes = [8, 16], strides = [1, 1]} : vector<16x16xbf16> to vector<8x16xbf16>
    %335 = vector.extract_strided_slice %294 {offsets = [8, 0], sizes = [8, 16], strides = [1, 1]} : vector<16x16xbf16> to vector<8x16xbf16>
    %cst_131 = arith.constant dense<0.000000e+00> : vector<8x8xf32>
    %336 = tpu.matmul %334, %335, %cst_131 {dimension_numbers = #tpu.dot_dimension_numbers<[1], [1], [0], [0], [0, 0, 1, 0], [], []>} : vector<8x16xbf16>, vector<8x16xbf16>, vector<8x8xf32> -> vector<8x8xf32>
    %337 = vector.extract_strided_slice %307 {offsets = [8, 7], sizes = [1, 8], strides = [1, 1]} : vector<16x15xf32> to vector<1x8xf32>
    %338 = vector.extract_strided_slice %307 {offsets = [9, 6], sizes = [1, 8], strides = [1, 1]} : vector<16x15xf32> to vector<1x8xf32>
    %339 = vector.extract_strided_slice %307 {offsets = [10, 5], sizes = [1, 8], strides = [1, 1]} : vector<16x15xf32> to vector<1x8xf32>
    %340 = vector.extract_strided_slice %307 {offsets = [11, 4], sizes = [1, 8], strides = [1, 1]} : vector<16x15xf32> to vector<1x8xf32>
    %341 = vector.extract_strided_slice %307 {offsets = [12, 3], sizes = [1, 8], strides = [1, 1]} : vector<16x15xf32> to vector<1x8xf32>
    %342 = vector.extract_strided_slice %307 {offsets = [13, 2], sizes = [1, 8], strides = [1, 1]} : vector<16x15xf32> to vector<1x8xf32>
    %343 = vector.extract_strided_slice %307 {offsets = [14, 1], sizes = [1, 8], strides = [1, 1]} : vector<16x15xf32> to vector<1x8xf32>
    %344 = vector.extract_strided_slice %307 {offsets = [15, 0], sizes = [1, 8], strides = [1, 1]} : vector<16x15xf32> to vector<1x8xf32>
    %345 = tpu.concatenate %337, %338, %339, %340, %341, %342, %343, %344 in 0 : vector<1x8xf32>, vector<1x8xf32>, vector<1x8xf32>, vector<1x8xf32>, vector<1x8xf32>, vector<1x8xf32>, vector<1x8xf32>, vector<1x8xf32> -> vector<8x8xf32>
    %346 = arith.addf %336, %345 : vector<8x8xf32>
    %cst_132 = arith.constant dense<0xFF800000> : vector<8xf32>
    %347 = vector.multi_reduction <maximumf>, %346, %cst_132 [1] : vector<8x8xf32> to vector<8xf32>
    %348 = vector.shape_cast %347 : vector<8xf32> to vector<8x1xf32>
    %349 = vector.broadcast %348 : vector<8x1xf32> to vector<8x8xf32>
    %350 = arith.subf %346, %349 : vector<8x8xf32>
    %351 = math.exp %350 : vector<8x8xf32>
    %cst_133 = arith.constant dense<0.000000e+00> : vector<8xf32>
    %352 = vector.multi_reduction <add>, %351, %cst_133 [1] : vector<8x8xf32> to vector<8xf32>
    %353 = vector.shape_cast %352 : vector<8xf32> to vector<8x1xf32>
    %354 = tpu.reciprocal %353 {approx = true} : vector<8x1xf32> -> vector<8x1xf32>
    %355 = vector.broadcast %354 : vector<8x1xf32> to vector<8x8xf32>
    %356 = arith.mulf %351, %355 : vector<8x8xf32>
    %357 = arith.truncf %356 : vector<8x8xf32> to vector<8x8xbf16>
    %358 = vector.extract_strided_slice %296 {offsets = [8, 0], sizes = [8, 12], strides = [1, 1]} : vector<16x12xbf16> to vector<8x12xbf16>
    %cst_134 = arith.constant dense<0.000000e+00> : vector<8x12xf32>
    %359 = tpu.matmul %357, %358, %cst_134 {dimension_numbers = #tpu.dot_dimension_numbers<[1], [0], [0], [1], [0, 0, 1, 1], [], []>} : vector<8x8xbf16>, vector<8x12xbf16>, vector<8x12xf32> -> vector<8x12xf32>
    %360 = vector.extract_strided_slice %289 {offsets = [0, 16], sizes = [16, 16], strides = [1, 1]} : vector<16x32xf32> to vector<16x16xf32>
    %361 = vector.extract_strided_slice %290 {offsets = [0, 16], sizes = [16, 16], strides = [1, 1]} : vector<16x32xf32> to vector<16x16xf32>
    %362 = arith.truncf %361 : vector<16x16xf32> to vector<16x16xbf16>
    %363 = vector.extract_strided_slice %291 {offsets = [0, 12], sizes = [16, 12], strides = [1, 1]} : vector<16x24xf32> to vector<16x12xf32>
    %364 = arith.truncf %363 : vector<16x12xf32> to vector<16x12xbf16>
    %365 = vector.extract_strided_slice %246 {offsets = [1, 0], sizes = [1, 16], strides = [1, 1]} : vector<2x16xf32> to vector<1x16xf32>
    %366 = vector.broadcast %365 : vector<1x16xf32> to vector<16x16xf32>
    %367 = arith.addf %360, %366 : vector<16x16xf32>
    %368 = arith.truncf %367 : vector<16x16xf32> to vector<16x16xbf16>
    %369 = vector.extract_strided_slice %248 {offsets = [1, 0], sizes = [1, 16], strides = [1, 1]} : vector<2x16xf32> to vector<1x16xf32>
    %370 = vector.broadcast %369 : vector<1x16xf32> to vector<16x16xf32>
    %371 = arith.addf %360, %370 : vector<16x16xf32>
    %372 = arith.truncf %371 : vector<16x16xf32> to vector<16x16xbf16>
    %373 = vector.extract_strided_slice %250 {offsets = [1, 0, 0], sizes = [1, 16, 15], strides = [1, 1, 1]} : vector<2x16x15xbf16> to vector<1x16x15xbf16>
    %374 = vector.shape_cast %373 : vector<1x16x15xbf16> to vector<16x15xbf16>
    %cst_135 = arith.constant dense<0.000000e+00> : vector<16x15xf32>
    %375 = tpu.matmul %372, %374, %cst_135 {dimension_numbers = #tpu.dot_dimension_numbers<[1], [0], [0], [1], [0, 0, 1, 1], [], []>} : vector<16x16xbf16>, vector<16x15xbf16>, vector<16x15xf32> -> vector<16x15xf32>
    %376 = vector.extract_strided_slice %368 {offsets = [0, 0], sizes = [8, 16], strides = [1, 1]} : vector<16x16xbf16> to vector<8x16xbf16>
    %377 = vector.extract_strided_slice %362 {offsets = [0, 0], sizes = [8, 16], strides = [1, 1]} : vector<16x16xbf16> to vector<8x16xbf16>
    %cst_136 = arith.constant dense<0.000000e+00> : vector<8x8xf32>
    %378 = tpu.matmul %376, %377, %cst_136 {dimension_numbers = #tpu.dot_dimension_numbers<[1], [1], [0], [0], [0, 0, 1, 0], [], []>} : vector<8x16xbf16>, vector<8x16xbf16>, vector<8x8xf32> -> vector<8x8xf32>
    %379 = vector.extract_strided_slice %375 {offsets = [0, 7], sizes = [1, 8], strides = [1, 1]} : vector<16x15xf32> to vector<1x8xf32>
    %380 = vector.extract_strided_slice %375 {offsets = [1, 6], sizes = [1, 8], strides = [1, 1]} : vector<16x15xf32> to vector<1x8xf32>
    %381 = vector.extract_strided_slice %375 {offsets = [2, 5], sizes = [1, 8], strides = [1, 1]} : vector<16x15xf32> to vector<1x8xf32>
    %382 = vector.extract_strided_slice %375 {offsets = [3, 4], sizes = [1, 8], strides = [1, 1]} : vector<16x15xf32> to vector<1x8xf32>
    %383 = vector.extract_strided_slice %375 {offsets = [4, 3], sizes = [1, 8], strides = [1, 1]} : vector<16x15xf32> to vector<1x8xf32>
    %384 = vector.extract_strided_slice %375 {offsets = [5, 2], sizes = [1, 8], strides = [1, 1]} : vector<16x15xf32> to vector<1x8xf32>
    %385 = vector.extract_strided_slice %375 {offsets = [6, 1], sizes = [1, 8], strides = [1, 1]} : vector<16x15xf32> to vector<1x8xf32>
    %386 = vector.extract_strided_slice %375 {offsets = [7, 0], sizes = [1, 8], strides = [1, 1]} : vector<16x15xf32> to vector<1x8xf32>
    %387 = tpu.concatenate %379, %380, %381, %382, %383, %384, %385, %386 in 0 : vector<1x8xf32>, vector<1x8xf32>, vector<1x8xf32>, vector<1x8xf32>, vector<1x8xf32>, vector<1x8xf32>, vector<1x8xf32>, vector<1x8xf32> -> vector<8x8xf32>
    %388 = arith.addf %378, %387 : vector<8x8xf32>
    %cst_137 = arith.constant dense<0xFF800000> : vector<8xf32>
    %389 = vector.multi_reduction <maximumf>, %388, %cst_137 [1] : vector<8x8xf32> to vector<8xf32>
    %390 = vector.shape_cast %389 : vector<8xf32> to vector<8x1xf32>
    %391 = vector.broadcast %390 : vector<8x1xf32> to vector<8x8xf32>
    %392 = arith.subf %388, %391 : vector<8x8xf32>
    %393 = math.exp %392 : vector<8x8xf32>
    %cst_138 = arith.constant dense<0.000000e+00> : vector<8xf32>
    %394 = vector.multi_reduction <add>, %393, %cst_138 [1] : vector<8x8xf32> to vector<8xf32>
    %395 = vector.shape_cast %394 : vector<8xf32> to vector<8x1xf32>
    %396 = tpu.reciprocal %395 {approx = true} : vector<8x1xf32> -> vector<8x1xf32>
    %397 = vector.broadcast %396 : vector<8x1xf32> to vector<8x8xf32>
    %398 = arith.mulf %393, %397 : vector<8x8xf32>
    %399 = arith.truncf %398 : vector<8x8xf32> to vector<8x8xbf16>
    %400 = vector.extract_strided_slice %364 {offsets = [0, 0], sizes = [8, 12], strides = [1, 1]} : vector<16x12xbf16> to vector<8x12xbf16>
    %cst_139 = arith.constant dense<0.000000e+00> : vector<8x12xf32>
    %401 = tpu.matmul %399, %400, %cst_139 {dimension_numbers = #tpu.dot_dimension_numbers<[1], [0], [0], [1], [0, 0, 1, 1], [], []>} : vector<8x8xbf16>, vector<8x12xbf16>, vector<8x12xf32> -> vector<8x12xf32>
    %402 = vector.extract_strided_slice %368 {offsets = [8, 0], sizes = [8, 16], strides = [1, 1]} : vector<16x16xbf16> to vector<8x16xbf16>
    %403 = vector.extract_strided_slice %362 {offsets = [8, 0], sizes = [8, 16], strides = [1, 1]} : vector<16x16xbf16> to vector<8x16xbf16>
    %cst_140 = arith.constant dense<0.000000e+00> : vector<8x8xf32>
    %404 = tpu.matmul %402, %403, %cst_140 {dimension_numbers = #tpu.dot_dimension_numbers<[1], [1], [0], [0], [0, 0, 1, 0], [], []>} : vector<8x16xbf16>, vector<8x16xbf16>, vector<8x8xf32> -> vector<8x8xf32>
    %405 = vector.extract_strided_slice %375 {offsets = [8, 7], sizes = [1, 8], strides = [1, 1]} : vector<16x15xf32> to vector<1x8xf32>
    %406 = vector.extract_strided_slice %375 {offsets = [9, 6], sizes = [1, 8], strides = [1, 1]} : vector<16x15xf32> to vector<1x8xf32>
    %407 = vector.extract_strided_slice %375 {offsets = [10, 5], sizes = [1, 8], strides = [1, 1]} : vector<16x15xf32> to vector<1x8xf32>
    %408 = vector.extract_strided_slice %375 {offsets = [11, 4], sizes = [1, 8], strides = [1, 1]} : vector<16x15xf32> to vector<1x8xf32>
    %409 = vector.extract_strided_slice %375 {offsets = [12, 3], sizes = [1, 8], strides = [1, 1]} : vector<16x15xf32> to vector<1x8xf32>
    %410 = vector.extract_strided_slice %375 {offsets = [13, 2], sizes = [1, 8], strides = [1, 1]} : vector<16x15xf32> to vector<1x8xf32>
    %411 = vector.extract_strided_slice %375 {offsets = [14, 1], sizes = [1, 8], strides = [1, 1]} : vector<16x15xf32> to vector<1x8xf32>
    %412 = vector.extract_strided_slice %375 {offsets = [15, 0], sizes = [1, 8], strides = [1, 1]} : vector<16x15xf32> to vector<1x8xf32>
    %413 = tpu.concatenate %405, %406, %407, %408, %409, %410, %411, %412 in 0 : vector<1x8xf32>, vector<1x8xf32>, vector<1x8xf32>, vector<1x8xf32>, vector<1x8xf32>, vector<1x8xf32>, vector<1x8xf32>, vector<1x8xf32> -> vector<8x8xf32>
    %414 = arith.addf %404, %413 : vector<8x8xf32>
    %cst_141 = arith.constant dense<0xFF800000> : vector<8xf32>
    %415 = vector.multi_reduction <maximumf>, %414, %cst_141 [1] : vector<8x8xf32> to vector<8xf32>
    %416 = vector.shape_cast %415 : vector<8xf32> to vector<8x1xf32>
    %417 = vector.broadcast %416 : vector<8x1xf32> to vector<8x8xf32>
    %418 = arith.subf %414, %417 : vector<8x8xf32>
    %419 = math.exp %418 : vector<8x8xf32>
    %cst_142 = arith.constant dense<0.000000e+00> : vector<8xf32>
    %420 = vector.multi_reduction <add>, %419, %cst_142 [1] : vector<8x8xf32> to vector<8xf32>
    %421 = vector.shape_cast %420 : vector<8xf32> to vector<8x1xf32>
    %422 = tpu.reciprocal %421 {approx = true} : vector<8x1xf32> -> vector<8x1xf32>
    %423 = vector.broadcast %422 : vector<8x1xf32> to vector<8x8xf32>
    %424 = arith.mulf %419, %423 : vector<8x8xf32>
    %425 = arith.truncf %424 : vector<8x8xf32> to vector<8x8xbf16>
    %426 = vector.extract_strided_slice %364 {offsets = [8, 0], sizes = [8, 12], strides = [1, 1]} : vector<16x12xbf16> to vector<8x12xbf16>
    %cst_143 = arith.constant dense<0.000000e+00> : vector<8x12xf32>
    %427 = tpu.matmul %425, %426, %cst_143 {dimension_numbers = #tpu.dot_dimension_numbers<[1], [0], [0], [1], [0, 0, 1, 1], [], []>} : vector<8x8xbf16>, vector<8x12xbf16>, vector<8x12xf32> -> vector<8x12xf32>
    %428 = tpu.concatenate %333, %401 in 1 : vector<8x12xf32>, vector<8x12xf32> -> vector<8x24xf32>
    %429 = tpu.concatenate %359, %427 in 1 : vector<8x12xf32>, vector<8x12xf32> -> vector<8x24xf32>
    %430 = tpu.concatenate %428, %429 in 0 : vector<8x24xf32>, vector<8x24xf32> -> vector<16x24xf32>
    %431 = arith.truncf %430 : vector<16x24xf32> to vector<16x24xbf16>
    %cst_144 = arith.constant dense<0.000000e+00> : vector<16x24xf32>
    %432 = tpu.matmul %431, %242, %cst_144 {dimension_numbers = #tpu.dot_dimension_numbers<[1], [0], [0], [1], [0, 0, 1, 1], [], []>} : vector<16x24xbf16>, vector<24x24xbf16>, vector<16x24xf32> -> vector<16x24xf32>
    %433 = vector.broadcast %244 : vector<1x24xf32> to vector<16x24xf32>
    %434 = arith.addf %432, %433 : vector<16x24xf32>
    %435 = arith.addf %234, %434 : vector<16x24xf32>
    %cst_145 = arith.constant dense<0.000000e+00> : vector<16xf32>
    %436 = vector.multi_reduction <add>, %435, %cst_145 [1] : vector<16x24xf32> to vector<16xf32>
    %437 = vector.shape_cast %436 : vector<16xf32> to vector<16x1xf32>
    %cst_146 = arith.constant 2.400000e+01 : f32
    %438 = vector.broadcast %cst_146 : f32 to vector<16x1xf32>
    %439 = arith.divf %437, %438 : vector<16x1xf32>
    %440 = vector.broadcast %439 : vector<16x1xf32> to vector<16x24xf32>
    %441 = arith.subf %435, %440 : vector<16x24xf32>
    %442 = arith.mulf %441, %441 : vector<16x24xf32>
    %cst_147 = arith.constant dense<0.000000e+00> : vector<16xf32>
    %443 = vector.multi_reduction <add>, %442, %cst_147 [1] : vector<16x24xf32> to vector<16xf32>
    %444 = vector.shape_cast %443 : vector<16xf32> to vector<16x1xf32>
    %cst_148 = arith.constant 2.400000e+01 : f32
    %445 = vector.broadcast %cst_148 : f32 to vector<16x1xf32>
    %446 = arith.divf %444, %445 : vector<16x1xf32>
    %447 = vector.broadcast %439 : vector<16x1xf32> to vector<16x24xf32>
    %448 = arith.subf %435, %447 : vector<16x24xf32>
    %cst_149 = arith.constant 9.99999974E-6 : f32
    %449 = vector.broadcast %cst_149 : f32 to vector<16x1xf32>
    %450 = arith.addf %446, %449 : vector<16x1xf32>
    %451 = math.rsqrt %450 : vector<16x1xf32>
    %452 = vector.broadcast %451 : vector<16x1xf32> to vector<16x24xf32>
    %453 = arith.mulf %448, %452 : vector<16x24xf32>
    %454 = vector.broadcast %252 : vector<1x24xf32> to vector<16x24xf32>
    %455 = arith.mulf %453, %454 : vector<16x24xf32>
    %456 = vector.broadcast %254 : vector<1x24xf32> to vector<16x24xf32>
    %457 = arith.addf %455, %456 : vector<16x24xf32>
    %458 = arith.truncf %457 : vector<16x24xf32> to vector<16x24xbf16>
    %cst_150 = arith.constant dense<0.000000e+00> : vector<16x48xf32>
    %459 = tpu.matmul %458, %256, %cst_150 {dimension_numbers = #tpu.dot_dimension_numbers<[1], [0], [0], [1], [0, 0, 1, 1], [], []>} : vector<16x24xbf16>, vector<24x48xbf16>, vector<16x48xf32> -> vector<16x48xf32>
    %460 = vector.broadcast %258 : vector<1x48xf32> to vector<16x48xf32>
    %461 = arith.addf %459, %460 : vector<16x48xf32>
    %cst_151 = arith.constant 0.000000e+00 : f32
    %462 = vector.broadcast %cst_151 : f32 to vector<16x48xf32>
    %463 = arith.maximumf %461, %462 : vector<16x48xf32>
    %464 = arith.truncf %463 : vector<16x48xf32> to vector<16x48xbf16>
    %cst_152 = arith.constant dense<0.000000e+00> : vector<16x24xf32>
    %465 = tpu.matmul %464, %260, %cst_152 {dimension_numbers = #tpu.dot_dimension_numbers<[1], [0], [0], [1], [0, 0, 1, 1], [], []>} : vector<16x48xbf16>, vector<48x24xbf16>, vector<16x24xf32> -> vector<16x24xf32>
    %466 = vector.broadcast %262 : vector<1x24xf32> to vector<16x24xf32>
    %467 = arith.addf %465, %466 : vector<16x24xf32>
    %468 = arith.addf %435, %467 : vector<16x24xf32>
    %c0_153 = arith.constant 0 : index
    %c0_154 = arith.constant 0 : index
    %469 = vector.load %arg15[%c0_153, %c0_154] : memref<16x24xf32, #tpu.memory_space<vmem>>, vector<16x24xf32>
    tpu.vector_store %arg15[%c0_153, %c0_154], %468 {strides = array<i32>} : memref<16x24xf32, #tpu.memory_space<vmem>>, vector<16x24xf32>,
    return
  }
}

</mosaic_0001>

<llo_original>
// kernel: enformer_transformer_tower.1
$region0: #{enformer_transformer_tower.1}
  #allocation0 [shape = 'u32[]', space=smem, size = 0x4, offset = 0x4, fixed_abs, tag = 'smem constant byte address 0x4 - core index']
  #allocation1 [shape = 'u32[144,128]{1,0:T(1,128)}', space=vmem, size = 0x12000, scoped, tag = 'internal scratch']
  %s0 = inlined_call_operand.vmem [shape: f32[16,24], index: 0, kind: input, shape index: {}]
  %s1 = inlined_call_operand.vmem [shape: f32[2,1,24], index: 1, kind: input, shape index: {}]
  %s2 = inlined_call_operand.vmem [shape: f32[2,1,24], index: 2, kind: input, shape index: {}]
  %s3 = inlined_call_operand.vmem [shape: bf16[2,24,88], index: 3, kind: input, shape index: {}]
  %s4 = inlined_call_operand.vmem [shape: bf16[2,24,24], index: 4, kind: input, shape index: {}]
  %s5 = inlined_call_operand.vmem [shape: f32[2,1,24], index: 5, kind: input, shape index: {}]
  %s6 = inlined_call_operand.vmem [shape: f32[2,2,16], index: 6, kind: input, shape index: {}]
  %s7 = inlined_call_operand.vmem [shape: f32[2,2,16], index: 7, kind: input, shape index: {}]
  %s8 = inlined_call_operand.vmem [shape: bf16[2,2,16,15], index: 8, kind: input, shape index: {}]
  %s9 = inlined_call_operand.vmem [shape: f32[2,1,24], index: 9, kind: input, shape index: {}]
  %s10 = inlined_call_operand.vmem [shape: f32[2,1,24], index: 10, kind: input, shape index: {}]
  %s11 = inlined_call_operand.vmem [shape: bf16[2,24,48], index: 11, kind: input, shape index: {}]
  %s12 = inlined_call_operand.vmem [shape: f32[2,1,48], index: 12, kind: input, shape index: {}]
  %s13 = inlined_call_operand.vmem [shape: bf16[2,48,24], index: 13, kind: input, shape index: {}]
  %s14 = inlined_call_operand.vmem [shape: f32[2,1,24], index: 14, kind: input, shape index: {}]
  %s15 = inlined_call_operand.hbm [shape: f32[16,24], index: 15, kind: output, shape index: {}]
  %s16 = sld [smem:[#allocation0]]
  $region70: #{enformer_transformer_tower.1} parent=0
    _
  %s18 = ssub.s32 1, %s16
  %s19 = scalar_select 0, %s18, %s16
  $region1: #{enformer_transformer_tower.1} parent=0
    #allocation2 [shape = 'u8[8192]{0}', space=vmem, size = 0x2000, scoped, tag = 'output window, operand 0, single buffered']
    #allocation3 [shape = 's32[1]{0}', space=sflag, size = 0x4, scoped, tag = 'scoped memory for enformer_transformer_tower.1']
    %20 = vsyncpa [#allocation3], 0
    // Predicated region
    $region2: #{enformer_transformer_tower.1} parent=1 // pred_check
      _
    $region3: #{enformer_transformer_tower.1} parent=1 // pred_check_branch
      %22 = sbr.rel (0) target = $region5
    $region4: #{enformer_transformer_tower.1} parent=1 // pred_region
      _
    $region5: #{enformer_transformer_tower.1} parent=1 // pred_fallthru
      _
    // Predicated region
    $region6: #{enformer_transformer_tower.1} parent=1 // pred_check
      _
    $region7: #{enformer_transformer_tower.1} parent=1 // pred_check_branch
      %24 = sbr.rel (0) target = $region9
    $region8: #{enformer_transformer_tower.1} parent=1 // pred_region
      _
    $region9: #{enformer_transformer_tower.1} parent=1 // pred_fallthru
      _
    // Predicated region
    $region10: #{enformer_transformer_tower.1} parent=1 // pred_check
      _
    $region11: #{enformer_transformer_tower.1} parent=1 // pred_check_branch
      %26 = sbr.rel (0) target = $region13
    $region12: #{enformer_transformer_tower.1} parent=1 // pred_region
      _
    $region13: #{enformer_transformer_tower.1} parent=1 // pred_fallthru
      _
    // Predicated region
    $region14: #{enformer_transformer_tower.1} parent=1 // pred_check
      _
    $region15: #{enformer_transformer_tower.1} parent=1 // pred_check_branch
      %28 = sbr.rel (0) target = $region17
    $region16: #{enformer_transformer_tower.1} parent=1 // pred_region
      _
    $region17: #{enformer_transformer_tower.1} parent=1 // pred_fallthru
      _
    // Predicated region
    $region18: #{enformer_transformer_tower.1} parent=1 // pred_check
      _
    $region19: #{enformer_transformer_tower.1} parent=1 // pred_check_branch
      %30 = sbr.rel (0) target = $region21
    $region20: #{enformer_transformer_tower.1} parent=1 // pred_region
      _
    $region21: #{enformer_transformer_tower.1} parent=1 // pred_fallthru
      _
    // Predicated region
    $region22: #{enformer_transformer_tower.1} parent=1 // pred_check
      _
    $region23: #{enformer_transformer_tower.1} parent=1 // pred_check_branch
      %32 = sbr.rel (0) target = $region25
    $region24: #{enformer_transformer_tower.1} parent=1 // pred_region
      _
    $region25: #{enformer_transformer_tower.1} parent=1 // pred_fallthru
      _
    // Predicated region
    $region26: #{enformer_transformer_tower.1} parent=1 // pred_check
      _
    $region27: #{enformer_transformer_tower.1} parent=1 // pred_check_branch
      %34 = sbr.rel (0) target = $region29
    $region28: #{enformer_transformer_tower.1} parent=1 // pred_region
      _
    $region29: #{enformer_transformer_tower.1} parent=1 // pred_fallthru
      _
    // Predicated region
    $region30: #{enformer_transformer_tower.1} parent=1 // pred_check
      _
    $region31: #{enformer_transformer_tower.1} parent=1 // pred_check_branch
      %36 = sbr.rel (0) target = $region33
    $region32: #{enformer_transformer_tower.1} parent=1 // pred_region
      _
    $region33: #{enformer_transformer_tower.1} parent=1 // pred_fallthru
      _
    // Predicated region
    $region34: #{enformer_transformer_tower.1} parent=1 // pred_check
      _
    $region35: #{enformer_transformer_tower.1} parent=1 // pred_check_branch
      %38 = sbr.rel (0) target = $region37
    $region36: #{enformer_transformer_tower.1} parent=1 // pred_region
      _
    $region37: #{enformer_transformer_tower.1} parent=1 // pred_fallthru
      _
    // Predicated region
    $region38: #{enformer_transformer_tower.1} parent=1 // pred_check
      _
    $region39: #{enformer_transformer_tower.1} parent=1 // pred_check_branch
      %40 = sbr.rel (0) target = $region41
    $region40: #{enformer_transformer_tower.1} parent=1 // pred_region
      _
    $region41: #{enformer_transformer_tower.1} parent=1 // pred_fallthru
      _
    // Predicated region
    $region42: #{enformer_transformer_tower.1} parent=1 // pred_check
      _
    $region43: #{enformer_transformer_tower.1} parent=1 // pred_check_branch
      %42 = sbr.rel (0) target = $region45
    $region44: #{enformer_transformer_tower.1} parent=1 // pred_region
      _
    $region45: #{enformer_transformer_tower.1} parent=1 // pred_fallthru
      _
    // Predicated region
    $region46: #{enformer_transformer_tower.1} parent=1 // pred_check
      _
    $region47: #{enformer_transformer_tower.1} parent=1 // pred_check_branch
      %44 = sbr.rel (0) target = $region49
    $region48: #{enformer_transformer_tower.1} parent=1 // pred_region
      _
    $region49: #{enformer_transformer_tower.1} parent=1 // pred_fallthru
      _
    // Predicated region
    $region50: #{enformer_transformer_tower.1} parent=1 // pred_check
      _
    $region51: #{enformer_transformer_tower.1} parent=1 // pred_check_branch
      %46 = sbr.rel (0) target = $region53
    $region52: #{enformer_transformer_tower.1} parent=1 // pred_region
      _
    $region53: #{enformer_transformer_tower.1} parent=1 // pred_fallthru
      _
    // Predicated region
    $region54: #{enformer_transformer_tower.1} parent=1 // pred_check
      _
    $region55: #{enformer_transformer_tower.1} parent=1 // pred_check_branch
      %48 = sbr.rel (0) target = $region57
    $region56: #{enformer_transformer_tower.1} parent=1 // pred_region
      _
    $region57: #{enformer_transformer_tower.1} parent=1 // pred_fallthru
      _
    // Predicated region
    $region58: #{enformer_transformer_tower.1} parent=1 // pred_check
      _
    $region59: #{enformer_transformer_tower.1} parent=1 // pred_check_branch
      %50 = sbr.rel (0) target = $region61
    $region60: #{enformer_transformer_tower.1} parent=1 // pred_region
      _
    $region61: #{enformer_transformer_tower.1} parent=1 // pred_fallthru
      _
    %v52 = vld [vmem:[%s0] sm:$0xff]
    %v53 = vld [vmem:[%s0 + $0x8] sm:$0xff]
    %v54 = vld [vmem:[%s1] sm:$0x1]
    %v55 = vld [vmem:[%s2] sm:$0x1]
    %v56 = vld [vmem:[%s3] sm:$0xf]
    %v57 = vld [vmem:[%s3 + $0x4] sm:$0xf]
    %v58 = vld [vmem:[%s3 + $0x8] sm:$0xf]
    %v59 = vld [vmem:[%s4] sm:$0xf]
    %v60 = vld [vmem:[%s4 + $0x4] sm:$0xf]
    %v61 = vld [vmem:[%s4 + $0x8] sm:$0xf]
    %v62 = vld [vmem:[%s5] sm:$0x1]
    %v63 = vld [vmem:[%s6] sm:$0x3]
    %v64 = vld [vmem:[%s7] sm:$0x3]
    %v65 = vld [vmem:[%s8] sm:$0xf]
    %v66 = vld [vmem:[%s8 + $0x4] sm:$0xf]
    %v67 = vld [vmem:[%s8 + $0x8] sm:$0xf]
    %v68 = vld [vmem:[%s8 + $0xc] sm:$0xf]
    %v69 = vld [vmem:[%s9] sm:$0x1]
    %v70 = vld [vmem:[%s10] sm:$0x1]
    %v71 = vld [vmem:[%s11] sm:$0xf]
    %v72 = vld [vmem:[%s11 + $0x4] sm:$0xf]
    %v73 = vld [vmem:[%s11 + $0x8] sm:$0xf]
    %v74 = vld [vmem:[%s12] sm:$0x1]
    %v75 = vld [vmem:[%s13] sm:$0xf]
    %v76 = vld [vmem:[%s13 + $0x4] sm:$0xf]
    %v77 = vld [vmem:[%s13 + $0x8] sm:$0xf]
    %v78 = vld [vmem:[%s13 + $0xc] sm:$0xf]
    %v79 = vld [vmem:[%s13 + $0x10] sm:$0xf]
    %v80 = vld [vmem:[%s13 + $0x14] sm:$0xf]
    %v81 = vld [vmem:[%s14] sm:$0x1]
    %vm82 = vcmask 195584
    %v83 = vsel %vm82, %v52, 0.0
    %84 = vadd.xlane.f32.xlu0 %v83
    %v85 = vpop.xlane.xlu0 %84
    %v86 = vsel %vm82, %v53, 0.0
    %87 = vadd.xlane.f32.xlu0 %v86
    %v88 = vpop.xlane.xlu0 %87
    %v89 = vrcp.pop 24.0
    %v90 = vmul.f32 %v85, %v89
    %v91 = vmul.f32 %v88, %v89
    %v92 = vsub.f32 %v52, %v90
    %v93 = vsub.f32 %v53, %v91
    %v94 = vmul.f32 %v92, %v92
    %v95 = vmul.f32 %v93, %v93
    %v96 = vsel %vm82, %v94, 0.0
    %97 = vadd.xlane.f32.xlu0 %v96
    %v98 = vpop.xlane.xlu0 %97
    %v99 = vsel %vm82, %v95, 0.0
    %100 = vadd.xlane.f32.xlu0 %v99
    %v101 = vpop.xlane.xlu0 %100
    %v102 = vmul.f32 %v98, %v89
    %v103 = vmul.f32 %v101, %v89
    %v104 = vadd.f32 %v102, 1e-05
    %v105 = vadd.f32 %v103, 1e-05
    %v106 = vrsqrt.pop %v104
    %v107 = vrsqrt.pop %v105
    %v108 = vmul.f32 %v92, %v106
    %v109 = vmul.f32 %v93, %v107
    %v111 = vlaneseq
    %v112 = vshrl.u32 %v111, 7
    %v113 = vsub.s32 0, %v112
    %v114 = vrot.slane %v54, %v113
    %v116 = vmul.f32 %v108, %v114
    %v117 = vmul.f32 %v109, %v114
    %v119 = vlaneseq
    %v120 = vshrl.u32 %v119, 7
    %v121 = vsub.s32 0, %v120
    %v122 = vrot.slane %v55, %v121
    %v124 = vadd.f32 %v116, %v122
    %v125 = vadd.f32 %v117, %v122
    %v126 = vpack.c.bf16 %v125, %v124
    %v130 = vunpack.c.l.b16 %v56
    %v131 = vunpack.c.l.b16 %v57
    %v132 = vunpack.c.l.b16 %v58
    %v133 = vpack.c.b16 %v131, %v130
    %v134 = vpack.c.b16 %v132, %v132
    %v137 = vsel %vm82, %v126, 0
    %vm139 = vcmask 1043456
    %v141 = vsel %vm139, %v134, 0
    %143 = vmatprep.subr.bf16.mxu0 0
    %144 = vmatpush1.bf16.msra.mxu0 %v133
    %145 = vmatprep.subr.bf16.mxu0 0
    %146 = vmatpush1.bf16.msra.mxu0 %v141
    %147 = vmatprep.subr.bf16.mxu0 0
    %148 = vmatpush1.bf16.msra.mxu0 0
    %149 = vmatprep.subr.bf16.mxu0 0
    %150 = vmatpush1.bf16.msra.mxu0 0
    %151 = vmatprep.subr.bf16.mxu0 0
    %152 = vmatpush1.bf16.msra.mxu0 0
    %153 = vmatprep.subr.bf16.mxu0 0
    %154 = vmatpush1.bf16.msra.mxu0 0
    %155 = vmatprep.subr.bf16.mxu0 0
    %156 = vmatpush1.bf16.msra.mxu0 0
    %157 = vmatprep.subr.bf16.mxu0 0
    %158 = vmatpush1.bf16.msra.mxu0 0
    %159 = vmatprep.subr.bf16.mxu0 0
    %160 = vmatpush1.bf16.msra.mxu0 0
    %161 = vmatprep.subr.bf16.mxu0 0
    %162 = vmatpush1.bf16.msra.mxu0 0
    %163 = vmatprep.subr.bf16.mxu0 0
    %164 = vmatpush1.bf16.msra.mxu0 0
    %165 = vmatprep.subr.bf16.mxu0 0
    %166 = vmatpush1.bf16.msra.mxu0 0
    %167 = vmatprep.subr.bf16.mxu0 0
    %168 = vmatpush1.bf16.msra.mxu0 0
    %169 = vmatprep.subr.bf16.mxu0 0
    %170 = vmatpush1.bf16.msra.mxu0 0
    %171 = vmatprep.subr.bf16.mxu0 0
    %172 = vmatpush1.bf16.msra.mxu0 0
    %173 = vmatprep.subr.bf16.mxu0 0
    %174 = vmatpush1.bf16.msra.mxu0 0
    %175 = vmatprep.mubr.bf16.mxu0 0
    %176 = vmatmul.mubr.bf16.gmra.mrb[0].mxu0 %v137
    %v177 = vpop.f32.mrb[0].mxu0
    %v178 = vadd.f32 0.0, %v177
    %v179 = vpop.f32.mrb[0].mxu0
    %v180 = vpop.f32.mrb[0].mxu0
    %v181 = vadd.f32 0.0, %v180
    %v182 = vpop.f32.mrb[0].mxu0
    %183 = vdwg.mxu0
    %v184 = vmul.f32 %v178, 0.25
    %v185 = vmul.f32 %v181, 0.25
    %v186 = vpack.c.bf16 %v181, %v178
    %v187 = vlaneseq
    %v188 = vshrl.u32 %v187, 7
    %v189 = vsub.s32 0, %v188
    %v190 = vrot.slane %v63, %v189
    %v191 = vadd.f32 %v184, %v190
    %v192 = vadd.f32 %v185, %v190
    %v193 = vpack.c.bf16 %v192, %v191
    %v194 = vlaneseq
    %v195 = vshrl.u32 %v194, 7
    %v196 = vsub.s32 0, %v195
    %v197 = vrot.slane %v64, %v196
    %v198 = vadd.f32 %v184, %v197
    %v199 = vadd.f32 %v185, %v197
    %v200 = vpack.c.bf16 %v199, %v198
    %v203 = vunpack.c.l.b16 %v65
    %v204 = vunpack.c.l.b16 %v66
    %v205 = vpack.c.b16 %v204, %v203
    %vm207 = vcmask 130048
    %v209 = vsel %vm207, %v200, 0
    %211 = vmatprep.subr.bf16.mxu0 0
    %212 = vmatpush1.bf16.msra.mxu0 %v205
    %213 = vmatprep.subr.bf16.mxu0 0
    %214 = vmatpush1.bf16.msra.mxu0 0
    %215 = vmatprep.subr.bf16.mxu0 0
    %216 = vmatpush1.bf16.msra.mxu0 0
    %217 = vmatprep.subr.bf16.mxu0 0
    %218 = vmatpush1.bf16.msra.mxu0 0
    %219 = vmatprep.subr.bf16.mxu0 0
    %220 = vmatpush1.bf16.msra.mxu0 0
    %221 = vmatprep.subr.bf16.mxu0 0
    %222 = vmatpush1.bf16.msra.mxu0 0
    %223 = vmatprep.subr.bf16.mxu0 0
    %224 = vmatpush1.bf16.msra.mxu0 0
    %225 = vmatprep.subr.bf16.mxu0 0
    %226 = vmatpush1.bf16.msra.mxu0 0
    %227 = vmatprep.subr.bf16.mxu0 0
    %228 = vmatpush1.bf16.msra.mxu0 0
    %229 = vmatprep.subr.bf16.mxu0 0
    %230 = vmatpush1.bf16.msra.mxu0 0
    %231 = vmatprep.subr.bf16.mxu0 0
    %232 = vmatpush1.bf16.msra.mxu0 0
    %233 = vmatprep.subr.bf16.mxu0 0
    %234 = vmatpush1.bf16.msra.mxu0 0
    %235 = vmatprep.subr.bf16.mxu0 0
    %236 = vmatpush1.bf16.msra.mxu0 0
    %237 = vmatprep.subr.bf16.mxu0 0
    %238 = vmatpush1.bf16.msra.mxu0 0
    %239 = vmatprep.subr.bf16.mxu0 0
    %240 = vmatpush1.bf16.msra.mxu0 0
    %241 = vmatprep.subr.bf16.mxu0 0
    %242 = vmatpush1.bf16.msra.mxu0 0
    %243 = vmatprep.mubr.bf16.mxu0 0
    %244 = vmatmul.mubr.bf16.gmra.mrb[0].mxu0 %v209
    %v245 = vpop.f32.mrb[0].mxu0
    %v246 = vadd.f32 0.0, %v245
    %v247 = vpop.f32.mrb[0].mxu0
    %v248 = vpop.f32.mrb[0].mxu0
    %v249 = vadd.f32 0.0, %v248
    %v250 = vpop.f32.mrb[0].mxu0
    %251 = vdwg.mxu0
    %253 = vrot.lane.b32.xlu0 %v246, 1
    %v254 = vpop.permute.xlu0 %253
    %256 = vrot.lane.b32.xlu0 %v246, 2
    %v257 = vpop.permute.xlu0 %256
    %259 = vrot.lane.b32.xlu0 %v246, 3
    %v260 = vpop.permute.xlu0 %259
    %262 = vrot.lane.b32.xlu0 %v246, 4
    %v263 = vpop.permute.xlu0 %262
    %265 = vrot.lane.b32.xlu0 %v246, 5
    %v266 = vpop.permute.xlu0 %265
    %268 = vrot.lane.b32.xlu0 %v246, 6
    %v269 = vpop.permute.xlu0 %268
    %271 = vrot.lane.b32.xlu0 %v246, 7
    %v272 = vpop.permute.xlu0 %271
    %vm274 = vcmask 1040384
    %v275 = vsel %vm274, %v246, %v254
    %vm276 = vcmask 1041408
    %v277 = vsel %vm276, %v275, %v257
    %vm278 = vcmask 1042432
    %v279 = vsel %vm278, %v277, %v260
    %v280 = vsel %vm139, %v279, %v263
    %vm281 = vcmask 1044480
    %v282 = vsel %vm281, %v280, %v266
    %vm283 = vcmask 1045504
    %v284 = vsel %vm283, %v282, %v269
    %vm285 = vcmask 1046528
    %v286 = vsel %vm285, %v284, %v272
    %288 = vrot.lane.b32.xlu0 %v186, 96
    %v289 = vpop.permute.xlu0 %288
    %291 = vrot.lane.b32.xlu0 %v286, 121
    %v292 = vpop.permute.xlu0 %291
    %v295 = vsel %vm207, %v193, 0
    %v298 = vsel %vm207, %v289, 0
    %300 = vmatprep.subr.bf16.mxu0 0
    %301 = vmatpush1.bf16.xpose.msra.mxu0 %v298
    %302 = vmatprep.subr.bf16.mxu0 0
    %303 = vmatpush1.bf16.xpose.msra.mxu0 0
    %304 = vmatprep.subr.bf16.mxu0 0
    %305 = vmatpush1.bf16.xpose.msra.mxu0 0
    %306 = vmatprep.subr.bf16.mxu0 0
    %307 = vmatpush1.bf16.xpose.msra.mxu0 0
    %308 = vmatprep.subr.bf16.mxu0 0
    %309 = vmatpush1.bf16.xpose.msra.mxu0 0
    %310 = vmatprep.subr.bf16.mxu0 0
    %311 = vmatpush1.bf16.xpose.msra.mxu0 0
    %312 = vmatprep.subr.bf16.mxu0 0
    %313 = vmatpush1.bf16.xpose.msra.mxu0 0
    %314 = vmatprep.subr.bf16.mxu0 0
    %315 = vmatpush1.bf16.xpose.msra.mxu0 0
    %316 = vmatprep.subr.bf16.mxu0 0
    %317 = vmatpush1.bf16.xpose.msra.mxu0 0
    %318 = vmatprep.subr.bf16.mxu0 0
    %319 = vmatpush1.bf16.xpose.msra.mxu0 0
    %320 = vmatprep.subr.bf16.mxu0 0
    %321 = vmatpush1.bf16.xpose.msra.mxu0 0
    %322 = vmatprep.subr.bf16.mxu0 0
    %323 = vmatpush1.bf16.xpose.msra.mxu0 0
    %324 = vmatprep.subr.bf16.mxu0 0
    %325 = vmatpush1.bf16.xpose.msra.mxu0 0
    %326 = vmatprep.subr.bf16.mxu0 0
    %327 = vmatpush1.bf16.xpose.msra.mxu0 0
    %328 = vmatprep.subr.bf16.mxu0 0
    %329 = vmatpush1.bf16.xpose.msra.mxu0 0
    %330 = vmatprep.subr.bf16.mxu0 0
    %331 = vmatpush1.bf16.xpose.msra.mxu0 0
    %332 = vmatprep.mubr.bf16.mxu0 0
    %333 = vmatmul.mubr.bf16.gmra.mrb[0].mxu0 %v295
    %v334 = vpop.f32.mrb[0].mxu0
    %v335 = vadd.f32 %v292, %v334
    %v336 = vpop.f32.mrb[0].mxu0
    %v337 = vpop.f32.mrb[0].mxu0
    %v338 = vpop.f32.mrb[0].mxu0
    %339 = vdwg.mxu0
    %vm340 = vcmask 64512
    %v341 = vsel %vm340, %v335, -inf
    %342 = vmax.xlane.f32.xlu0 %v341
    %v343 = vpop.xlane.xlu0 %342
    %v344 = vsub.f32 %v335, %v343
    %v345 = vmul.f32 %v344, 1.442695
    %v346 = vpow.pop %v345
    %v347 = vsel %vm340, %v346, 0.0
    %348 = vadd.xlane.f32.xlu0 %v347
    %v349 = vpop.xlane.xlu0 %348
    %v350 = vrcp.pop %v349
    %v351 = vmul.f32 %v346, %v350
    %v352 = vpack.c.bf16 %v351, %v351
    %353 = vrot.lane.b32.xlu0 %v186, 64
    %v354 = vpop.permute.xlu0 %353
    %v356 = vsel %vm340, %v352, 0
    %v359 = vsel %vm139, %v354, 0
    %361 = vmatprep.subr.bf16.mxu0 0
    %362 = vmatpush1.bf16.msra.mxu0 %v359
    %363 = vmatprep.subr.bf16.mxu0 0
    %364 = vmatpush1.bf16.msra.mxu0 0
    %365 = vmatprep.subr.bf16.mxu0 0
    %366 = vmatpush1.bf16.msra.mxu0 0
    %367 = vmatprep.subr.bf16.mxu0 0
    %368 = vmatpush1.bf16.msra.mxu0 0
    %369 = vmatprep.subr.bf16.mxu0 0
    %370 = vmatpush1.bf16.msra.mxu0 0
    %371 = vmatprep.subr.bf16.mxu0 0
    %372 = vmatpush1.bf16.msra.mxu0 0
    %373 = vmatprep.subr.bf16.mxu0 0
    %374 = vmatpush1.bf16.msra.mxu0 0
    %375 = vmatprep.subr.bf16.mxu0 0
    %376 = vmatpush1.bf16.msra.mxu0 0
    %377 = vmatprep.subr.bf16.mxu0 0
    %378 = vmatpush1.bf16.msra.mxu0 0
    %379 = vmatprep.subr.bf16.mxu0 0
    %380 = vmatpush1.bf16.msra.mxu0 0
    %381 = vmatprep.subr.bf16.mxu0 0
    %382 = vmatpush1.bf16.msra.mxu0 0
    %383 = vmatprep.subr.bf16.mxu0 0
    %384 = vmatpush1.bf16.msra.mxu0 0
    %385 = vmatprep.subr.bf16.mxu0 0
    %386 = vmatpush1.bf16.msra.mxu0 0
    %387 = vmatprep.subr.bf16.mxu0 0
    %388 = vmatpush1.bf16.msra.mxu0 0
    %389 = vmatprep.subr.bf16.mxu0 0
    %390 = vmatpush1.bf16.msra.mxu0 0
    %391 = vmatprep.subr.bf16.mxu0 0
    %392 = vmatpush1.bf16.msra.mxu0 0
    %393 = vmatprep.mubr.bf16.mxu0 0
    %394 = vmatmul.mubr.bf16.gmra.mrb[0].mxu0 %v356
    %v395 = vpop.f32.mrb[0].mxu0
    %v396 = vadd.f32 0.0, %v395
    %v397 = vpop.f32.mrb[0].mxu0
    %v398 = vpop.f32.mrb[0].mxu0
    %v399 = vpop.f32.mrb[0].mxu0
    %400 = vdwg.mxu0
    %402 = vrot.lane.b32.xlu0 %v249, 1
    %v403 = vpop.permute.xlu0 %402
    %405 = vrot.lane.b32.xlu0 %v249, 2
    %v406 = vpop.permute.xlu0 %405
    %408 = vrot.lane.b32.xlu0 %v249, 3
    %v409 = vpop.permute.xlu0 %408
    %411 = vrot.lane.b32.xlu0 %v249, 4
    %v412 = vpop.permute.xlu0 %411
    %414 = vrot.lane.b32.xlu0 %v249, 5
    %v415 = vpop.permute.xlu0 %414
    %417 = vrot.lane.b32.xlu0 %v249, 6
    %v418 = vpop.permute.xlu0 %417
    %420 = vrot.lane.b32.xlu0 %v249, 7
    %v421 = vpop.permute.xlu0 %420
    %v423 = vsel %vm274, %v249, %v403
    %v424 = vsel %vm276, %v423, %v406
    %v425 = vsel %vm278, %v424, %v409
    %v426 = vsel %vm139, %v425, %v412
    %v427 = vsel %vm281, %v426, %v415
    %v428 = vsel %vm283, %v427, %v418
    %v429 = vsel %vm285, %v428, %v421
    %v431 = vrot.slane %v193, 4
    %v432 = vrot.slane %v186, 4
    %433 = vrot.lane.b32.xlu0 %v432, 96
    %v434 = vpop.permute.xlu0 %433
    %436 = vrot.lane.b32.xlu0 %v429, 121
    %v437 = vpop.permute.xlu0 %436
    %v440 = vsel %vm207, %v431, 0
    %v443 = vsel %vm207, %v434, 0
    %445 = vmatprep.subr.bf16.mxu0 0
    %446 = vmatpush1.bf16.xpose.msra.mxu0 %v443
    %447 = vmatprep.subr.bf16.mxu0 0
    %448 = vmatpush1.bf16.xpose.msra.mxu0 0
    %449 = vmatprep.subr.bf16.mxu0 0
    %450 = vmatpush1.bf16.xpose.msra.mxu0 0
    %451 = vmatprep.subr.bf16.mxu0 0
    %452 = vmatpush1.bf16.xpose.msra.mxu0 0
    %453 = vmatprep.subr.bf16.mxu0 0
    %454 = vmatpush1.bf16.xpose.msra.mxu0 0
    %455 = vmatprep.subr.bf16.mxu0 0
    %456 = vmatpush1.bf16.xpose.msra.mxu0 0
    %457 = vmatprep.subr.bf16.mxu0 0
    %458 = vmatpush1.bf16.xpose.msra.mxu0 0
    %459 = vmatprep.subr.bf16.mxu0 0
    %460 = vmatpush1.bf16.xpose.msra.mxu0 0
    %461 = vmatprep.subr.bf16.mxu0 0
    %462 = vmatpush1.bf16.xpose.msra.mxu0 0
    %463 = vmatprep.subr.bf16.mxu0 0
    %464 = vmatpush1.bf16.xpose.msra.mxu0 0
    %465 = vmatprep.subr.bf16.mxu0 0
    %466 = vmatpush1.bf16.xpose.msra.mxu0 0
    %467 = vmatprep.subr.bf16.mxu0 0
    %468 = vmatpush1.bf16.xpose.msra.mxu0 0
    %469 = vmatprep.subr.bf16.mxu0 0
    %470 = vmatpush1.bf16.xpose.msra.mxu0 0
    %471 = vmatprep.subr.bf16.mxu0 0
    %472 = vmatpush1.bf16.xpose.msra.mxu0 0
    %473 = vmatprep.subr.bf16.mxu0 0
    %474 = vmatpush1.bf16.xpose.msra.mxu0 0
    %475 = vmatprep.subr.bf16.mxu0 0
    %476 = vmatpush1.bf16.xpose.msra.mxu0 0
    %477 = vmatprep.mubr.bf16.mxu0 0
    %478 = vmatmul.mubr.bf16.gmra.mrb[0].mxu0 %v440
    %v479 = vpop.f32.mrb[0].mxu0
    %v480 = vadd.f32 %v437, %v479
    %v481 = vpop.f32.mrb[0].mxu0
    %v482 = vpop.f32.mrb[0].mxu0
    %v483 = vpop.f32.mrb[0].mxu0
    %484 = vdwg.mxu0
    %v485 = vsel %vm340, %v480, -inf
    %486 = vmax.xlane.f32.xlu0 %v485
    %v487 = vpop.xlane.xlu0 %486
    %v488 = vsub.f32 %v480, %v487
    %v489 = vmul.f32 %v488, 1.442695
    %v490 = vpow.pop %v489
    %v491 = vsel %vm340, %v490, 0.0
    %492 = vadd.xlane.f32.xlu0 %v491
    %v493 = vpop.xlane.xlu0 %492
    %v494 = vrcp.pop %v493
    %v495 = vmul.f32 %v490, %v494
    %v496 = vpack.c.bf16 %v495, %v495
    %497 = vrot.lane.b32.xlu0 %v432, 64
    %v498 = vpop.permute.xlu0 %497
    %v500 = vsel %vm340, %v496, 0
    %v503 = vsel %vm139, %v498, 0
    %505 = vmatprep.subr.bf16.mxu0 0
    %506 = vmatpush1.bf16.msra.mxu0 %v503
    %507 = vmatprep.subr.bf16.mxu0 0
    %508 = vmatpush1.bf16.msra.mxu0 0
    %509 = vmatprep.subr.bf16.mxu0 0
    %510 = vmatpush1.bf16.msra.mxu0 0
    %511 = vmatprep.subr.bf16.mxu0 0
    %512 = vmatpush1.bf16.msra.mxu0 0
    %513 = vmatprep.subr.bf16.mxu0 0
    %514 = vmatpush1.bf16.msra.mxu0 0
    %515 = vmatprep.subr.bf16.mxu0 0
    %516 = vmatpush1.bf16.msra.mxu0 0
    %517 = vmatprep.subr.bf16.mxu0 0
    %518 = vmatpush1.bf16.msra.mxu0 0
    %519 = vmatprep.subr.bf16.mxu0 0
    %520 = vmatpush1.bf16.msra.mxu0 0
    %521 = vmatprep.subr.bf16.mxu0 0
    %522 = vmatpush1.bf16.msra.mxu0 0
    %523 = vmatprep.subr.bf16.mxu0 0
    %524 = vmatpush1.bf16.msra.mxu0 0
    %525 = vmatprep.subr.bf16.mxu0 0
    %526 = vmatpush1.bf16.msra.mxu0 0
    %527 = vmatprep.subr.bf16.mxu0 0
    %528 = vmatpush1.bf16.msra.mxu0 0
    %529 = vmatprep.subr.bf16.mxu0 0
    %530 = vmatpush1.bf16.msra.mxu0 0
    %531 = vmatprep.subr.bf16.mxu0 0
    %532 = vmatpush1.bf16.msra.mxu0 0
    %533 = vmatprep.subr.bf16.mxu0 0
    %534 = vmatpush1.bf16.msra.mxu0 0
    %535 = vmatprep.subr.bf16.mxu0 0
    %536 = vmatpush1.bf16.msra.mxu0 0
    %537 = vmatprep.mubr.bf16.mxu0 0
    %538 = vmatmul.mubr.bf16.gmra.mrb[0].mxu0 %v500
    %v539 = vpop.f32.mrb[0].mxu0
    %v540 = vadd.f32 0.0, %v539
    %v541 = vpop.f32.mrb[0].mxu0
    %v542 = vpop.f32.mrb[0].mxu0
    %v543 = vpop.f32.mrb[0].mxu0
    %544 = vdwg.mxu0
    %v545 = vlaneseq
    %v546 = vshrl.u32 %v545, 7
    %v547 = vsub.s32 1, %v546
    %v548 = vrot.slane %v63, %v547
    %550 = vrot.lane.b32.xlu0 %v548, 16
    %v551 = vpop.permute.xlu0 %550
    %v553 = vadd.f32 %v184, %v551
    %v554 = vadd.f32 %v185, %v551
    %v555 = vpack.c.bf16 %v554, %v553
    %v556 = vlaneseq
    %v557 = vshrl.u32 %v556, 7
    %v558 = vsub.s32 1, %v557
    %v559 = vrot.slane %v64, %v558
    %561 = vrot.lane.b32.xlu0 %v559, 16
    %v562 = vpop.permute.xlu0 %561
    %v564 = vadd.f32 %v184, %v562
    %v565 = vadd.f32 %v185, %v562
    %v566 = vpack.c.bf16 %v565, %v564
    %568 = vrot.lane.b32.xlu0 %v566, 112
    %v569 = vpop.permute.xlu0 %568
    %v572 = vunpack.c.l.b16 %v67
    %v573 = vunpack.c.l.b16 %v68
    %v574 = vpack.c.b16 %v573, %v572
    %v577 = vsel %vm207, %v569, 0
    %579 = vmatprep.subr.bf16.mxu0 0
    %580 = vmatpush1.bf16.msra.mxu0 %v574
    %581 = vmatprep.subr.bf16.mxu0 0
    %582 = vmatpush1.bf16.msra.mxu0 0
    %583 = vmatprep.subr.bf16.mxu0 0
    %584 = vmatpush1.bf16.msra.mxu0 0
    %585 = vmatprep.subr.bf16.mxu0 0
    %586 = vmatpush1.bf16.msra.mxu0 0
    %587 = vmatprep.subr.bf16.mxu0 0
    %588 = vmatpush1.bf16.msra.mxu0 0
    %589 = vmatprep.subr.bf16.mxu0 0
    %590 = vmatpush1.bf16.msra.mxu0 0
    %591 = vmatprep.subr.bf16.mxu0 0
    %592 = vmatpush1.bf16.msra.mxu0 0
    %593 = vmatprep.subr.bf16.mxu0 0
    %594 = vmatpush1.bf16.msra.mxu0 0
    %595 = vmatprep.subr.bf16.mxu0 0
    %596 = vmatpush1.bf16.msra.mxu0 0
    %597 = vmatprep.subr.bf16.mxu0 0
    %598 = vmatpush1.bf16.msra.mxu0 0
    %599 = vmatprep.subr.bf16.mxu0 0
    %600 = vmatpush1.bf16.msra.mxu0 0
    %601 = vmatprep.subr.bf16.mxu0 0
    %602 = vmatpush1.bf16.msra.mxu0 0
    %603 = vmatprep.subr.bf16.mxu0 0
    %604 = vmatpush1.bf16.msra.mxu0 0
    %605 = vmatprep.subr.bf16.mxu0 0
    %606 = vmatpush1.bf16.msra.mxu0 0
    %607 = vmatprep.subr.bf16.mxu0 0
    %608 = vmatpush1.bf16.msra.mxu0 0
    %609 = vmatprep.subr.bf16.mxu0 0
    %610 = vmatpush1.bf16.msra.mxu0 0
    %611 = vmatprep.mubr.bf16.mxu0 0
    %612 = vmatmul.mubr.bf16.gmra.mrb[0].mxu0 %v577
    %v613 = vpop.f32.mrb[0].mxu0
    %v614 = vadd.f32 0.0, %v613
    %v615 = vpop.f32.mrb[0].mxu0
    %v616 = vpop.f32.mrb[0].mxu0
    %v617 = vadd.f32 0.0, %v616
    %v618 = vpop.f32.mrb[0].mxu0
    %619 = vdwg.mxu0
    %621 = vrot.lane.b32.xlu0 %v614, 1
    %v622 = vpop.permute.xlu0 %621
    %624 = vrot.lane.b32.xlu0 %v614, 2
    %v625 = vpop.permute.xlu0 %624
    %627 = vrot.lane.b32.xlu0 %v614, 3
    %v628 = vpop.permute.xlu0 %627
    %630 = vrot.lane.b32.xlu0 %v614, 4
    %v631 = vpop.permute.xlu0 %630
    %633 = vrot.lane.b32.xlu0 %v614, 5
    %v634 = vpop.permute.xlu0 %633
    %636 = vrot.lane.b32.xlu0 %v614, 6
    %v637 = vpop.permute.xlu0 %636
    %639 = vrot.lane.b32.xlu0 %v614, 7
    %v640 = vpop.permute.xlu0 %639
    %v642 = vsel %vm274, %v614, %v622
    %v643 = vsel %vm276, %v642, %v625
    %v644 = vsel %vm278, %v643, %v628
    %v645 = vsel %vm139, %v644, %v631
    %v646 = vsel %vm281, %v645, %v634
    %v647 = vsel %vm283, %v646, %v637
    %v648 = vsel %vm285, %v647, %v640
    %650 = vrot.lane.b32.xlu0 %v555, 112
    %v651 = vpop.permute.xlu0 %650
    %652 = vrot.lane.b32.xlu0 %v186, 80
    %v653 = vpop.permute.xlu0 %652
    %655 = vrot.lane.b32.xlu0 %v648, 121
    %v656 = vpop.permute.xlu0 %655
    %v659 = vsel %vm207, %v651, 0
    %v662 = vsel %vm207, %v653, 0
    %664 = vmatprep.subr.bf16.mxu0 0
    %665 = vmatpush1.bf16.xpose.msra.mxu0 %v662
    %666 = vmatprep.subr.bf16.mxu0 0
    %667 = vmatpush1.bf16.xpose.msra.mxu0 0
    %668 = vmatprep.subr.bf16.mxu0 0
    %669 = vmatpush1.bf16.xpose.msra.mxu0 0
    %670 = vmatprep.subr.bf16.mxu0 0
    %671 = vmatpush1.bf16.xpose.msra.mxu0 0
    %672 = vmatprep.subr.bf16.mxu0 0
    %673 = vmatpush1.bf16.xpose.msra.mxu0 0
    %674 = vmatprep.subr.bf16.mxu0 0
    %675 = vmatpush1.bf16.xpose.msra.mxu0 0
    %676 = vmatprep.subr.bf16.mxu0 0
    %677 = vmatpush1.bf16.xpose.msra.mxu0 0
    %678 = vmatprep.subr.bf16.mxu0 0
    %679 = vmatpush1.bf16.xpose.msra.mxu0 0
    %680 = vmatprep.subr.bf16.mxu0 0
    %681 = vmatpush1.bf16.xpose.msra.mxu0 0
    %682 = vmatprep.subr.bf16.mxu0 0
    %683 = vmatpush1.bf16.xpose.msra.mxu0 0
    %684 = vmatprep.subr.bf16.mxu0 0
    %685 = vmatpush1.bf16.xpose.msra.mxu0 0
    %686 = vmatprep.subr.bf16.mxu0 0
    %687 = vmatpush1.bf16.xpose.msra.mxu0 0
    %688 = vmatprep.subr.bf16.mxu0 0
    %689 = vmatpush1.bf16.xpose.msra.mxu0 0
    %690 = vmatprep.subr.bf16.mxu0 0
    %691 = vmatpush1.bf16.xpose.msra.mxu0 0
    %692 = vmatprep.subr.bf16.mxu0 0
    %693 = vmatpush1.bf16.xpose.msra.mxu0 0
    %694 = vmatprep.subr.bf16.mxu0 0
    %695 = vmatpush1.bf16.xpose.msra.mxu0 0
    %696 = vmatprep.mubr.bf16.mxu0 0
    %697 = vmatmul.mubr.bf16.gmra.mrb[0].mxu0 %v659
    %v698 = vpop.f32.mrb[0].mxu0
    %v699 = vadd.f32 %v656, %v698
    %v700 = vpop.f32.mrb[0].mxu0
    %v701 = vpop.f32.mrb[0].mxu0
    %v702 = vpop.f32.mrb[0].mxu0
    %703 = vdwg.mxu0
    %v704 = vsel %vm340, %v699, -inf
    %705 = vmax.xlane.f32.xlu0 %v704
    %v706 = vpop.xlane.xlu0 %705
    %v707 = vsub.f32 %v699, %v706
    %v708 = vmul.f32 %v707, 1.442695
    %v709 = vpow.pop %v708
    %v710 = vsel %vm340, %v709, 0.0
    %711 = vadd.xlane.f32.xlu0 %v710
    %v712 = vpop.xlane.xlu0 %711
    %v713 = vrcp.pop %v712
    %v714 = vmul.f32 %v709, %v713
    %v715 = vpack.c.bf16 %v714, %v714
    %716 = vrot.lane.b32.xlu0 %v186, 52
    %v717 = vpop.permute.xlu0 %716
    %v719 = vsel %vm340, %v715, 0
    %v722 = vsel %vm139, %v717, 0
    %724 = vmatprep.subr.bf16.mxu0 0
    %725 = vmatpush1.bf16.msra.mxu0 %v722
    %726 = vmatprep.subr.bf16.mxu0 0
    %727 = vmatpush1.bf16.msra.mxu0 0
    %728 = vmatprep.subr.bf16.mxu0 0
    %729 = vmatpush1.bf16.msra.mxu0 0
    %730 = vmatprep.subr.bf16.mxu0 0
    %731 = vmatpush1.bf16.msra.mxu0 0
    %732 = vmatprep.subr.bf16.mxu0 0
    %733 = vmatpush1.bf16.msra.mxu0 0
    %734 = vmatprep.subr.bf16.mxu0 0
    %735 = vmatpush1.bf16.msra.mxu0 0
    %736 = vmatprep.subr.bf16.mxu0 0
    %737 = vmatpush1.bf16.msra.mxu0 0
    %738 = vmatprep.subr.bf16.mxu0 0
    %739 = vmatpush1.bf16.msra.mxu0 0
    %740 = vmatprep.subr.bf16.mxu0 0
    %741 = vmatpush1.bf16.msra.mxu0 0
    %742 = vmatprep.subr.bf16.mxu0 0
    %743 = vmatpush1.bf16.msra.mxu0 0
    %744 = vmatprep.subr.bf16.mxu0 0
    %745 = vmatpush1.bf16.msra.mxu0 0
    %746 = vmatprep.subr.bf16.mxu0 0
    %747 = vmatpush1.bf16.msra.mxu0 0
    %748 = vmatprep.subr.bf16.mxu0 0
    %749 = vmatpush1.bf16.msra.mxu0 0
    %750 = vmatprep.subr.bf16.mxu0 0
    %751 = vmatpush1.bf16.msra.mxu0 0
    %752 = vmatprep.subr.bf16.mxu0 0
    %753 = vmatpush1.bf16.msra.mxu0 0
    %754 = vmatprep.subr.bf16.mxu0 0
    %755 = vmatpush1.bf16.msra.mxu0 0
    %756 = vmatprep.mubr.bf16.mxu0 0
    %757 = vmatmul.mubr.bf16.gmra.mrb[0].mxu0 %v719
    %v758 = vpop.f32.mrb[0].mxu0
    %v759 = vadd.f32 0.0, %v758
    %v760 = vpop.f32.mrb[0].mxu0
    %v761 = vpop.f32.mrb[0].mxu0
    %v762 = vpop.f32.mrb[0].mxu0
    %763 = vdwg.mxu0
    %765 = vrot.lane.b32.xlu0 %v617, 1
    %v766 = vpop.permute.xlu0 %765
    %768 = vrot.lane.b32.xlu0 %v617, 2
    %v769 = vpop.permute.xlu0 %768
    %771 = vrot.lane.b32.xlu0 %v617, 3
    %v772 = vpop.permute.xlu0 %771
    %774 = vrot.lane.b32.xlu0 %v617, 4
    %v775 = vpop.permute.xlu0 %774
    %777 = vrot.lane.b32.xlu0 %v617, 5
    %v778 = vpop.permute.xlu0 %777
    %780 = vrot.lane.b32.xlu0 %v617, 6
    %v781 = vpop.permute.xlu0 %780
    %783 = vrot.lane.b32.xlu0 %v617, 7
    %v784 = vpop.permute.xlu0 %783
    %v786 = vsel %vm274, %v617, %v766
    %v787 = vsel %vm276, %v786, %v769
    %v788 = vsel %vm278, %v787, %v772
    %v789 = vsel %vm139, %v788, %v775
    %v790 = vsel %vm281, %v789, %v778
    %v791 = vsel %vm283, %v790, %v781
    %v792 = vsel %vm285, %v791, %v784
    %v793 = vrot.slane %v555, 4
    %794 = vrot.lane.b32.xlu0 %v793, 112
    %v795 = vpop.permute.xlu0 %794
    %796 = vrot.lane.b32.xlu0 %v432, 80
    %v797 = vpop.permute.xlu0 %796
    %799 = vrot.lane.b32.xlu0 %v792, 121
    %v800 = vpop.permute.xlu0 %799
    %v803 = vsel %vm207, %v795, 0
    %v806 = vsel %vm207, %v797, 0
    %808 = vmatprep.subr.bf16.mxu0 0
    %809 = vmatpush1.bf16.xpose.msra.mxu0 %v806
    %810 = vmatprep.subr.bf16.mxu0 0
    %811 = vmatpush1.bf16.xpose.msra.mxu0 0
    %812 = vmatprep.subr.bf16.mxu0 0
    %813 = vmatpush1.bf16.xpose.msra.mxu0 0
    %814 = vmatprep.subr.bf16.mxu0 0
    %815 = vmatpush1.bf16.xpose.msra.mxu0 0
    %816 = vmatprep.subr.bf16.mxu0 0
    %817 = vmatpush1.bf16.xpose.msra.mxu0 0
    %818 = vmatprep.subr.bf16.mxu0 0
    %819 = vmatpush1.bf16.xpose.msra.mxu0 0
    %820 = vmatprep.subr.bf16.mxu0 0
    %821 = vmatpush1.bf16.xpose.msra.mxu0 0
    %822 = vmatprep.subr.bf16.mxu0 0
    %823 = vmatpush1.bf16.xpose.msra.mxu0 0
    %824 = vmatprep.subr.bf16.mxu0 0
    %825 = vmatpush1.bf16.xpose.msra.mxu0 0
    %826 = vmatprep.subr.bf16.mxu0 0
    %827 = vmatpush1.bf16.xpose.msra.mxu0 0
    %828 = vmatprep.subr.bf16.mxu0 0
    %829 = vmatpush1.bf16.xpose.msra.mxu0 0
    %830 = vmatprep.subr.bf16.mxu0 0
    %831 = vmatpush1.bf16.xpose.msra.mxu0 0
    %832 = vmatprep.subr.bf16.mxu0 0
    %833 = vmatpush1.bf16.xpose.msra.mxu0 0
    %834 = vmatprep.subr.bf16.mxu0 0
    %835 = vmatpush1.bf16.xpose.msra.mxu0 0
    %836 = vmatprep.subr.bf16.mxu0 0
    %837 = vmatpush1.bf16.xpose.msra.mxu0 0
    %838 = vmatprep.subr.bf16.mxu0 0
    %839 = vmatpush1.bf16.xpose.msra.mxu0 0
    %840 = vmatprep.mubr.bf16.mxu0 0
    %841 = vmatmul.mubr.bf16.gmra.mrb[0].mxu0 %v803
    %v842 = vpop.f32.mrb[0].mxu0
    %v843 = vadd.f32 %v800, %v842
    %v844 = vpop.f32.mrb[0].mxu0
    %v845 = vpop.f32.mrb[0].mxu0
    %v846 = vpop.f32.mrb[0].mxu0
    %847 = vdwg.mxu0
    %v848 = vsel %vm340, %v843, -inf
    %849 = vmax.xlane.f32.xlu0 %v848
    %v850 = vpop.xlane.xlu0 %849
    %v851 = vsub.f32 %v843, %v850
    %v852 = vmul.f32 %v851, 1.442695
    %v853 = vpow.pop %v852
    %v854 = vsel %vm340, %v853, 0.0
    %855 = vadd.xlane.f32.xlu0 %v854
    %v856 = vpop.xlane.xlu0 %855
    %v857 = vrcp.pop %v856
    %v858 = vmul.f32 %v853, %v857
    %v859 = vpack.c.bf16 %v858, %v858
    %860 = vrot.lane.b32.xlu0 %v432, 52
    %v861 = vpop.permute.xlu0 %860
    %v863 = vsel %vm340, %v859, 0
    %v866 = vsel %vm139, %v861, 0
    %868 = vmatprep.subr.bf16.mxu0 0
    %869 = vmatpush1.bf16.msra.mxu0 %v866
    %870 = vmatprep.subr.bf16.mxu0 0
    %871 = vmatpush1.bf16.msra.mxu0 0
    %872 = vmatprep.subr.bf16.mxu0 0
    %873 = vmatpush1.bf16.msra.mxu0 0
    %874 = vmatprep.subr.bf16.mxu0 0
    %875 = vmatpush1.bf16.msra.mxu0 0
    %876 = vmatprep.subr.bf16.mxu0 0
    %877 = vmatpush1.bf16.msra.mxu0 0
    %878 = vmatprep.subr.bf16.mxu0 0
    %879 = vmatpush1.bf16.msra.mxu0 0
    %880 = vmatprep.subr.bf16.mxu0 0
    %881 = vmatpush1.bf16.msra.mxu0 0
    %882 = vmatprep.subr.bf16.mxu0 0
    %883 = vmatpush1.bf16.msra.mxu0 0
    %884 = vmatprep.subr.bf16.mxu0 0
    %885 = vmatpush1.bf16.msra.mxu0 0
    %886 = vmatprep.subr.bf16.mxu0 0
    %887 = vmatpush1.bf16.msra.mxu0 0
    %888 = vmatprep.subr.bf16.mxu0 0
    %889 = vmatpush1.bf16.msra.mxu0 0
    %890 = vmatprep.subr.bf16.mxu0 0
    %891 = vmatpush1.bf16.msra.mxu0 0
    %892 = vmatprep.subr.bf16.mxu0 0
    %893 = vmatpush1.bf16.msra.mxu0 0
    %894 = vmatprep.subr.bf16.mxu0 0
    %895 = vmatpush1.bf16.msra.mxu0 0
    %896 = vmatprep.subr.bf16.mxu0 0
    %897 = vmatpush1.bf16.msra.mxu0 0
    %898 = vmatprep.subr.bf16.mxu0 0
    %899 = vmatpush1.bf16.msra.mxu0 0
    %900 = vmatprep.mubr.bf16.mxu0 0
    %901 = vmatmul.mubr.bf16.gmra.mrb[0].mxu0 %v863
    %v902 = vpop.f32.mrb[0].mxu0
    %v903 = vadd.f32 0.0, %v902
    %v904 = vpop.f32.mrb[0].mxu0
    %v905 = vpop.f32.mrb[0].mxu0
    %v906 = vpop.f32.mrb[0].mxu0
    %907 = vdwg.mxu0
    %909 = vrot.lane.b32.xlu0 %v759, 12
    %v910 = vpop.permute.xlu0 %909
    %vm912 = vcmask 97280
    %v913 = vsel %vm912, %v396, %v910
    %915 = vrot.lane.b32.xlu0 %v903, 12
    %v916 = vpop.permute.xlu0 %915
    %v918 = vsel %vm912, %v540, %v916
    %v919 = vpack.c.bf16 %v918, %v913
    %v921 = vlaneseq
    %v922 = vshrl.u32 %v921, 7
    %v923 = vsub.s32 0, %v922
    %v924 = vrot.slane %v62, %v923
    %v929 = vunpack.c.l.b16 %v59
    %v930 = vunpack.c.l.b16 %v60
    %v931 = vunpack.c.l.b16 %v61
    %v932 = vpack.c.b16 %v930, %v929
    %v933 = vpack.c.b16 %v931, %v931
    %v936 = vsel %vm82, %v919, 0
    %v939 = vsel %vm139, %v933, 0
    %941 = vmatprep.subr.bf16.mxu0 0
    %942 = vmatpush1.bf16.msra.mxu0 %v932
    %943 = vmatprep.subr.bf16.mxu0 0
    %944 = vmatpush1.bf16.msra.mxu0 %v939
    %945 = vmatprep.subr.bf16.mxu0 0
    %946 = vmatpush1.bf16.msra.mxu0 0
    %947 = vmatprep.subr.bf16.mxu0 0
    %948 = vmatpush1.bf16.msra.mxu0 0
    %949 = vmatprep.subr.bf16.mxu0 0
    %950 = vmatpush1.bf16.msra.mxu0 0
    %951 = vmatprep.subr.bf16.mxu0 0
    %952 = vmatpush1.bf16.msra.mxu0 0
    %953 = vmatprep.subr.bf16.mxu0 0
    %954 = vmatpush1.bf16.msra.mxu0 0
    %955 = vmatprep.subr.bf16.mxu0 0
    %956 = vmatpush1.bf16.msra.mxu0 0
    %957 = vmatprep.subr.bf16.mxu0 0
    %958 = vmatpush1.bf16.msra.mxu0 0
    %959 = vmatprep.subr.bf16.mxu0 0
    %960 = vmatpush1.bf16.msra.mxu0 0
    %961 = vmatprep.subr.bf16.mxu0 0
    %962 = vmatpush1.bf16.msra.mxu0 0
    %963 = vmatprep.subr.bf16.mxu0 0
    %964 = vmatpush1.bf16.msra.mxu0 0
    %965 = vmatprep.subr.bf16.mxu0 0
    %966 = vmatpush1.bf16.msra.mxu0 0
    %967 = vmatprep.subr.bf16.mxu0 0
    %968 = vmatpush1.bf16.msra.mxu0 0
    %969 = vmatprep.subr.bf16.mxu0 0
    %970 = vmatpush1.bf16.msra.mxu0 0
    %971 = vmatprep.subr.bf16.mxu0 0
    %972 = vmatpush1.bf16.msra.mxu0 0
    %973 = vmatprep.mubr.bf16.mxu0 0
    %974 = vmatmul.mubr.bf16.gmra.mrb[0].mxu0 %v936
    %v975 = vpop.f32.mrb[0].mxu0
    %v976 = vadd.f32 %v924, %v975
    %v977 = vpop.f32.mrb[0].mxu0
    %v978 = vpop.f32.mrb[0].mxu0
    %v979 = vadd.f32 %v924, %v978
    %v980 = vpop.f32.mrb[0].mxu0
    %981 = vdwg.mxu0
    %v982 = vadd.f32 %v52, %v976
    %v983 = vadd.f32 %v53, %v979
    %v984 = vsel %vm82, %v982, 0.0
    %985 = vadd.xlane.f32.xlu0 %v984
    %v986 = vpop.xlane.xlu0 %985
    %v987 = vsel %vm82, %v983, 0.0
    %988 = vadd.xlane.f32.xlu0 %v987
    %v989 = vpop.xlane.xlu0 %988
    %v990 = vmul.f32 %v986, %v89
    %v991 = vmul.f32 %v989, %v89
    %v992 = vsub.f32 %v982, %v990
    %v993 = vsub.f32 %v983, %v991
    %v994 = vmul.f32 %v992, %v992
    %v995 = vmul.f32 %v993, %v993
    %v996 = vsel %vm82, %v994, 0.0
    %997 = vadd.xlane.f32.xlu0 %v996
    %v998 = vpop.xlane.xlu0 %997
    %v999 = vsel %vm82, %v995, 0.0
    %1000 = vadd.xlane.f32.xlu0 %v999
    %v1001 = vpop.xlane.xlu0 %1000
    %v1002 = vmul.f32 %v998, %v89
    %v1003 = vmul.f32 %v1001, %v89
    %v1004 = vadd.f32 %v1002, 1e-05
    %v1005 = vadd.f32 %v1003, 1e-05
    %v1006 = vrsqrt.pop %v1004
    %v1007 = vrsqrt.pop %v1005
    %v1008 = vmul.f32 %v992, %v1006
    %v1009 = vmul.f32 %v993, %v1007
    %v1011 = vlaneseq
    %v1012 = vshrl.u32 %v1011, 7
    %v1013 = vsub.s32 0, %v1012
    %v1014 = vrot.slane %v69, %v1013
    %v1016 = vmul.f32 %v1008, %v1014
    %v1017 = vmul.f32 %v1009, %v1014
    %v1019 = vlaneseq
    %v1020 = vshrl.u32 %v1019, 7
    %v1021 = vsub.s32 0, %v1020
    %v1022 = vrot.slane %v70, %v1021
    %v1024 = vadd.f32 %v1016, %v1022
    %v1025 = vadd.f32 %v1017, %v1022
    %v1026 = vpack.c.bf16 %v1025, %v1024
    %v1028 = vlaneseq
    %v1029 = vshrl.u32 %v1028, 7
    %v1030 = vsub.s32 0, %v1029
    %v1031 = vrot.slane %v74, %v1030
    %v1036 = vunpack.c.l.b16 %v71
    %v1037 = vunpack.c.l.b16 %v72
    %v1038 = vunpack.c.l.b16 %v73
    %v1039 = vpack.c.b16 %v1037, %v1036
    %v1040 = vpack.c.b16 %v1038, %v1038
    %v1043 = vsel %vm82, %v1026, 0
    %v1046 = vsel %vm139, %v1040, 0
    %1048 = vmatprep.subr.bf16.mxu0 0
    %1049 = vmatpush1.bf16.msra.mxu0 %v1039
    %1050 = vmatprep.subr.bf16.mxu0 0
    %1051 = vmatpush1.bf16.msra.mxu0 %v1046
    %1052 = vmatprep.subr.bf16.mxu0 0
    %1053 = vmatpush1.bf16.msra.mxu0 0
    %1054 = vmatprep.subr.bf16.mxu0 0
    %1055 = vmatpush1.bf16.msra.mxu0 0
    %1056 = vmatprep.subr.bf16.mxu0 0
    %1057 = vmatpush1.bf16.msra.mxu0 0
    %1058 = vmatprep.subr.bf16.mxu0 0
    %1059 = vmatpush1.bf16.msra.mxu0 0
    %1060 = vmatprep.subr.bf16.mxu0 0
    %1061 = vmatpush1.bf16.msra.mxu0 0
    %1062 = vmatprep.subr.bf16.mxu0 0
    %1063 = vmatpush1.bf16.msra.mxu0 0
    %1064 = vmatprep.subr.bf16.mxu0 0
    %1065 = vmatpush1.bf16.msra.mxu0 0
    %1066 = vmatprep.subr.bf16.mxu0 0
    %1067 = vmatpush1.bf16.msra.mxu0 0
    %1068 = vmatprep.subr.bf16.mxu0 0
    %1069 = vmatpush1.bf16.msra.mxu0 0
    %1070 = vmatprep.subr.bf16.mxu0 0
    %1071 = vmatpush1.bf16.msra.mxu0 0
    %1072 = vmatprep.subr.bf16.mxu0 0
    %1073 = vmatpush1.bf16.msra.mxu0 0
    %1074 = vmatprep.subr.bf16.mxu0 0
    %1075 = vmatpush1.bf16.msra.mxu0 0
    %1076 = vmatprep.subr.bf16.mxu0 0
    %1077 = vmatpush1.bf16.msra.mxu0 0
    %1078 = vmatprep.subr.bf16.mxu0 0
    %1079 = vmatpush1.bf16.msra.mxu0 0
    %1080 = vmatprep.mubr.bf16.mxu0 0
    %1081 = vmatmul.mubr.bf16.gmra.mrb[0].mxu0 %v1043
    %v1082 = vpop.f32.mrb[0].mxu0
    %v1083 = vadd.f32 %v1031, %v1082
    %v1084 = vpop.f32.mrb[0].mxu0
    %v1085 = vpop.f32.mrb[0].mxu0
    %v1086 = vadd.f32 %v1031, %v1085
    %v1087 = vpop.f32.mrb[0].mxu0
    %1088 = vdwg.mxu0
    %v1089 = vmax.f32 %v1083, 0.0
    %v1090 = vmax.f32 %v1086, 0.0
    %v1091 = vpack.c.bf16 %v1090, %v1089
    %v1093 = vlaneseq
    %v1094 = vshrl.u32 %v1093, 7
    %v1095 = vsub.s32 0, %v1094
    %v1096 = vrot.slane %v81, %v1095
    %v1104 = vunpack.c.l.b16 %v75
    %v1105 = vunpack.c.l.b16 %v76
    %v1106 = vunpack.c.l.b16 %v77
    %v1107 = vunpack.c.l.b16 %v78
    %v1108 = vunpack.c.l.b16 %v79
    %v1109 = vunpack.c.l.b16 %v80
    %v1110 = vpack.c.b16 %v1105, %v1104
    %v1111 = vpack.c.b16 %v1107, %v1106
    %v1112 = vpack.c.b16 %v1109, %v1108
    %vm1116 = vcmask 392192
    %v1118 = vsel %vm1116, %v1091, 0
    %1120 = vmatprep.subr.bf16.mxu0 0
    %1121 = vmatpush1.bf16.msra.mxu0 %v1110
    %1122 = vmatprep.subr.bf16.mxu0 0
    %1123 = vmatpush1.bf16.msra.mxu0 %v1111
    %1124 = vmatprep.subr.bf16.mxu0 0
    %1125 = vmatpush1.bf16.msra.mxu0 %v1112
    %1126 = vmatprep.subr.bf16.mxu0 0
    %1127 = vmatpush1.bf16.msra.mxu0 0
    %1128 = vmatprep.subr.bf16.mxu0 0
    %1129 = vmatpush1.bf16.msra.mxu0 0
    %1130 = vmatprep.subr.bf16.mxu0 0
    %1131 = vmatpush1.bf16.msra.mxu0 0
    %1132 = vmatprep.subr.bf16.mxu0 0
    %1133 = vmatpush1.bf16.msra.mxu0 0
    %1134 = vmatprep.subr.bf16.mxu0 0
    %1135 = vmatpush1.bf16.msra.mxu0 0
    %1136 = vmatprep.subr.bf16.mxu0 0
    %1137 = vmatpush1.bf16.msra.mxu0 0
    %1138 = vmatprep.subr.bf16.mxu0 0
    %1139 = vmatpush1.bf16.msra.mxu0 0
    %1140 = vmatprep.subr.bf16.mxu0 0
    %1141 = vmatpush1.bf16.msra.mxu0 0
    %1142 = vmatprep.subr.bf16.mxu0 0
    %1143 = vmatpush1.bf16.msra.mxu0 0
    %1144 = vmatprep.subr.bf16.mxu0 0
    %1145 = vmatpush1.bf16.msra.mxu0 0
    %1146 = vmatprep.subr.bf16.mxu0 0
    %1147 = vmatpush1.bf16.msra.mxu0 0
    %1148 = vmatprep.subr.bf16.mxu0 0
    %1149 = vmatpush1.bf16.msra.mxu0 0
    %1150 = vmatprep.subr.bf16.mxu0 0
    %1151 = vmatpush1.bf16.msra.mxu0 0
    %1152 = vmatprep.mubr.bf16.mxu0 0
    %1153 = vmatmul.mubr.bf16.gmra.mrb[0].mxu0 %v1118
    %v1154 = vpop.f32.mrb[0].mxu0
    %v1155 = vadd.f32 %v1096, %v1154
    %v1156 = vpop.f32.mrb[0].mxu0
    %v1157 = vpop.f32.mrb[0].mxu0
    %v1158 = vadd.f32 %v1096, %v1157
    %v1159 = vpop.f32.mrb[0].mxu0
    %1160 = vdwg.mxu0
    %v1161 = vadd.f32 %v982, %v1155
    %v1162 = vadd.f32 %v983, %v1158
    %s1163 = scalar_lea.vmem %s1, 1
    %v1164 = vld [vmem:[%s1163] sm:$0x1]
    %s1165 = scalar_lea.vmem %s2, 1
    %v1166 = vld [vmem:[%s1165] sm:$0x1]
    %s1167 = scalar_lea.vmem %s3, 12
    %v1168 = vld [vmem:[%s1167] sm:$0xf]
    %v1169 = vld [vmem:[%s1167 + $0x4] sm:$0xf]
    %v1170 = vld [vmem:[%s1167 + $0x8] sm:$0xf]
    %s1171 = scalar_lea.vmem %s4, 12
    %v1172 = vld [vmem:[%s1171] sm:$0xf]
    %v1173 = vld [vmem:[%s1171 + $0x4] sm:$0xf]
    %v1174 = vld [vmem:[%s1171 + $0x8] sm:$0xf]
    %s1175 = scalar_lea.vmem %s5, 1
    %v1176 = vld [vmem:[%s1175] sm:$0x1]
    %s1177 = scalar_lea.vmem %s6, 2
    %v1178 = vld [vmem:[%s1177] sm:$0x3]
    %s1179 = scalar_lea.vmem %s7, 2
    %v1180 = vld [vmem:[%s1179] sm:$0x3]
    %s1181 = scalar_lea.vmem %s8, 16
    %v1182 = vld [vmem:[%s1181] sm:$0xf]
    %v1183 = vld [vmem:[%s1181 + $0x4] sm:$0xf]
    %v1184 = vld [vmem:[%s1181 + $0x8] sm:$0xf]
    %v1185 = vld [vmem:[%s1181 + $0xc] sm:$0xf]
    %s1186 = scalar_lea.vmem %s9, 1
    %v1187 = vld [vmem:[%s1186] sm:$0x1]
    %s1188 = scalar_lea.vmem %s10, 1
    %v1189 = vld [vmem:[%s1188] sm:$0x1]
    %s1190 = scalar_lea.vmem %s11, 12
    %v1191 = vld [vmem:[%s1190] sm:$0xf]
    %v1192 = vld [vmem:[%s1190 + $0x4] sm:$0xf]
    %v1193 = vld [vmem:[%s1190 + $0x8] sm:$0xf]
    %s1194 = scalar_lea.vmem %s12, 1
    %v1195 = vld [vmem:[%s1194] sm:$0x1]
    %s1196 = scalar_lea.vmem %s13, 24
    %v1197 = vld [vmem:[%s1196] sm:$0xf]
    %v1198 = vld [vmem:[%s1196 + $0x4] sm:$0xf]
    %v1199 = vld [vmem:[%s1196 + $0x8] sm:$0xf]
    %v1200 = vld [vmem:[%s1196 + $0xc] sm:$0xf]
    %v1201 = vld [vmem:[%s1196 + $0x10] sm:$0xf]
    %v1202 = vld [vmem:[%s1196 + $0x14] sm:$0xf]
    %s1203 = scalar_lea.vmem %s14, 1
    %v1204 = vld [vmem:[%s1203] sm:$0x1]
    %v1205 = vsel %vm82, %v1161, 0.0
    %1206 = vadd.xlane.f32.xlu0 %v1205
    %v1207 = vpop.xlane.xlu0 %1206
    %v1208 = vsel %vm82, %v1162, 0.0
    %1209 = vadd.xlane.f32.xlu0 %v1208
    %v1210 = vpop.xlane.xlu0 %1209
    %v1211 = vmul.f32 %v1207, %v89
    %v1212 = vmul.f32 %v1210, %v89
    %v1213 = vsub.f32 %v1161, %v1211
    %v1214 = vsub.f32 %v1162, %v1212
    %v1215 = vmul.f32 %v1213, %v1213
    %v1216 = vmul.f32 %v1214, %v1214
    %v1217 = vsel %vm82, %v1215, 0.0
    %1218 = vadd.xlane.f32.xlu0 %v1217
    %v1219 = vpop.xlane.xlu0 %1218
    %v1220 = vsel %vm82, %v1216, 0.0
    %1221 = vadd.xlane.f32.xlu0 %v1220
    %v1222 = vpop.xlane.xlu0 %1221
    %v1223 = vmul.f32 %v1219, %v89
    %v1224 = vmul.f32 %v1222, %v89
    %v1225 = vadd.f32 %v1223, 1e-05
    %v1226 = vadd.f32 %v1224, 1e-05
    %v1227 = vrsqrt.pop %v1225
    %v1228 = vrsqrt.pop %v1226
    %v1229 = vmul.f32 %v1213, %v1227
    %v1230 = vmul.f32 %v1214, %v1228
    %v1232 = vlaneseq
    %v1233 = vshrl.u32 %v1232, 7
    %v1234 = vsub.s32 0, %v1233
    %v1235 = vrot.slane %v1164, %v1234
    %v1237 = vmul.f32 %v1229, %v1235
    %v1238 = vmul.f32 %v1230, %v1235
    %v1240 = vlaneseq
    %v1241 = vshrl.u32 %v1240, 7
    %v1242 = vsub.s32 0, %v1241
    %v1243 = vrot.slane %v1166, %v1242
    %v1245 = vadd.f32 %v1237, %v1243
    %v1246 = vadd.f32 %v1238, %v1243
    %v1247 = vpack.c.bf16 %v1246, %v1245
    %v1251 = vunpack.c.l.b16 %v1168
    %v1252 = vunpack.c.l.b16 %v1169
    %v1253 = vunpack.c.l.b16 %v1170
    %v1254 = vpack.c.b16 %v1252, %v1251
    %v1255 = vpack.c.b16 %v1253, %v1253
    %v1258 = vsel %vm82, %v1247, 0
    %v1261 = vsel %vm139, %v1255, 0
    %1263 = vmatprep.subr.bf16.mxu0 0
    %1264 = vmatpush1.bf16.msra.mxu0 %v1254
    %1265 = vmatprep.subr.bf16.mxu0 0
    %1266 = vmatpush1.bf16.msra.mxu0 %v1261
    %1267 = vmatprep.subr.bf16.mxu0 0
    %1268 = vmatpush1.bf16.msra.mxu0 0
    %1269 = vmatprep.subr.bf16.mxu0 0
    %1270 = vmatpush1.bf16.msra.mxu0 0
    %1271 = vmatprep.subr.bf16.mxu0 0
    %1272 = vmatpush1.bf16.msra.mxu0 0
    %1273 = vmatprep.subr.bf16.mxu0 0
    %1274 = vmatpush1.bf16.msra.mxu0 0
    %1275 = vmatprep.subr.bf16.mxu0 0
    %1276 = vmatpush1.bf16.msra.mxu0 0
    %1277 = vmatprep.subr.bf16.mxu0 0
    %1278 = vmatpush1.bf16.msra.mxu0 0
    %1279 = vmatprep.subr.bf16.mxu0 0
    %1280 = vmatpush1.bf16.msra.mxu0 0
    %1281 = vmatprep.subr.bf16.mxu0 0
    %1282 = vmatpush1.bf16.msra.mxu0 0
    %1283 = vmatprep.subr.bf16.mxu0 0
    %1284 = vmatpush1.bf16.msra.mxu0 0
    %1285 = vmatprep.subr.bf16.mxu0 0
    %1286 = vmatpush1.bf16.msra.mxu0 0
    %1287 = vmatprep.subr.bf16.mxu0 0
    %1288 = vmatpush1.bf16.msra.mxu0 0
    %1289 = vmatprep.subr.bf16.mxu0 0
    %1290 = vmatpush1.bf16.msra.mxu0 0
    %1291 = vmatprep.subr.bf16.mxu0 0
    %1292 = vmatpush1.bf16.msra.mxu0 0
    %1293 = vmatprep.subr.bf16.mxu0 0
    %1294 = vmatpush1.bf16.msra.mxu0 0
    %1295 = vmatprep.mubr.bf16.mxu0 0
    %1296 = vmatmul.mubr.bf16.gmra.mrb[0].mxu0 %v1258
    %v1297 = vpop.f32.mrb[0].mxu0
    %v1298 = vadd.f32 0.0, %v1297
    %v1299 = vpop.f32.mrb[0].mxu0
    %v1300 = vpop.f32.mrb[0].mxu0
    %v1301 = vadd.f32 0.0, %v1300
    %v1302 = vpop.f32.mrb[0].mxu0
    %1303 = vdwg.mxu0
    %v1304 = vmul.f32 %v1298, 0.25
    %v1305 = vmul.f32 %v1301, 0.25
    %v1306 = vpack.c.bf16 %v1301, %v1298
    %v1307 = vlaneseq
    %v1308 = vshrl.u32 %v1307, 7
    %v1309 = vsub.s32 0, %v1308
    %v1310 = vrot.slane %v1178, %v1309
    %v1311 = vadd.f32 %v1304, %v1310
    %v1312 = vadd.f32 %v1305, %v1310
    %v1313 = vpack.c.bf16 %v1312, %v1311
    %v1314 = vlaneseq
    %v1315 = vshrl.u32 %v1314, 7
    %v1316 = vsub.s32 0, %v1315
    %v1317 = vrot.slane %v1180, %v1316
    %v1318 = vadd.f32 %v1304, %v1317
    %v1319 = vadd.f32 %v1305, %v1317
    %v1320 = vpack.c.bf16 %v1319, %v1318
    %v1323 = vunpack.c.l.b16 %v1182
    %v1324 = vunpack.c.l.b16 %v1183
    %v1325 = vpack.c.b16 %v1324, %v1323
    %v1328 = vsel %vm207, %v1320, 0
    %1330 = vmatprep.subr.bf16.mxu0 0
    %1331 = vmatpush1.bf16.msra.mxu0 %v1325
    %1332 = vmatprep.subr.bf16.mxu0 0
    %1333 = vmatpush1.bf16.msra.mxu0 0
    %1334 = vmatprep.subr.bf16.mxu0 0
    %1335 = vmatpush1.bf16.msra.mxu0 0
    %1336 = vmatprep.subr.bf16.mxu0 0
    %1337 = vmatpush1.bf16.msra.mxu0 0
    %1338 = vmatprep.subr.bf16.mxu0 0
    %1339 = vmatpush1.bf16.msra.mxu0 0
    %1340 = vmatprep.subr.bf16.mxu0 0
    %1341 = vmatpush1.bf16.msra.mxu0 0
    %1342 = vmatprep.subr.bf16.mxu0 0
    %1343 = vmatpush1.bf16.msra.mxu0 0
    %1344 = vmatprep.subr.bf16.mxu0 0
    %1345 = vmatpush1.bf16.msra.mxu0 0
    %1346 = vmatprep.subr.bf16.mxu0 0
    %1347 = vmatpush1.bf16.msra.mxu0 0
    %1348 = vmatprep.subr.bf16.mxu0 0
    %1349 = vmatpush1.bf16.msra.mxu0 0
    %1350 = vmatprep.subr.bf16.mxu0 0
    %1351 = vmatpush1.bf16.msra.mxu0 0
    %1352 = vmatprep.subr.bf16.mxu0 0
    %1353 = vmatpush1.bf16.msra.mxu0 0
    %1354 = vmatprep.subr.bf16.mxu0 0
    %1355 = vmatpush1.bf16.msra.mxu0 0
    %1356 = vmatprep.subr.bf16.mxu0 0
    %1357 = vmatpush1.bf16.msra.mxu0 0
    %1358 = vmatprep.subr.bf16.mxu0 0
    %1359 = vmatpush1.bf16.msra.mxu0 0
    %1360 = vmatprep.subr.bf16.mxu0 0
    %1361 = vmatpush1.bf16.msra.mxu0 0
    %1362 = vmatprep.mubr.bf16.mxu0 0
    %1363 = vmatmul.mubr.bf16.gmra.mrb[0].mxu0 %v1328
    %v1364 = vpop.f32.mrb[0].mxu0
    %v1365 = vadd.f32 0.0, %v1364
    %v1366 = vpop.f32.mrb[0].mxu0
    %v1367 = vpop.f32.mrb[0].mxu0
    %v1368 = vadd.f32 0.0, %v1367
    %v1369 = vpop.f32.mrb[0].mxu0
    %1370 = vdwg.mxu0
    %1372 = vrot.lane.b32.xlu0 %v1365, 1
    %v1373 = vpop.permute.xlu0 %1372
    %1375 = vrot.lane.b32.xlu0 %v1365, 2
    %v1376 = vpop.permute.xlu0 %1375
    %1378 = vrot.lane.b32.xlu0 %v1365, 3
    %v1379 = vpop.permute.xlu0 %1378
    %1381 = vrot.lane.b32.xlu0 %v1365, 4
    %v1382 = vpop.permute.xlu0 %1381
    %1384 = vrot.lane.b32.xlu0 %v1365, 5
    %v1385 = vpop.permute.xlu0 %1384
    %1387 = vrot.lane.b32.xlu0 %v1365, 6
    %v1388 = vpop.permute.xlu0 %1387
    %1390 = vrot.lane.b32.xlu0 %v1365, 7
    %v1391 = vpop.permute.xlu0 %1390
    %v1393 = vsel %vm274, %v1365, %v1373
    %v1394 = vsel %vm276, %v1393, %v1376
    %v1395 = vsel %vm278, %v1394, %v1379
    %v1396 = vsel %vm139, %v1395, %v1382
    %v1397 = vsel %vm281, %v1396, %v1385
    %v1398 = vsel %vm283, %v1397, %v1388
    %v1399 = vsel %vm285, %v1398, %v1391
    %1401 = vrot.lane.b32.xlu0 %v1306, 96
    %v1402 = vpop.permute.xlu0 %1401
    %1404 = vrot.lane.b32.xlu0 %v1399, 121
    %v1405 = vpop.permute.xlu0 %1404
    %v1408 = vsel %vm207, %v1313, 0
    %v1411 = vsel %vm207, %v1402, 0
    %1413 = vmatprep.subr.bf16.mxu0 0
    %1414 = vmatpush1.bf16.xpose.msra.mxu0 %v1411
    %1415 = vmatprep.subr.bf16.mxu0 0
    %1416 = vmatpush1.bf16.xpose.msra.mxu0 0
    %1417 = vmatprep.subr.bf16.mxu0 0
    %1418 = vmatpush1.bf16.xpose.msra.mxu0 0
    %1419 = vmatprep.subr.bf16.mxu0 0
    %1420 = vmatpush1.bf16.xpose.msra.mxu0 0
    %1421 = vmatprep.subr.bf16.mxu0 0
    %1422 = vmatpush1.bf16.xpose.msra.mxu0 0
    %1423 = vmatprep.subr.bf16.mxu0 0
    %1424 = vmatpush1.bf16.xpose.msra.mxu0 0
    %1425 = vmatprep.subr.bf16.mxu0 0
    %1426 = vmatpush1.bf16.xpose.msra.mxu0 0
    %1427 = vmatprep.subr.bf16.mxu0 0
    %1428 = vmatpush1.bf16.xpose.msra.mxu0 0
    %1429 = vmatprep.subr.bf16.mxu0 0
    %1430 = vmatpush1.bf16.xpose.msra.mxu0 0
    %1431 = vmatprep.subr.bf16.mxu0 0
    %1432 = vmatpush1.bf16.xpose.msra.mxu0 0
    %1433 = vmatprep.subr.bf16.mxu0 0
    %1434 = vmatpush1.bf16.xpose.msra.mxu0 0
    %1435 = vmatprep.subr.bf16.mxu0 0
    %1436 = vmatpush1.bf16.xpose.msra.mxu0 0
    %1437 = vmatprep.subr.bf16.mxu0 0
    %1438 = vmatpush1.bf16.xpose.msra.mxu0 0
    %1439 = vmatprep.subr.bf16.mxu0 0
    %1440 = vmatpush1.bf16.xpose.msra.mxu0 0
    %1441 = vmatprep.subr.bf16.mxu0 0
    %1442 = vmatpush1.bf16.xpose.msra.mxu0 0
    %1443 = vmatprep.subr.bf16.mxu0 0
    %1444 = vmatpush1.bf16.xpose.msra.mxu0 0
    %1445 = vmatprep.mubr.bf16.mxu0 0
    %1446 = vmatmul.mubr.bf16.gmra.mrb[0].mxu0 %v1408
    %v1447 = vpop.f32.mrb[0].mxu0
    %v1448 = vadd.f32 %v1405, %v1447
    %v1449 = vpop.f32.mrb[0].mxu0
    %v1450 = vpop.f32.mrb[0].mxu0
    %v1451 = vpop.f32.mrb[0].mxu0
    %1452 = vdwg.mxu0
    %v1453 = vsel %vm340, %v1448, -inf
    %1454 = vmax.xlane.f32.xlu0 %v1453
    %v1455 = vpop.xlane.xlu0 %1454
    %v1456 = vsub.f32 %v1448, %v1455
    %v1457 = vmul.f32 %v1456, 1.442695
    %v1458 = vpow.pop %v1457
    %v1459 = vsel %vm340, %v1458, 0.0
    %1460 = vadd.xlane.f32.xlu0 %v1459
    %v1461 = vpop.xlane.xlu0 %1460
    %v1462 = vrcp.pop %v1461
    %v1463 = vmul.f32 %v1458, %v1462
    %v1464 = vpack.c.bf16 %v1463, %v1463
    %1465 = vrot.lane.b32.xlu0 %v1306, 64
    %v1466 = vpop.permute.xlu0 %1465
    %v1468 = vsel %vm340, %v1464, 0
    %v1471 = vsel %vm139, %v1466, 0
    %1473 = vmatprep.subr.bf16.mxu0 0
    %1474 = vmatpush1.bf16.msra.mxu0 %v1471
    %1475 = vmatprep.subr.bf16.mxu0 0
    %1476 = vmatpush1.bf16.msra.mxu0 0
    %1477 = vmatprep.subr.bf16.mxu0 0
    %1478 = vmatpush1.bf16.msra.mxu0 0
    %1479 = vmatprep.subr.bf16.mxu0 0
    %1480 = vmatpush1.bf16.msra.mxu0 0
    %1481 = vmatprep.subr.bf16.mxu0 0
    %1482 = vmatpush1.bf16.msra.mxu0 0
    %1483 = vmatprep.subr.bf16.mxu0 0
    %1484 = vmatpush1.bf16.msra.mxu0 0
    %1485 = vmatprep.subr.bf16.mxu0 0
    %1486 = vmatpush1.bf16.msra.mxu0 0
    %1487 = vmatprep.subr.bf16.mxu0 0
    %1488 = vmatpush1.bf16.msra.mxu0 0
    %1489 = vmatprep.subr.bf16.mxu0 0
    %1490 = vmatpush1.bf16.msra.mxu0 0
    %1491 = vmatprep.subr.bf16.mxu0 0
    %1492 = vmatpush1.bf16.msra.mxu0 0
    %1493 = vmatprep.subr.bf16.mxu0 0
    %1494 = vmatpush1.bf16.msra.mxu0 0
    %1495 = vmatprep.subr.bf16.mxu0 0
    %1496 = vmatpush1.bf16.msra.mxu0 0
    %1497 = vmatprep.subr.bf16.mxu0 0
    %1498 = vmatpush1.bf16.msra.mxu0 0
    %1499 = vmatprep.subr.bf16.mxu0 0
    %1500 = vmatpush1.bf16.msra.mxu0 0
    %1501 = vmatprep.subr.bf16.mxu0 0
    %1502 = vmatpush1.bf16.msra.mxu0 0
    %1503 = vmatprep.subr.bf16.mxu0 0
    %1504 = vmatpush1.bf16.msra.mxu0 0
    %1505 = vmatprep.mubr.bf16.mxu0 0
    %1506 = vmatmul.mubr.bf16.gmra.mrb[0].mxu0 %v1468
    %v1507 = vpop.f32.mrb[0].mxu0
    %v1508 = vadd.f32 0.0, %v1507
    %v1509 = vpop.f32.mrb[0].mxu0
    %v1510 = vpop.f32.mrb[0].mxu0
    %v1511 = vpop.f32.mrb[0].mxu0
    %1512 = vdwg.mxu0
    %1514 = vrot.lane.b32.xlu0 %v1368, 1
    %v1515 = vpop.permute.xlu0 %1514
    %1517 = vrot.lane.b32.xlu0 %v1368, 2
    %v1518 = vpop.permute.xlu0 %1517
    %1520 = vrot.lane.b32.xlu0 %v1368, 3
    %v1521 = vpop.permute.xlu0 %1520
    %1523 = vrot.lane.b32.xlu0 %v1368, 4
    %v1524 = vpop.permute.xlu0 %1523
    %1526 = vrot.lane.b32.xlu0 %v1368, 5
    %v1527 = vpop.permute.xlu0 %1526
    %1529 = vrot.lane.b32.xlu0 %v1368, 6
    %v1530 = vpop.permute.xlu0 %1529
    %1532 = vrot.lane.b32.xlu0 %v1368, 7
    %v1533 = vpop.permute.xlu0 %1532
    %v1535 = vsel %vm274, %v1368, %v1515
    %v1536 = vsel %vm276, %v1535, %v1518
    %v1537 = vsel %vm278, %v1536, %v1521
    %v1538 = vsel %vm139, %v1537, %v1524
    %v1539 = vsel %vm281, %v1538, %v1527
    %v1540 = vsel %vm283, %v1539, %v1530
    %v1541 = vsel %vm285, %v1540, %v1533
    %v1543 = vrot.slane %v1313, 4
    %v1544 = vrot.slane %v1306, 4
    %1545 = vrot.lane.b32.xlu0 %v1544, 96
    %v1546 = vpop.permute.xlu0 %1545
    %1548 = vrot.lane.b32.xlu0 %v1541, 121
    %v1549 = vpop.permute.xlu0 %1548
    %v1552 = vsel %vm207, %v1543, 0
    %v1555 = vsel %vm207, %v1546, 0
    %1557 = vmatprep.subr.bf16.mxu0 0
    %1558 = vmatpush1.bf16.xpose.msra.mxu0 %v1555
    %1559 = vmatprep.subr.bf16.mxu0 0
    %1560 = vmatpush1.bf16.xpose.msra.mxu0 0
    %1561 = vmatprep.subr.bf16.mxu0 0
    %1562 = vmatpush1.bf16.xpose.msra.mxu0 0
    %1563 = vmatprep.subr.bf16.mxu0 0
    %1564 = vmatpush1.bf16.xpose.msra.mxu0 0
    %1565 = vmatprep.subr.bf16.mxu0 0
    %1566 = vmatpush1.bf16.xpose.msra.mxu0 0
    %1567 = vmatprep.subr.bf16.mxu0 0
    %1568 = vmatpush1.bf16.xpose.msra.mxu0 0
    %1569 = vmatprep.subr.bf16.mxu0 0
    %1570 = vmatpush1.bf16.xpose.msra.mxu0 0
    %1571 = vmatprep.subr.bf16.mxu0 0
    %1572 = vmatpush1.bf16.xpose.msra.mxu0 0
    %1573 = vmatprep.subr.bf16.mxu0 0
    %1574 = vmatpush1.bf16.xpose.msra.mxu0 0
    %1575 = vmatprep.subr.bf16.mxu0 0
    %1576 = vmatpush1.bf16.xpose.msra.mxu0 0
    %1577 = vmatprep.subr.bf16.mxu0 0
    %1578 = vmatpush1.bf16.xpose.msra.mxu0 0
    %1579 = vmatprep.subr.bf16.mxu0 0
    %1580 = vmatpush1.bf16.xpose.msra.mxu0 0
    %1581 = vmatprep.subr.bf16.mxu0 0
    %1582 = vmatpush1.bf16.xpose.msra.mxu0 0
    %1583 = vmatprep.subr.bf16.mxu0 0
    %1584 = vmatpush1.bf16.xpose.msra.mxu0 0
    %1585 = vmatprep.subr.bf16.mxu0 0
    %1586 = vmatpush1.bf16.xpose.msra.mxu0 0
    %1587 = vmatprep.subr.bf16.mxu0 0
    %1588 = vmatpush1.bf16.xpose.msra.mxu0 0
    %1589 = vmatprep.mubr.bf16.mxu0 0
    %1590 = vmatmul.mubr.bf16.gmra.mrb[0].mxu0 %v1552
    %v1591 = vpop.f32.mrb[0].mxu0
    %v1592 = vadd.f32 %v1549, %v1591
    %v1593 = vpop.f32.mrb[0].mxu0
    %v1594 = vpop.f32.mrb[0].mxu0
    %v1595 = vpop.f32.mrb[0].mxu0
    %1596 = vdwg.mxu0
    %v1597 = vsel %vm340, %v1592, -inf
    %1598 = vmax.xlane.f32.xlu0 %v1597
    %v1599 = vpop.xlane.xlu0 %1598
    %v1600 = vsub.f32 %v1592, %v1599
    %v1601 = vmul.f32 %v1600, 1.442695
    %v1602 = vpow.pop %v1601
    %v1603 = vsel %vm340, %v1602, 0.0
    %1604 = vadd.xlane.f32.xlu0 %v1603
    %v1605 = vpop.xlane.xlu0 %1604
    %v1606 = vrcp.pop %v1605
    %v1607 = vmul.f32 %v1602, %v1606
    %v1608 = vpack.c.bf16 %v1607, %v1607
    %1609 = vrot.lane.b32.xlu0 %v1544, 64
    %v1610 = vpop.permute.xlu0 %1609
    %v1612 = vsel %vm340, %v1608, 0
    %v1615 = vsel %vm139, %v1610, 0
    %1617 = vmatprep.subr.bf16.mxu0 0
    %1618 = vmatpush1.bf16.msra.mxu0 %v1615
    %1619 = vmatprep.subr.bf16.mxu0 0
    %1620 = vmatpush1.bf16.msra.mxu0 0
    %1621 = vmatprep.subr.bf16.mxu0 0
    %1622 = vmatpush1.bf16.msra.mxu0 0
    %1623 = vmatprep.subr.bf16.mxu0 0
    %1624 = vmatpush1.bf16.msra.mxu0 0
    %1625 = vmatprep.subr.bf16.mxu0 0
    %1626 = vmatpush1.bf16.msra.mxu0 0
    %1627 = vmatprep.subr.bf16.mxu0 0
    %1628 = vmatpush1.bf16.msra.mxu0 0
    %1629 = vmatprep.subr.bf16.mxu0 0
    %1630 = vmatpush1.bf16.msra.mxu0 0
    %1631 = vmatprep.subr.bf16.mxu0 0
    %1632 = vmatpush1.bf16.msra.mxu0 0
    %1633 = vmatprep.subr.bf16.mxu0 0
    %1634 = vmatpush1.bf16.msra.mxu0 0
    %1635 = vmatprep.subr.bf16.mxu0 0
    %1636 = vmatpush1.bf16.msra.mxu0 0
    %1637 = vmatprep.subr.bf16.mxu0 0
    %1638 = vmatpush1.bf16.msra.mxu0 0
    %1639 = vmatprep.subr.bf16.mxu0 0
    %1640 = vmatpush1.bf16.msra.mxu0 0
    %1641 = vmatprep.subr.bf16.mxu0 0
    %1642 = vmatpush1.bf16.msra.mxu0 0
    %1643 = vmatprep.subr.bf16.mxu0 0
    %1644 = vmatpush1.bf16.msra.mxu0 0
    %1645 = vmatprep.subr.bf16.mxu0 0
    %1646 = vmatpush1.bf16.msra.mxu0 0
    %1647 = vmatprep.subr.bf16.mxu0 0
    %1648 = vmatpush1.bf16.msra.mxu0 0
    %1649 = vmatprep.mubr.bf16.mxu0 0
    %1650 = vmatmul.mubr.bf16.gmra.mrb[0].mxu0 %v1612
    %v1651 = vpop.f32.mrb[0].mxu0
    %v1652 = vadd.f32 0.0, %v1651
    %v1653 = vpop.f32.mrb[0].mxu0
    %v1654 = vpop.f32.mrb[0].mxu0
    %v1655 = vpop.f32.mrb[0].mxu0
    %1656 = vdwg.mxu0
    %v1657 = vlaneseq
    %v1658 = vshrl.u32 %v1657, 7
    %v1659 = vsub.s32 1, %v1658
    %v1660 = vrot.slane %v1178, %v1659
    %1662 = vrot.lane.b32.xlu0 %v1660, 16
    %v1663 = vpop.permute.xlu0 %1662
    %v1665 = vadd.f32 %v1304, %v1663
    %v1666 = vadd.f32 %v1305, %v1663
    %v1667 = vpack.c.bf16 %v1666, %v1665
    %v1668 = vlaneseq
    %v1669 = vshrl.u32 %v1668, 7
    %v1670 = vsub.s32 1, %v1669
    %v1671 = vrot.slane %v1180, %v1670
    %1673 = vrot.lane.b32.xlu0 %v1671, 16
    %v1674 = vpop.permute.xlu0 %1673
    %v1676 = vadd.f32 %v1304, %v1674
    %v1677 = vadd.f32 %v1305, %v1674
    %v1678 = vpack.c.bf16 %v1677, %v1676
    %1680 = vrot.lane.b32.xlu0 %v1678, 112
    %v1681 = vpop.permute.xlu0 %1680
    %v1684 = vunpack.c.l.b16 %v1184
    %v1685 = vunpack.c.l.b16 %v1185
    %v1686 = vpack.c.b16 %v1685, %v1684
    %v1689 = vsel %vm207, %v1681, 0
    %1691 = vmatprep.subr.bf16.mxu0 0
    %1692 = vmatpush1.bf16.msra.mxu0 %v1686
    %1693 = vmatprep.subr.bf16.mxu0 0
    %1694 = vmatpush1.bf16.msra.mxu0 0
    %1695 = vmatprep.subr.bf16.mxu0 0
    %1696 = vmatpush1.bf16.msra.mxu0 0
    %1697 = vmatprep.subr.bf16.mxu0 0
    %1698 = vmatpush1.bf16.msra.mxu0 0
    %1699 = vmatprep.subr.bf16.mxu0 0
    %1700 = vmatpush1.bf16.msra.mxu0 0
    %1701 = vmatprep.subr.bf16.mxu0 0
    %1702 = vmatpush1.bf16.msra.mxu0 0
    %1703 = vmatprep.subr.bf16.mxu0 0
    %1704 = vmatpush1.bf16.msra.mxu0 0
    %1705 = vmatprep.subr.bf16.mxu0 0
    %1706 = vmatpush1.bf16.msra.mxu0 0
    %1707 = vmatprep.subr.bf16.mxu0 0
    %1708 = vmatpush1.bf16.msra.mxu0 0
    %1709 = vmatprep.subr.bf16.mxu0 0
    %1710 = vmatpush1.bf16.msra.mxu0 0
    %1711 = vmatprep.subr.bf16.mxu0 0
    %1712 = vmatpush1.bf16.msra.mxu0 0
    %1713 = vmatprep.subr.bf16.mxu0 0
    %1714 = vmatpush1.bf16.msra.mxu0 0
    %1715 = vmatprep.subr.bf16.mxu0 0
    %1716 = vmatpush1.bf16.msra.mxu0 0
    %1717 = vmatprep.subr.bf16.mxu0 0
    %1718 = vmatpush1.bf16.msra.mxu0 0
    %1719 = vmatprep.subr.bf16.mxu0 0
    %1720 = vmatpush1.bf16.msra.mxu0 0
    %1721 = vmatprep.subr.bf16.mxu0 0
    %1722 = vmatpush1.bf16.msra.mxu0 0
    %1723 = vmatprep.mubr.bf16.mxu0 0
    %1724 = vmatmul.mubr.bf16.gmra.mrb[0].mxu0 %v1689
    %v1725 = vpop.f32.mrb[0].mxu0
    %v1726 = vadd.f32 0.0, %v1725
    %v1727 = vpop.f32.mrb[0].mxu0
    %v1728 = vpop.f32.mrb[0].mxu0
    %v1729 = vadd.f32 0.0, %v1728
    %v1730 = vpop.f32.mrb[0].mxu0
    %1731 = vdwg.mxu0
    %1733 = vrot.lane.b32.xlu0 %v1726, 1
    %v1734 = vpop.permute.xlu0 %1733
    %1736 = vrot.lane.b32.xlu0 %v1726, 2
    %v1737 = vpop.permute.xlu0 %1736
    %1739 = vrot.lane.b32.xlu0 %v1726, 3
    %v1740 = vpop.permute.xlu0 %1739
    %1742 = vrot.lane.b32.xlu0 %v1726, 4
    %v1743 = vpop.permute.xlu0 %1742
    %1745 = vrot.lane.b32.xlu0 %v1726, 5
    %v1746 = vpop.permute.xlu0 %1745
    %1748 = vrot.lane.b32.xlu0 %v1726, 6
    %v1749 = vpop.permute.xlu0 %1748
    %1751 = vrot.lane.b32.xlu0 %v1726, 7
    %v1752 = vpop.permute.xlu0 %1751
    %v1754 = vsel %vm274, %v1726, %v1734
    %v1755 = vsel %vm276, %v1754, %v1737
    %v1756 = vsel %vm278, %v1755, %v1740
    %v1757 = vsel %vm139, %v1756, %v1743
    %v1758 = vsel %vm281, %v1757, %v1746
    %v1759 = vsel %vm283, %v1758, %v1749
    %v1760 = vsel %vm285, %v1759, %v1752
    %1762 = vrot.lane.b32.xlu0 %v1667, 112
    %v1763 = vpop.permute.xlu0 %1762
    %1764 = vrot.lane.b32.xlu0 %v1306, 80
    %v1765 = vpop.permute.xlu0 %1764
    %1767 = vrot.lane.b32.xlu0 %v1760, 121
    %v1768 = vpop.permute.xlu0 %1767
    %v1771 = vsel %vm207, %v1763, 0
    %v1774 = vsel %vm207, %v1765, 0
    %1776 = vmatprep.subr.bf16.mxu0 0
    %1777 = vmatpush1.bf16.xpose.msra.mxu0 %v1774
    %1778 = vmatprep.subr.bf16.mxu0 0
    %1779 = vmatpush1.bf16.xpose.msra.mxu0 0
    %1780 = vmatprep.subr.bf16.mxu0 0
    %1781 = vmatpush1.bf16.xpose.msra.mxu0 0
    %1782 = vmatprep.subr.bf16.mxu0 0
    %1783 = vmatpush1.bf16.xpose.msra.mxu0 0
    %1784 = vmatprep.subr.bf16.mxu0 0
    %1785 = vmatpush1.bf16.xpose.msra.mxu0 0
    %1786 = vmatprep.subr.bf16.mxu0 0
    %1787 = vmatpush1.bf16.xpose.msra.mxu0 0
    %1788 = vmatprep.subr.bf16.mxu0 0
    %1789 = vmatpush1.bf16.xpose.msra.mxu0 0
    %1790 = vmatprep.subr.bf16.mxu0 0
    %1791 = vmatpush1.bf16.xpose.msra.mxu0 0
    %1792 = vmatprep.subr.bf16.mxu0 0
    %1793 = vmatpush1.bf16.xpose.msra.mxu0 0
    %1794 = vmatprep.subr.bf16.mxu0 0
    %1795 = vmatpush1.bf16.xpose.msra.mxu0 0
    %1796 = vmatprep.subr.bf16.mxu0 0
    %1797 = vmatpush1.bf16.xpose.msra.mxu0 0
    %1798 = vmatprep.subr.bf16.mxu0 0
    %1799 = vmatpush1.bf16.xpose.msra.mxu0 0
    %1800 = vmatprep.subr.bf16.mxu0 0
    %1801 = vmatpush1.bf16.xpose.msra.mxu0 0
    %1802 = vmatprep.subr.bf16.mxu0 0
    %1803 = vmatpush1.bf16.xpose.msra.mxu0 0
    %1804 = vmatprep.subr.bf16.mxu0 0
    %1805 = vmatpush1.bf16.xpose.msra.mxu0 0
    %1806 = vmatprep.subr.bf16.mxu0 0
    %1807 = vmatpush1.bf16.xpose.msra.mxu0 0
    %1808 = vmatprep.mubr.bf16.mxu0 0
    %1809 = vmatmul.mubr.bf16.gmra.mrb[0].mxu0 %v1771
    %v1810 = vpop.f32.mrb[0].mxu0
    %v1811 = vadd.f32 %v1768, %v1810
    %v1812 = vpop.f32.mrb[0].mxu0
    %v1813 = vpop.f32.mrb[0].mxu0
    %v1814 = vpop.f32.mrb[0].mxu0
    %1815 = vdwg.mxu0
    %v1816 = vsel %vm340, %v1811, -inf
    %1817 = vmax.xlane.f32.xlu0 %v1816
    %v1818 = vpop.xlane.xlu0 %1817
    %v1819 = vsub.f32 %v1811, %v1818
    %v1820 = vmul.f32 %v1819, 1.442695
    %v1821 = vpow.pop %v1820
    %v1822 = vsel %vm340, %v1821, 0.0
    %1823 = vadd.xlane.f32.xlu0 %v1822
    %v1824 = vpop.xlane.xlu0 %1823
    %v1825 = vrcp.pop %v1824
    %v1826 = vmul.f32 %v1821, %v1825
    %v1827 = vpack.c.bf16 %v1826, %v1826
    %1828 = vrot.lane.b32.xlu0 %v1306, 52
    %v1829 = vpop.permute.xlu0 %1828
    %v1831 = vsel %vm340, %v1827, 0
    %v1834 = vsel %vm139, %v1829, 0
    %1836 = vmatprep.subr.bf16.mxu0 0
    %1837 = vmatpush1.bf16.msra.mxu0 %v1834
    %1838 = vmatprep.subr.bf16.mxu0 0
    %1839 = vmatpush1.bf16.msra.mxu0 0
    %1840 = vmatprep.subr.bf16.mxu0 0
    %1841 = vmatpush1.bf16.msra.mxu0 0
    %1842 = vmatprep.subr.bf16.mxu0 0
    %1843 = vmatpush1.bf16.msra.mxu0 0
    %1844 = vmatprep.subr.bf16.mxu0 0
    %1845 = vmatpush1.bf16.msra.mxu0 0
    %1846 = vmatprep.subr.bf16.mxu0 0
    %1847 = vmatpush1.bf16.msra.mxu0 0
    %1848 = vmatprep.subr.bf16.mxu0 0
    %1849 = vmatpush1.bf16.msra.mxu0 0
    %1850 = vmatprep.subr.bf16.mxu0 0
    %1851 = vmatpush1.bf16.msra.mxu0 0
    %1852 = vmatprep.subr.bf16.mxu0 0
    %1853 = vmatpush1.bf16.msra.mxu0 0
    %1854 = vmatprep.subr.bf16.mxu0 0
    %1855 = vmatpush1.bf16.msra.mxu0 0
    %1856 = vmatprep.subr.bf16.mxu0 0
    %1857 = vmatpush1.bf16.msra.mxu0 0
    %1858 = vmatprep.subr.bf16.mxu0 0
    %1859 = vmatpush1.bf16.msra.mxu0 0
    %1860 = vmatprep.subr.bf16.mxu0 0
    %1861 = vmatpush1.bf16.msra.mxu0 0
    %1862 = vmatprep.subr.bf16.mxu0 0
    %1863 = vmatpush1.bf16.msra.mxu0 0
    %1864 = vmatprep.subr.bf16.mxu0 0
    %1865 = vmatpush1.bf16.msra.mxu0 0
    %1866 = vmatprep.subr.bf16.mxu0 0
    %1867 = vmatpush1.bf16.msra.mxu0 0
    %1868 = vmatprep.mubr.bf16.mxu0 0
    %1869 = vmatmul.mubr.bf16.gmra.mrb[0].mxu0 %v1831
    %v1870 = vpop.f32.mrb[0].mxu0
    %v1871 = vadd.f32 0.0, %v1870
    %v1872 = vpop.f32.mrb[0].mxu0
    %v1873 = vpop.f32.mrb[0].mxu0
    %v1874 = vpop.f32.mrb[0].mxu0
    %1875 = vdwg.mxu0
    %1877 = vrot.lane.b32.xlu0 %v1729, 1
    %v1878 = vpop.permute.xlu0 %1877
    %1880 = vrot.lane.b32.xlu0 %v1729, 2
    %v1881 = vpop.permute.xlu0 %1880
    %1883 = vrot.lane.b32.xlu0 %v1729, 3
    %v1884 = vpop.permute.xlu0 %1883
    %1886 = vrot.lane.b32.xlu0 %v1729, 4
    %v1887 = vpop.permute.xlu0 %1886
    %1889 = vrot.lane.b32.xlu0 %v1729, 5
    %v1890 = vpop.permute.xlu0 %1889
    %1892 = vrot.lane.b32.xlu0 %v1729, 6
    %v1893 = vpop.permute.xlu0 %1892
    %1895 = vrot.lane.b32.xlu0 %v1729, 7
    %v1896 = vpop.permute.xlu0 %1895
    %v1898 = vsel %vm274, %v1729, %v1878
    %v1899 = vsel %vm276, %v1898, %v1881
    %v1900 = vsel %vm278, %v1899, %v1884
    %v1901 = vsel %vm139, %v1900, %v1887
    %v1902 = vsel %vm281, %v1901, %v1890
    %v1903 = vsel %vm283, %v1902, %v1893
    %v1904 = vsel %vm285, %v1903, %v1896
    %v1905 = vrot.slane %v1667, 4
    %1906 = vrot.lane.b32.xlu0 %v1905, 112
    %v1907 = vpop.permute.xlu0 %1906
    %1908 = vrot.lane.b32.xlu0 %v1544, 80
    %v1909 = vpop.permute.xlu0 %1908
    %1911 = vrot.lane.b32.xlu0 %v1904, 121
    %v1912 = vpop.permute.xlu0 %1911
    %v1915 = vsel %vm207, %v1907, 0
    %v1918 = vsel %vm207, %v1909, 0
    %1920 = vmatprep.subr.bf16.mxu0 0
    %1921 = vmatpush1.bf16.xpose.msra.mxu0 %v1918
    %1922 = vmatprep.subr.bf16.mxu0 0
    %1923 = vmatpush1.bf16.xpose.msra.mxu0 0
    %1924 = vmatprep.subr.bf16.mxu0 0
    %1925 = vmatpush1.bf16.xpose.msra.mxu0 0
    %1926 = vmatprep.subr.bf16.mxu0 0
    %1927 = vmatpush1.bf16.xpose.msra.mxu0 0
    %1928 = vmatprep.subr.bf16.mxu0 0
    %1929 = vmatpush1.bf16.xpose.msra.mxu0 0
    %1930 = vmatprep.subr.bf16.mxu0 0
    %1931 = vmatpush1.bf16.xpose.msra.mxu0 0
    %1932 = vmatprep.subr.bf16.mxu0 0
    %1933 = vmatpush1.bf16.xpose.msra.mxu0 0
    %1934 = vmatprep.subr.bf16.mxu0 0
    %1935 = vmatpush1.bf16.xpose.msra.mxu0 0
    %1936 = vmatprep.subr.bf16.mxu0 0
    %1937 = vmatpush1.bf16.xpose.msra.mxu0 0
    %1938 = vmatprep.subr.bf16.mxu0 0
    %1939 = vmatpush1.bf16.xpose.msra.mxu0 0
    %1940 = vmatprep.subr.bf16.mxu0 0
    %1941 = vmatpush1.bf16.xpose.msra.mxu0 0
    %1942 = vmatprep.subr.bf16.mxu0 0
    %1943 = vmatpush1.bf16.xpose.msra.mxu0 0
    %1944 = vmatprep.subr.bf16.mxu0 0
    %1945 = vmatpush1.bf16.xpose.msra.mxu0 0
    %1946 = vmatprep.subr.bf16.mxu0 0
    %1947 = vmatpush1.bf16.xpose.msra.mxu0 0
    %1948 = vmatprep.subr.bf16.mxu0 0
    %1949 = vmatpush1.bf16.xpose.msra.mxu0 0
    %1950 = vmatprep.subr.bf16.mxu0 0
    %1951 = vmatpush1.bf16.xpose.msra.mxu0 0
    %1952 = vmatprep.mubr.bf16.mxu0 0
    %1953 = vmatmul.mubr.bf16.gmra.mrb[0].mxu0 %v1915
    %v1954 = vpop.f32.mrb[0].mxu0
    %v1955 = vadd.f32 %v1912, %v1954
    %v1956 = vpop.f32.mrb[0].mxu0
    %v1957 = vpop.f32.mrb[0].mxu0
    %v1958 = vpop.f32.mrb[0].mxu0
    %1959 = vdwg.mxu0
    %v1960 = vsel %vm340, %v1955, -inf
    %1961 = vmax.xlane.f32.xlu0 %v1960
    %v1962 = vpop.xlane.xlu0 %1961
    %v1963 = vsub.f32 %v1955, %v1962
    %v1964 = vmul.f32 %v1963, 1.442695
    %v1965 = vpow.pop %v1964
    %v1966 = vsel %vm340, %v1965, 0.0
    %1967 = vadd.xlane.f32.xlu0 %v1966
    %v1968 = vpop.xlane.xlu0 %1967
    %v1969 = vrcp.pop %v1968
    %v1970 = vmul.f32 %v1965, %v1969
    %v1971 = vpack.c.bf16 %v1970, %v1970
    %1972 = vrot.lane.b32.xlu0 %v1544, 52
    %v1973 = vpop.permute.xlu0 %1972
    %v1975 = vsel %vm340, %v1971, 0
    %v1978 = vsel %vm139, %v1973, 0
    %1980 = vmatprep.subr.bf16.mxu0 0
    %1981 = vmatpush1.bf16.msra.mxu0 %v1978
    %1982 = vmatprep.subr.bf16.mxu0 0
    %1983 = vmatpush1.bf16.msra.mxu0 0
    %1984 = vmatprep.subr.bf16.mxu0 0
    %1985 = vmatpush1.bf16.msra.mxu0 0
    %1986 = vmatprep.subr.bf16.mxu0 0
    %1987 = vmatpush1.bf16.msra.mxu0 0
    %1988 = vmatprep.subr.bf16.mxu0 0
    %1989 = vmatpush1.bf16.msra.mxu0 0
    %1990 = vmatprep.subr.bf16.mxu0 0
    %1991 = vmatpush1.bf16.msra.mxu0 0
    %1992 = vmatprep.subr.bf16.mxu0 0
    %1993 = vmatpush1.bf16.msra.mxu0 0
    %1994 = vmatprep.subr.bf16.mxu0 0
    %1995 = vmatpush1.bf16.msra.mxu0 0
    %1996 = vmatprep.subr.bf16.mxu0 0
    %1997 = vmatpush1.bf16.msra.mxu0 0
    %1998 = vmatprep.subr.bf16.mxu0 0
    %1999 = vmatpush1.bf16.msra.mxu0 0
    %2000 = vmatprep.subr.bf16.mxu0 0
    %2001 = vmatpush1.bf16.msra.mxu0 0
    %2002 = vmatprep.subr.bf16.mxu0 0
    %2003 = vmatpush1.bf16.msra.mxu0 0
    %2004 = vmatprep.subr.bf16.mxu0 0
    %2005 = vmatpush1.bf16.msra.mxu0 0
    %2006 = vmatprep.subr.bf16.mxu0 0
    %2007 = vmatpush1.bf16.msra.mxu0 0
    %2008 = vmatprep.subr.bf16.mxu0 0
    %2009 = vmatpush1.bf16.msra.mxu0 0
    %2010 = vmatprep.subr.bf16.mxu0 0
    %2011 = vmatpush1.bf16.msra.mxu0 0
    %2012 = vmatprep.mubr.bf16.mxu0 0
    %2013 = vmatmul.mubr.bf16.gmra.mrb[0].mxu0 %v1975
    %v2014 = vpop.f32.mrb[0].mxu0
    %v2015 = vadd.f32 0.0, %v2014
    %v2016 = vpop.f32.mrb[0].mxu0
    %v2017 = vpop.f32.mrb[0].mxu0
    %v2018 = vpop.f32.mrb[0].mxu0
    %2019 = vdwg.mxu0
    %2021 = vrot.lane.b32.xlu0 %v1871, 12
    %v2022 = vpop.permute.xlu0 %2021
    %v2024 = vsel %vm912, %v1508, %v2022
    %2026 = vrot.lane.b32.xlu0 %v2015, 12
    %v2027 = vpop.permute.xlu0 %2026
    %v2029 = vsel %vm912, %v1652, %v2027
    %v2030 = vpack.c.bf16 %v2029, %v2024
    %v2032 = vlaneseq
    %v2033 = vshrl.u32 %v2032, 7
    %v2034 = vsub.s32 0, %v2033
    %v2035 = vrot.slane %v1176, %v2034
    %v2040 = vunpack.c.l.b16 %v1172
    %v2041 = vunpack.c.l.b16 %v1173
    %v2042 = vunpack.c.l.b16 %v1174
    %v2043 = vpack.c.b16 %v2041, %v2040
    %v2044 = vpack.c.b16 %v2042, %v2042
    %v2047 = vsel %vm82, %v2030, 0
    %v2050 = vsel %vm139, %v2044, 0
    %2052 = vmatprep.subr.bf16.mxu0 0
    %2053 = vmatpush1.bf16.msra.mxu0 %v2043
    %2054 = vmatprep.subr.bf16.mxu0 0
    %2055 = vmatpush1.bf16.msra.mxu0 %v2050
    %2056 = vmatprep.subr.bf16.mxu0 0
    %2057 = vmatpush1.bf16.msra.mxu0 0
    %2058 = vmatprep.subr.bf16.mxu0 0
    %2059 = vmatpush1.bf16.msra.mxu0 0
    %2060 = vmatprep.subr.bf16.mxu0 0
    %2061 = vmatpush1.bf16.msra.mxu0 0
    %2062 = vmatprep.subr.bf16.mxu0 0
    %2063 = vmatpush1.bf16.msra.mxu0 0
    %2064 = vmatprep.subr.bf16.mxu0 0
    %2065 = vmatpush1.bf16.msra.mxu0 0
    %2066 = vmatprep.subr.bf16.mxu0 0
    %2067 = vmatpush1.bf16.msra.mxu0 0
    %2068 = vmatprep.subr.bf16.mxu0 0
    %2069 = vmatpush1.bf16.msra.mxu0 0
    %2070 = vmatprep.subr.bf16.mxu0 0
    %2071 = vmatpush1.bf16.msra.mxu0 0
    %2072 = vmatprep.subr.bf16.mxu0 0
    %2073 = vmatpush1.bf16.msra.mxu0 0
    %2074 = vmatprep.subr.bf16.mxu0 0
    %2075 = vmatpush1.bf16.msra.mxu0 0
    %2076 = vmatprep.subr.bf16.mxu0 0
    %2077 = vmatpush1.bf16.msra.mxu0 0
    %2078 = vmatprep.subr.bf16.mxu0 0
    %2079 = vmatpush1.bf16.msra.mxu0 0
    %2080 = vmatprep.subr.bf16.mxu0 0
    %2081 = vmatpush1.bf16.msra.mxu0 0
    %2082 = vmatprep.subr.bf16.mxu0 0
    %2083 = vmatpush1.bf16.msra.mxu0 0
    %2084 = vmatprep.mubr.bf16.mxu0 0
    %2085 = vmatmul.mubr.bf16.gmra.mrb[0].mxu0 %v2047
    %v2086 = vpop.f32.mrb[0].mxu0
    %v2087 = vadd.f32 %v2035, %v2086
    %v2088 = vpop.f32.mrb[0].mxu0
    %v2089 = vpop.f32.mrb[0].mxu0
    %v2090 = vadd.f32 %v2035, %v2089
    %v2091 = vpop.f32.mrb[0].mxu0
    %2092 = vdwg.mxu0
    %v2093 = vadd.f32 %v1161, %v2087
    %v2094 = vadd.f32 %v1162, %v2090
    %v2095 = vsel %vm82, %v2093, 0.0
    %2096 = vadd.xlane.f32.xlu0 %v2095
    %v2097 = vpop.xlane.xlu0 %2096
    %v2098 = vsel %vm82, %v2094, 0.0
    %2099 = vadd.xlane.f32.xlu0 %v2098
    %v2100 = vpop.xlane.xlu0 %2099
    %v2101 = vmul.f32 %v2097, %v89
    %v2102 = vmul.f32 %v2100, %v89
    %v2103 = vsub.f32 %v2093, %v2101
    %v2104 = vsub.f32 %v2094, %v2102
    %v2105 = vmul.f32 %v2103, %v2103
    %v2106 = vmul.f32 %v2104, %v2104
    %v2107 = vsel %vm82, %v2105, 0.0
    %2108 = vadd.xlane.f32.xlu0 %v2107
    %v2109 = vpop.xlane.xlu0 %2108
    %v2110 = vsel %vm82, %v2106, 0.0
    %2111 = vadd.xlane.f32.xlu0 %v2110
    %v2112 = vpop.xlane.xlu0 %2111
    %v2113 = vmul.f32 %v2109, %v89
    %v2114 = vmul.f32 %v2112, %v89
    %v2115 = vadd.f32 %v2113, 1e-05
    %v2116 = vadd.f32 %v2114, 1e-05
    %v2117 = vrsqrt.pop %v2115
    %v2118 = vrsqrt.pop %v2116
    %v2119 = vmul.f32 %v2103, %v2117
    %v2120 = vmul.f32 %v2104, %v2118
    %v2122 = vlaneseq
    %v2123 = vshrl.u32 %v2122, 7
    %v2124 = vsub.s32 0, %v2123
    %v2125 = vrot.slane %v1187, %v2124
    %v2127 = vmul.f32 %v2119, %v2125
    %v2128 = vmul.f32 %v2120, %v2125
    %v2130 = vlaneseq
    %v2131 = vshrl.u32 %v2130, 7
    %v2132 = vsub.s32 0, %v2131
    %v2133 = vrot.slane %v1189, %v2132
    %v2135 = vadd.f32 %v2127, %v2133
    %v2136 = vadd.f32 %v2128, %v2133
    %v2137 = vpack.c.bf16 %v2136, %v2135
    %v2139 = vlaneseq
    %v2140 = vshrl.u32 %v2139, 7
    %v2141 = vsub.s32 0, %v2140
    %v2142 = vrot.slane %v1195, %v2141
    %v2147 = vunpack.c.l.b16 %v1191
    %v2148 = vunpack.c.l.b16 %v1192
    %v2149 = vunpack.c.l.b16 %v1193
    %v2150 = vpack.c.b16 %v2148, %v2147
    %v2151 = vpack.c.b16 %v2149, %v2149
    %v2154 = vsel %vm82, %v2137, 0
    %v2157 = vsel %vm139, %v2151, 0
    %2159 = vmatprep.subr.bf16.mxu0 0
    %2160 = vmatpush1.bf16.msra.mxu0 %v2150
    %2161 = vmatprep.subr.bf16.mxu0 0
    %2162 = vmatpush1.bf16.msra.mxu0 %v2157
    %2163 = vmatprep.subr.bf16.mxu0 0
    %2164 = vmatpush1.bf16.msra.mxu0 0
    %2165 = vmatprep.subr.bf16.mxu0 0
    %2166 = vmatpush1.bf16.msra.mxu0 0
    %2167 = vmatprep.subr.bf16.mxu0 0
    %2168 = vmatpush1.bf16.msra.mxu0 0
    %2169 = vmatprep.subr.bf16.mxu0 0
    %2170 = vmatpush1.bf16.msra.mxu0 0
    %2171 = vmatprep.subr.bf16.mxu0 0
    %2172 = vmatpush1.bf16.msra.mxu0 0
    %2173 = vmatprep.subr.bf16.mxu0 0
    %2174 = vmatpush1.bf16.msra.mxu0 0
    %2175 = vmatprep.subr.bf16.mxu0 0
    %2176 = vmatpush1.bf16.msra.mxu0 0
    %2177 = vmatprep.subr.bf16.mxu0 0
    %2178 = vmatpush1.bf16.msra.mxu0 0
    %2179 = vmatprep.subr.bf16.mxu0 0
    %2180 = vmatpush1.bf16.msra.mxu0 0
    %2181 = vmatprep.subr.bf16.mxu0 0
    %2182 = vmatpush1.bf16.msra.mxu0 0
    %2183 = vmatprep.subr.bf16.mxu0 0
    %2184 = vmatpush1.bf16.msra.mxu0 0
    %2185 = vmatprep.subr.bf16.mxu0 0
    %2186 = vmatpush1.bf16.msra.mxu0 0
    %2187 = vmatprep.subr.bf16.mxu0 0
    %2188 = vmatpush1.bf16.msra.mxu0 0
    %2189 = vmatprep.subr.bf16.mxu0 0
    %2190 = vmatpush1.bf16.msra.mxu0 0
    %2191 = vmatprep.mubr.bf16.mxu0 0
    %2192 = vmatmul.mubr.bf16.gmra.mrb[0].mxu0 %v2154
    %v2193 = vpop.f32.mrb[0].mxu0
    %v2194 = vadd.f32 %v2142, %v2193
    %v2195 = vpop.f32.mrb[0].mxu0
    %v2196 = vpop.f32.mrb[0].mxu0
    %v2197 = vadd.f32 %v2142, %v2196
    %v2198 = vpop.f32.mrb[0].mxu0
    %2199 = vdwg.mxu0
    %v2200 = vmax.f32 %v2194, 0.0
    %v2201 = vmax.f32 %v2197, 0.0
    %v2202 = vpack.c.bf16 %v2201, %v2200
    %v2204 = vlaneseq
    %v2205 = vshrl.u32 %v2204, 7
    %v2206 = vsub.s32 0, %v2205
    %v2207 = vrot.slane %v1204, %v2206
    %v2215 = vunpack.c.l.b16 %v1197
    %v2216 = vunpack.c.l.b16 %v1198
    %v2217 = vunpack.c.l.b16 %v1199
    %v2218 = vunpack.c.l.b16 %v1200
    %v2219 = vunpack.c.l.b16 %v1201
    %v2220 = vunpack.c.l.b16 %v1202
    %v2221 = vpack.c.b16 %v2216, %v2215
    %v2222 = vpack.c.b16 %v2218, %v2217
    %v2223 = vpack.c.b16 %v2220, %v2219
    %v2228 = vsel %vm1116, %v2202, 0
    %2230 = vmatprep.subr.bf16.mxu0 0
    %2231 = vmatpush1.bf16.msra.mxu0 %v2221
    %2232 = vmatprep.subr.bf16.mxu0 0
    %2233 = vmatpush1.bf16.msra.mxu0 %v2222
    %2234 = vmatprep.subr.bf16.mxu0 0
    %2235 = vmatpush1.bf16.msra.mxu0 %v2223
    %2236 = vmatprep.subr.bf16.mxu0 0
    %2237 = vmatpush1.bf16.msra.mxu0 0
    %2238 = vmatprep.subr.bf16.mxu0 0
    %2239 = vmatpush1.bf16.msra.mxu0 0
    %2240 = vmatprep.subr.bf16.mxu0 0
    %2241 = vmatpush1.bf16.msra.mxu0 0
    %2242 = vmatprep.subr.bf16.mxu0 0
    %2243 = vmatpush1.bf16.msra.mxu0 0
    %2244 = vmatprep.subr.bf16.mxu0 0
    %2245 = vmatpush1.bf16.msra.mxu0 0
    %2246 = vmatprep.subr.bf16.mxu0 0
    %2247 = vmatpush1.bf16.msra.mxu0 0
    %2248 = vmatprep.subr.bf16.mxu0 0
    %2249 = vmatpush1.bf16.msra.mxu0 0
    %2250 = vmatprep.subr.bf16.mxu0 0
    %2251 = vmatpush1.bf16.msra.mxu0 0
    %2252 = vmatprep.subr.bf16.mxu0 0
    %2253 = vmatpush1.bf16.msra.mxu0 0
    %2254 = vmatprep.subr.bf16.mxu0 0
    %2255 = vmatpush1.bf16.msra.mxu0 0
    %2256 = vmatprep.subr.bf16.mxu0 0
    %2257 = vmatpush1.bf16.msra.mxu0 0
    %2258 = vmatprep.subr.bf16.mxu0 0
    %2259 = vmatpush1.bf16.msra.mxu0 0
    %2260 = vmatprep.subr.bf16.mxu0 0
    %2261 = vmatpush1.bf16.msra.mxu0 0
    %2262 = vmatprep.mubr.bf16.mxu0 0
    %2263 = vmatmul.mubr.bf16.gmra.mrb[0].mxu0 %v2228
    %v2264 = vpop.f32.mrb[0].mxu0
    %v2265 = vadd.f32 %v2207, %v2264
    %v2266 = vpop.f32.mrb[0].mxu0
    %v2267 = vpop.f32.mrb[0].mxu0
    %v2268 = vadd.f32 %v2207, %v2267
    %v2269 = vpop.f32.mrb[0].mxu0
    %2270 = vdwg.mxu0
    %v2271 = vadd.f32 %v2093, %v2265
    %v2272 = vadd.f32 %v2094, %v2268
    %2273 = vst.msk [vmem:[#allocation2] sm:$0xff] %vm82, %v2271
    %2274 = vst.msk [vmem:[#allocation2 + $0x8] sm:$0xff] %vm82, %v2272
    // Predicated region
    $region62: #{enformer_transformer_tower.1} parent=1 // pred_check
      _
    $region63: #{enformer_transformer_tower.1} parent=1 // pred_check_branch
      %2276 = sbr.rel (0) target = $region65
    $region64: #{enformer_transformer_tower.1} parent=1 // pred_region
      %s2278 = ssub.s32 256, 256
      %2279 = vsyncadd [#allocation3], %s2278
      %s2280 = sshll.u32 [#allocation2], 4
      %s2281 = int_to_ptr.vmem [resolvable:$true] %s2280
      %2286 = dma.vmem_to_hbm [thread:$0]  %s2281, 256, %s15, [#allocation3], 128, 128, 8
    $region65: #{enformer_transformer_tower.1} parent=1 // pred_fallthru
      _
    // Predicated region
    $region66: #{enformer_transformer_tower.1} parent=1 // pred_check
      _
    $region67: #{enformer_transformer_tower.1} parent=1 // pred_check_branch
      %2288 = sbr.rel (0) target = $region69
    $region68: #{enformer_transformer_tower.1} parent=1 // pred_region
      %2289 = dma.done [#allocation3], 256
    $region69: #{enformer_transformer_tower.1} parent=1 // pred_fallthru
      _
    %2290 = vsyncpa [#allocation3], 1

</llo_original>
